<compile_context>
chip_gen: v7x
topology: tpu7x:2x2x1
jax: 0.10.0
libtpu: 0.0.40
codegen_flags: <defaults>
</compile_context>

<pallas_src>
import jax
import jax.numpy as jnp
from jax.experimental import pallas as pl
from jax.experimental.pallas import tpu as pltpu

LN_EPS = 1e-5
BN_EPS = 1e-5

# Row indices inside the packed (N_VEC_D, D) per-channel parameter block.
(ROW_LN1_G, ROW_LN1_B, ROW_B_FFN1_OUT,
 ROW_LNC_G, ROW_LNC_B, ROW_B_DW, ROW_BN_SCALE, ROW_BN_SHIFT, ROW_B_PW2,
 ROW_LN2_G, ROW_LN2_B, ROW_B_FFN2_OUT,
 ROW_LNF_G, ROW_LNF_B, N_VEC_D) = range(15)


# ----------------------------------------------------------------------------
# Fused Conmer kernel. Works on the whole batch as (R, D) rows, R = T*B,
# row r = t*B + b, D on lanes.
# ----------------------------------------------------------------------------
def _make_conmer_kernel(T, B, K):
    R = T * B
    pad = (K - 1) // 2

    def kernel(x_ref, w1a_ref, w1b_ref, wpw1_ref, wdw_ref, wpw2_ref,
               w2a_ref, w2b_ref, vd_ref, vf_ref, v2d_ref, o_ref):
        D = x_ref.shape[-1]

        x = x_ref[...].astype(jnp.float32)        # (R, D)
        vd = vd_ref[...]                          # (N_VEC_D, D) f32
        vf = vf_ref[...]                          # (2, F)       f32
        b2d = v2d_ref[...]                        # (1, 2D)      f32

        def row(i):                               # (1, D) packed per-channel vector
            return vd[i:i + 1, :]

        def layer_norm(h, g, b):
            # two-pass mean / variance in f32 (matches the reference numerics)
            m = jnp.mean(h, axis=-1, keepdims=True)
            c = h - m
            v = jnp.mean(c * c, axis=-1, keepdims=True)
            return c * jax.lax.rsqrt(v + LN_EPS) * g + b

        def mm(a, w_ref):
            # bf16 operands (native MXU path), f32 accumulation
            return jnp.dot(a.astype(jnp.bfloat16), w_ref[...],
                           preferred_element_type=jnp.float32)

        def silu(h):
            return h * jax.nn.sigmoid(h)

        def ffn(h, g, b, w_in_ref, b_in, w_out_ref, b_out):
            h = layer_norm(h, g, b)
            h = silu(mm(h, w_in_ref) + b_in)
            return mm(h, w_out_ref) + b_out

        # ---------------- FFN1 (half-step residual) ----------------
        x = 0.5 * ffn(x, row(ROW_LN1_G), row(ROW_LN1_B),
                      w1a_ref, vf[0:1, :], w1b_ref, row(ROW_B_FFN1_OUT)) + x

        # ---------------- Convolution module ----------------
        h = layer_norm(x, row(ROW_LNC_G), row(ROW_LNC_B))
        pw = mm(h, wpw1_ref) + b2d                       # pointwise conv -> (R, 2D)
        h = pw[:, :D] * jax.nn.sigmoid(pw[:, D:])        # GLU over channels -> (R, D)

        # Depthwise conv along T.  One time step == B rows, so tap j is a roll of the
        # whole block by (j - pad) * B rows (XLU) plus an edge mask — no padded copy,
        # no misaligned sublane slices, and no tap leakage across samples.
        wdw = wdw_ref[...]                               # (K, D) f32
        rix = jax.lax.broadcasted_iota(jnp.int32, (R, 1), 0)
        acc = h * wdw[pad:pad + 1, :] + row(ROW_B_DW)    # centre tap + bias
        for j in range(K):
            if j == pad:
                continue
            off = (j - pad) * B                          # row offset of tap j
            rolled = pltpu.roll(h, shift=(-off) % R, axis=0)   # rolled[r] = h[r + off]
            valid = (rix + off >= 0) & (rix + off < R)
            acc = acc + jnp.where(valid, rolled, 0.0) * wdw[j:j + 1, :]

        # BatchNorm1d (eval: running stats folded to per-channel affine) + SiLU,
        # pointwise conv back to D channels, residual add.
        h = silu(acc * row(ROW_BN_SCALE) + row(ROW_BN_SHIFT))
        x = x + mm(h, wpw2_ref) + row(ROW_B_PW2)

        # ---------------- FFN2 (half-step residual) ----------------
        x = 0.5 * ffn(x, row(ROW_LN2_G), row(ROW_LN2_B),
                      w2a_ref, vf[1:2, :], w2b_ref, row(ROW_B_FFN2_OUT)) + x

        # ---------------- Final LayerNorm ----------------
        o_ref[...] = layer_norm(x, row(ROW_LNF_G), row(ROW_LNF_B)).astype(o_ref.dtype)

    return kernel


# ----------------------------------------------------------------------------
# pallas_call wrapper: public I/O is (T, B, D) like the PyTorch module.
# ----------------------------------------------------------------------------
def conmer_pallas(x_tbd, kp):
    T, B, D = x_tbd.shape
    K = kp['w_dw'].shape[0]
    F = kp['w_ffn1_in'].shape[1]
    R = T * B

    # (T, B, D) -> (T*B, D) is a contiguous leading-dim merge: no transpose, no HBM
    # copy, and it puts batch*time on the matmul M dimension.
    x = x_tbd.reshape(R, D)

    operands = (x, kp['w_ffn1_in'], kp['w_ffn1_out'], kp['w_pw1'], kp['w_dw'],
                kp['w_pw2'], kp['w_ffn2_in'], kp['w_ffn2_out'],
                kp['vec_d'], kp['vec_f'], kp['vec_2d'])

    def full_spec(a):
        zeros = (0,) * a.ndim
        return pl.BlockSpec(a.shape, lambda i, zeros=zeros: zeros)

    flops = (4 * R * D * F          # ffn1 in/out matmuls
             + 2 * R * D * (2 * D)  # pointwise conv 1 (D -> 2D)
             + 2 * R * D * K        # depthwise conv
             + 2 * R * D * D        # pointwise conv 2
             + 4 * R * D * F)       # ffn2 in/out matmuls
    transcendentals = R * (2 * F + 2 * D)                       # sigmoids
    bytes_accessed = sum(int(a.size) * a.dtype.itemsize for a in operands) + R * D * 4

    out = pl.pallas_call(
        _make_conmer_kernel(T, B, K),
        out_shape=jax.ShapeDtypeStruct((R, D), jnp.float32),
        grid=(1,),
        in_specs=[full_spec(a) for a in operands],
        out_specs=pl.BlockSpec((R, D), lambda i: (0, 0)),
        compiler_params=pltpu.CompilerParams(dimension_semantics=("arbitrary",)),
        cost_estimate=pl.CostEstimate(flops=flops,
                                      transcendentals=transcendentals,
                                      bytes_accessed=bytes_accessed),
    )(*operands)
    return out.reshape(T, B, D)


# ----------------------------------------------------------------------------
# Parameters (deterministic init, PyTorch layouts) + kernel-layout conversion
# ----------------------------------------------------------------------------
def init_params(key, d, f, k):
    def nrm(kk, shape, scale=0.1):
        return scale * jax.random.normal(kk, shape, jnp.float32)

    keys = iter(jax.random.split(key, 26))
    p = {}
    # ffn1: LayerNorm -> Linear(d,f) -> SiLU -> Linear(f,d)
    p['ln1_g'] = 1.0 + nrm(next(keys), (d,))
    p['ln1_b'] = nrm(next(keys), (d,))
    p['ffn1_w1'] = nrm(next(keys), (f, d))
    p['ffn1_b1'] = nrm(next(keys), (f,))
    p['ffn1_w2'] = nrm(next(keys), (d, f))
    p['ffn1_b2'] = nrm(next(keys), (d,))
    # conv module
    p['lnc_g'] = 1.0 + nrm(next(keys), (d,))
    p['lnc_b'] = nrm(next(keys), (d,))
    p['pw1_w'] = nrm(next(keys), (2 * d, d, 1))
    p['pw1_b'] = nrm(next(keys), (2 * d,))
    p['dw_w'] = nrm(next(keys), (d, 1, k))
    p['dw_b'] = nrm(next(keys), (d,))
    p['bn_g'] = 1.0 + nrm(next(keys), (d,))
    p['bn_b'] = nrm(next(keys), (d,))
    p['bn_rm'] = nrm(next(keys), (d,))
    p['bn_rv'] = 1.0 + jnp.abs(nrm(next(keys), (d,)))
    p['pw2_w'] = nrm(next(keys), (d, d, 1))
    p['pw2_b'] = nrm(next(keys), (d,))
    # ffn2
    p['ln2_g'] = 1.0 + nrm(next(keys), (d,))
    p['ln2_b'] = nrm(next(keys), (d,))
    p['ffn2_w1'] = nrm(next(keys), (f, d))
    p['ffn2_b1'] = nrm(next(keys), (f,))
    p['ffn2_w2'] = nrm(next(keys), (d, f))
    p['ffn2_b2'] = nrm(next(keys), (d,))
    # final layer norm
    p['lnf_g'] = 1.0 + nrm(next(keys), (d,))
    p['lnf_b'] = nrm(next(keys), (d,))
    return p


def to_kernel_params(p):
    d = p['ln1_g'].shape[0]
    bn_scale = p['bn_g'] / jnp.sqrt(p['bn_rv'] + BN_EPS)
    bn_shift = p['bn_b'] - p['bn_rm'] * bn_scale
    rows = {
        ROW_LN1_G: p['ln1_g'], ROW_LN1_B: p['ln1_b'], ROW_B_FFN1_OUT: p['ffn1_b2'],
        ROW_LNC_G: p['lnc_g'], ROW_LNC_B: p['lnc_b'], ROW_B_DW: p['dw_b'],
        ROW_BN_SCALE: bn_scale, ROW_BN_SHIFT: bn_shift, ROW_B_PW2: p['pw2_b'],
        ROW_LN2_G: p['ln2_g'], ROW_LN2_B: p['ln2_b'], ROW_B_FFN2_OUT: p['ffn2_b2'],
        ROW_LNF_G: p['lnf_g'], ROW_LNF_B: p['lnf_b'],
    }
    bf16 = lambda w: w.astype(jnp.bfloat16)       # MXU weights exported once in bf16
    return {
        'w_ffn1_in': bf16(p['ffn1_w1'].T),            # (D, F)
        'w_ffn1_out': bf16(p['ffn1_w2'].T),           # (F, D)
        'w_pw1': bf16(p['pw1_w'][:, :, 0].T),         # (D, 2D)
        'w_dw': p['dw_w'][:, 0, :].T,                 # (K, D) f32 (VPU taps)
        'w_pw2': bf16(p['pw2_w'][:, :, 0].T),         # (D, D)
        'w_ffn2_in': bf16(p['ffn2_w1'].T),            # (D, F)
        'w_ffn2_out': bf16(p['ffn2_w2'].T),           # (F, D)
        'vec_d': jnp.stack([rows[i] for i in range(N_VEC_D)], axis=0),   # (14, D)
        'vec_f': jnp.stack([p['ffn1_b1'], p['ffn2_b1']], axis=0),        # (2, F)
        'vec_2d': p['pw1_b'].reshape(1, 2 * d),                          # (1, 2D)
    }


# ----------------------------------------------------------------------------
# Pure-JAX reference mirroring the PyTorch module (eval mode).
# matmul_dtype=None -> full f32; jnp.bfloat16 -> same matmul numerics as the kernel.
# ----------------------------------------------------------------------------
def conmer_reference(x, p, k, matmul_dtype=None):
    T, B, D = x.shape

    def mm(a, w):
        if matmul_dtype is not None:
            a, w = a.astype(matmul_dtype), w.astype(matmul_dtype)
        return jnp.dot(a, w, preferred_element_type=jnp.float32)

    def ln(h, g, b):
        m = jnp.mean(h, axis=-1, keepdims=True)
        v = jnp.mean((h - m) ** 2, axis=-1, keepdims=True)
        return (h - m) / jnp.sqrt(v + LN_EPS) * g + b

    def ffn(h, g, b, w1, b1, w2, b2):
        h = ln(h, g, b)
        h = jax.nn.silu(mm(h, w1.T) + b1)
        return mm(h, w2.T) + b2

    residual = x
    x = ffn(x, p['ln1_g'], p['ln1_b'], p['ffn1_w1'], p['ffn1_b1'],
            p['ffn1_w2'], p['ffn1_b2']) * 0.5 + residual

    # _apply_convolution (BatchNorm in eval mode)
    residual = x
    u = jnp.transpose(x, (1, 0, 2))                      # (B, T, D)
    u = ln(u, p['lnc_g'], p['lnc_b'])
    u = mm(u, p['pw1_w'][:, :, 0].T) + p['pw1_b']        # pointwise conv -> (B, T, 2D)
    u = u[..., :D] * jax.nn.sigmoid(u[..., D:])          # GLU over channels
    pad = (k - 1) // 2
    up = jnp.pad(u, ((0, 0), (pad, pad), (0, 0)))
    dw = p['dw_w'][:, 0, :]                              # (D, K)
    u = sum(up[:, j:j + T, :] * dw[:, j] for j in range(k)) + p['dw_b']
    scale = p['bn_g'] / jnp.sqrt(p['bn_rv'] + BN_EPS)
    u = (u - p['bn_rm']) * scale + p['bn_b']
    u = jax.nn.silu(u)
    u = mm(u, p['pw2_w'][:, :, 0].T) + p['pw2_b']
    x = residual + jnp.transpose(u, (1, 0, 2))           # back to (T, B, D)

    residual = x
    x = ffn(x, p['ln2_g'], p['ln2_b'], p['ffn2_w1'], p['ffn2_b1'],
            p['ffn2_w2'], p['ffn2_b2']) * 0.5 + residual
    return ln(x, p['lnf_g'], p['lnf_b'])


# ----------------------------------------------------------------------------
if __name__ == "__main__":
    key = jax.random.PRNGKey(0)
    kx, kparam = jax.random.split(key)

    # Conmer(input_dim=128, ffn_dim=256, depthwise_conv_kernel_size=7); input (T, B, D)
    T, B, D, F, K = 32, 2, 128, 256, 7

    x = jax.random.normal(kx, (T, B, D), jnp.float32)
    params = init_params(kparam, D, F, K)
    kparams = to_kernel_params(params)

    y = jax.block_until_ready(conmer_pallas(x, kparams))
    assert y.shape == (T, B, D), y.shape

    # Tight check: reference with the SAME bf16-operand / f32-accumulate matmul
    # numerics as the kernel's MXU path (validates the kernel logic itself).
    y_bf16 = jax.block_until_ready(conmer_reference(x, params, K, matmul_dtype=jnp.bfloat16))
    err = float(jnp.max(jnp.abs(y - y_bf16)))
    assert err < 2e-3, f"max abs err vs bf16-matmul reference {err}"

    # Loose sanity check vs the full-f32 reference: bounds the intentional
    # bf16-operand precision trade-off (f32 accumulation keeps it small).
    y_f32 = jax.block_until_ready(conmer_reference(x, params, K))
    err32 = float(jnp.max(jnp.abs(y - y_f32)))
    assert err32 < 5e-2, f"max abs err vs f32 reference {err32}"

    print("KERNEL_OK")
</pallas_src>

<mosaic_0001>
module attributes {stable_mosaic.version = 11 : i64} {
  func.func @kernel(%arg0: i32, %arg1: memref<64x128xf32, #tpu.memory_space<vmem>>, %arg2: memref<128x256xbf16, #tpu.memory_space<vmem>>, %arg3: memref<256x128xbf16, #tpu.memory_space<vmem>>, %arg4: memref<128x256xbf16, #tpu.memory_space<vmem>>, %arg5: memref<7x128xf32, #tpu.memory_space<vmem>>, %arg6: memref<128x128xbf16, #tpu.memory_space<vmem>>, %arg7: memref<128x256xbf16, #tpu.memory_space<vmem>>, %arg8: memref<256x128xbf16, #tpu.memory_space<vmem>>, %arg9: memref<14x128xf32, #tpu.memory_space<vmem>>, %arg10: memref<2x256xf32, #tpu.memory_space<vmem>>, %arg11: memref<1x256xf32, #tpu.memory_space<vmem>>, %arg12: memref<64x128xf32, #tpu.memory_space<vmem>>) attributes {dimension_semantics = [#tpu.dimension_semantics<arbitrary>], iteration_bounds = array<i64: 1>, scalar_prefetch = 0 : i64, scratch_operands = 0 : i64, tpu.core_type = #tpu.core_type<tc>, window_params = [{pipeline_mode = #tpu.pipeline_mode<synchronous>, transform_indices = @transform_0, window_bounds = array<i64: 64, 128>}, {pipeline_mode = #tpu.pipeline_mode<synchronous>, transform_indices = @transform_1, window_bounds = array<i64: 128, 256>}, {pipeline_mode = #tpu.pipeline_mode<synchronous>, transform_indices = @transform_2, window_bounds = array<i64: 256, 128>}, {pipeline_mode = #tpu.pipeline_mode<synchronous>, transform_indices = @transform_3, window_bounds = array<i64: 128, 256>}, {pipeline_mode = #tpu.pipeline_mode<synchronous>, transform_indices = @transform_4, window_bounds = array<i64: 7, 128>}, {pipeline_mode = #tpu.pipeline_mode<synchronous>, transform_indices = @transform_5, window_bounds = array<i64: 128, 128>}, {pipeline_mode = #tpu.pipeline_mode<synchronous>, transform_indices = @transform_6, window_bounds = array<i64: 128, 256>}, {pipeline_mode = #tpu.pipeline_mode<synchronous>, transform_indices = @transform_7, window_bounds = array<i64: 256, 128>}, {pipeline_mode = #tpu.pipeline_mode<synchronous>, transform_indices = @transform_8, window_bounds = array<i64: 14, 128>}, {pipeline_mode = #tpu.pipeline_mode<synchronous>, transform_indices = @transform_9, window_bounds = array<i64: 2, 256>}, {pipeline_mode = #tpu.pipeline_mode<synchronous>, transform_indices = @transform_10, window_bounds = array<i64: 1, 256>}, {pipeline_mode = #tpu.pipeline_mode<synchronous>, transform_indices = @transform_11, window_bounds = array<i64: 64, 128>}]} {
    %c0 = arith.constant 0 : index
    %c0_0 = arith.constant 0 : index
    %0 = vector.load %arg1[%c0, %c0_0] : memref<64x128xf32, #tpu.memory_space<vmem>>, vector<64x128xf32>
    %c0_1 = arith.constant 0 : index
    %c0_2 = arith.constant 0 : index
    %1 = vector.load %arg9[%c0_1, %c0_2] : memref<14x128xf32, #tpu.memory_space<vmem>>, vector<14x128xf32>
    %c0_3 = arith.constant 0 : index
    %c0_4 = arith.constant 0 : index
    %2 = vector.load %arg10[%c0_3, %c0_4] : memref<2x256xf32, #tpu.memory_space<vmem>>, vector<2x256xf32>
    %c0_5 = arith.constant 0 : index
    %c0_6 = arith.constant 0 : index
    %3 = vector.load %arg11[%c0_5, %c0_6] : memref<1x256xf32, #tpu.memory_space<vmem>>, vector<1x256xf32>
    %4 = vector.extract_strided_slice %1 {offsets = [0, 0], sizes = [1, 128], strides = [1, 1]} : vector<14x128xf32> to vector<1x128xf32>
    %5 = vector.extract_strided_slice %1 {offsets = [1, 0], sizes = [1, 128], strides = [1, 1]} : vector<14x128xf32> to vector<1x128xf32>
    %6 = vector.extract_strided_slice %2 {offsets = [0, 0], sizes = [1, 256], strides = [1, 1]} : vector<2x256xf32> to vector<1x256xf32>
    %7 = vector.extract_strided_slice %1 {offsets = [2, 0], sizes = [1, 128], strides = [1, 1]} : vector<14x128xf32> to vector<1x128xf32>
    %cst = arith.constant dense<0.000000e+00> : vector<64xf32>
    %8 = vector.multi_reduction <add>, %0, %cst [1] : vector<64x128xf32> to vector<64xf32>
    %9 = vector.shape_cast %8 : vector<64xf32> to vector<64x1xf32>
    %cst_7 = arith.constant 1.280000e+02 : f32
    %10 = vector.broadcast %cst_7 : f32 to vector<64x1xf32>
    %11 = arith.divf %9, %10 : vector<64x1xf32>
    %12 = vector.broadcast %11 : vector<64x1xf32> to vector<64x128xf32>
    %13 = arith.subf %0, %12 : vector<64x128xf32>
    %14 = arith.mulf %13, %13 : vector<64x128xf32>
    %cst_8 = arith.constant dense<0.000000e+00> : vector<64xf32>
    %15 = vector.multi_reduction <add>, %14, %cst_8 [1] : vector<64x128xf32> to vector<64xf32>
    %16 = vector.shape_cast %15 : vector<64xf32> to vector<64x1xf32>
    %cst_9 = arith.constant 1.280000e+02 : f32
    %17 = vector.broadcast %cst_9 : f32 to vector<64x1xf32>
    %18 = arith.divf %16, %17 : vector<64x1xf32>
    %cst_10 = arith.constant 9.99999974E-6 : f32
    %19 = vector.broadcast %cst_10 : f32 to vector<64x1xf32>
    %20 = arith.addf %18, %19 : vector<64x1xf32>
    %21 = math.rsqrt %20 : vector<64x1xf32>
    %22 = vector.broadcast %21 : vector<64x1xf32> to vector<64x128xf32>
    %23 = arith.mulf %13, %22 : vector<64x128xf32>
    %24 = vector.broadcast %4 : vector<1x128xf32> to vector<64x128xf32>
    %25 = arith.mulf %23, %24 : vector<64x128xf32>
    %26 = vector.broadcast %5 : vector<1x128xf32> to vector<64x128xf32>
    %27 = arith.addf %25, %26 : vector<64x128xf32>
    %28 = arith.truncf %27 : vector<64x128xf32> to vector<64x128xbf16>
    %c0_11 = arith.constant 0 : index
    %c0_12 = arith.constant 0 : index
    %29 = vector.load %arg2[%c0_11, %c0_12] : memref<128x256xbf16, #tpu.memory_space<vmem>>, vector<128x256xbf16>
    %cst_13 = arith.constant dense<0.000000e+00> : vector<64x256xf32>
    %30 = tpu.matmul %28, %29, %cst_13 {dimension_numbers = #tpu.dot_dimension_numbers<[1], [0], [0], [1], [0, 0, 1, 1], [], []>} : vector<64x128xbf16>, vector<128x256xbf16>, vector<64x256xf32> -> vector<64x256xf32>
    %31 = vector.broadcast %6 : vector<1x256xf32> to vector<64x256xf32>
    %32 = arith.addf %30, %31 : vector<64x256xf32>
    %33 = arith.negf %32 : vector<64x256xf32>
    %34 = math.exp %33 : vector<64x256xf32>
    %cst_14 = arith.constant 1.000000e+00 : f32
    %35 = vector.broadcast %cst_14 : f32 to vector<64x256xf32>
    %36 = arith.addf %35, %34 : vector<64x256xf32>
    %37 = arith.divf %35, %36 : vector<64x256xf32>
    %38 = arith.mulf %32, %37 : vector<64x256xf32>
    %39 = arith.truncf %38 : vector<64x256xf32> to vector<64x256xbf16>
    %c0_15 = arith.constant 0 : index
    %c0_16 = arith.constant 0 : index
    %40 = vector.load %arg3[%c0_15, %c0_16] : memref<256x128xbf16, #tpu.memory_space<vmem>>, vector<256x128xbf16>
    %cst_17 = arith.constant dense<0.000000e+00> : vector<64x128xf32>
    %41 = tpu.matmul %39, %40, %cst_17 {dimension_numbers = #tpu.dot_dimension_numbers<[1], [0], [0], [1], [0, 0, 1, 1], [], []>} : vector<64x256xbf16>, vector<256x128xbf16>, vector<64x128xf32> -> vector<64x128xf32>
    %42 = vector.broadcast %7 : vector<1x128xf32> to vector<64x128xf32>
    %43 = arith.addf %41, %42 : vector<64x128xf32>
    %cst_18 = arith.constant 5.000000e-01 : f32
    %44 = vector.broadcast %cst_18 : f32 to vector<64x128xf32>
    %45 = arith.mulf %44, %43 : vector<64x128xf32>
    %46 = arith.addf %45, %0 : vector<64x128xf32>
    %47 = vector.extract_strided_slice %1 {offsets = [3, 0], sizes = [1, 128], strides = [1, 1]} : vector<14x128xf32> to vector<1x128xf32>
    %48 = vector.extract_strided_slice %1 {offsets = [4, 0], sizes = [1, 128], strides = [1, 1]} : vector<14x128xf32> to vector<1x128xf32>
    %cst_19 = arith.constant dense<0.000000e+00> : vector<64xf32>
    %49 = vector.multi_reduction <add>, %46, %cst_19 [1] : vector<64x128xf32> to vector<64xf32>
    %50 = vector.shape_cast %49 : vector<64xf32> to vector<64x1xf32>
    %cst_20 = arith.constant 1.280000e+02 : f32
    %51 = vector.broadcast %cst_20 : f32 to vector<64x1xf32>
    %52 = arith.divf %50, %51 : vector<64x1xf32>
    %53 = vector.broadcast %52 : vector<64x1xf32> to vector<64x128xf32>
    %54 = arith.subf %46, %53 : vector<64x128xf32>
    %55 = arith.mulf %54, %54 : vector<64x128xf32>
    %cst_21 = arith.constant dense<0.000000e+00> : vector<64xf32>
    %56 = vector.multi_reduction <add>, %55, %cst_21 [1] : vector<64x128xf32> to vector<64xf32>
    %57 = vector.shape_cast %56 : vector<64xf32> to vector<64x1xf32>
    %cst_22 = arith.constant 1.280000e+02 : f32
    %58 = vector.broadcast %cst_22 : f32 to vector<64x1xf32>
    %59 = arith.divf %57, %58 : vector<64x1xf32>
    %cst_23 = arith.constant 9.99999974E-6 : f32
    %60 = vector.broadcast %cst_23 : f32 to vector<64x1xf32>
    %61 = arith.addf %59, %60 : vector<64x1xf32>
    %62 = math.rsqrt %61 : vector<64x1xf32>
    %63 = vector.broadcast %62 : vector<64x1xf32> to vector<64x128xf32>
    %64 = arith.mulf %54, %63 : vector<64x128xf32>
    %65 = vector.broadcast %47 : vector<1x128xf32> to vector<64x128xf32>
    %66 = arith.mulf %64, %65 : vector<64x128xf32>
    %67 = vector.broadcast %48 : vector<1x128xf32> to vector<64x128xf32>
    %68 = arith.addf %66, %67 : vector<64x128xf32>
    %69 = arith.truncf %68 : vector<64x128xf32> to vector<64x128xbf16>
    %c0_24 = arith.constant 0 : index
    %c0_25 = arith.constant 0 : index
    %70 = vector.load %arg4[%c0_24, %c0_25] : memref<128x256xbf16, #tpu.memory_space<vmem>>, vector<128x256xbf16>
    %cst_26 = arith.constant dense<0.000000e+00> : vector<64x256xf32>
    %71 = tpu.matmul %69, %70, %cst_26 {dimension_numbers = #tpu.dot_dimension_numbers<[1], [0], [0], [1], [0, 0, 1, 1], [], []>} : vector<64x128xbf16>, vector<128x256xbf16>, vector<64x256xf32> -> vector<64x256xf32>
    %72 = vector.broadcast %3 : vector<1x256xf32> to vector<64x256xf32>
    %73 = arith.addf %71, %72 : vector<64x256xf32>
    %74 = vector.extract_strided_slice %73 {offsets = [0, 0], sizes = [64, 128], strides = [1, 1]} : vector<64x256xf32> to vector<64x128xf32>
    %75 = vector.extract_strided_slice %73 {offsets = [0, 128], sizes = [64, 128], strides = [1, 1]} : vector<64x256xf32> to vector<64x128xf32>
    %76 = arith.negf %75 : vector<64x128xf32>
    %77 = math.exp %76 : vector<64x128xf32>
    %cst_27 = arith.constant 1.000000e+00 : f32
    %78 = vector.broadcast %cst_27 : f32 to vector<64x128xf32>
    %79 = arith.addf %78, %77 : vector<64x128xf32>
    %80 = arith.divf %78, %79 : vector<64x128xf32>
    %81 = arith.mulf %74, %80 : vector<64x128xf32>
    %c0_28 = arith.constant 0 : index
    %c0_29 = arith.constant 0 : index
    %82 = vector.load %arg5[%c0_28, %c0_29] : memref<7x128xf32, #tpu.memory_space<vmem>>, vector<7x128xf32>
    %83 = tpu.iota {dimensions = array<i32: 0>} : vector<64x1xi32>
    %84 = vector.extract_strided_slice %82 {offsets = [3, 0], sizes = [1, 128], strides = [1, 1]} : vector<7x128xf32> to vector<1x128xf32>
    %85 = vector.broadcast %84 : vector<1x128xf32> to vector<64x128xf32>
    %86 = arith.mulf %81, %85 : vector<64x128xf32>
    %87 = vector.extract_strided_slice %1 {offsets = [5, 0], sizes = [1, 128], strides = [1, 1]} : vector<14x128xf32> to vector<1x128xf32>
    %88 = vector.broadcast %87 : vector<1x128xf32> to vector<64x128xf32>
    %89 = arith.addf %86, %88 : vector<64x128xf32>
    %c6_i32 = arith.constant 6 : i32
    %90 = tpu.dynamic_rotate %81 by %c6_i32 dim 0 : vector<64x128xf32>, i32 -> vector<64x128xf32>
    %c-6_i32 = arith.constant -6 : i32
    %91 = vector.broadcast %c-6_i32 : i32 to vector<64x1xi32>
    %92 = arith.addi %83, %91 : vector<64x1xi32>
    %c0_i32 = arith.constant 0 : i32
    %93 = vector.broadcast %c0_i32 : i32 to vector<64x1xi32>
    %94 = arith.cmpi sge, %92, %93 : vector<64x1xi32>
    %c-6_i32_30 = arith.constant -6 : i32
    %95 = vector.broadcast %c-6_i32_30 : i32 to vector<64x1xi32>
    %96 = arith.addi %83, %95 : vector<64x1xi32>
    %c64_i32 = arith.constant 64 : i32
    %97 = vector.broadcast %c64_i32 : i32 to vector<64x1xi32>
    %98 = arith.cmpi slt, %96, %97 : vector<64x1xi32>
    %99 = arith.andi %94, %98 : vector<64x1xi1>
    %cst_31 = arith.constant 0.000000e+00 : f32
    %100 = vector.shape_cast %99 : vector<64x1xi1> to vector<64x1xi1>
    %101 = vector.broadcast %100 : vector<64x1xi1> to vector<64x128xi1>
    %102 = vector.broadcast %cst_31 : f32 to vector<64x128xf32>
    %103 = arith.select %101, %90, %102 : vector<64x128xi1>, vector<64x128xf32>
    %104 = vector.extract_strided_slice %82 {offsets = [0, 0], sizes = [1, 128], strides = [1, 1]} : vector<7x128xf32> to vector<1x128xf32>
    %105 = vector.broadcast %104 : vector<1x128xf32> to vector<64x128xf32>
    %106 = arith.mulf %103, %105 : vector<64x128xf32>
    %107 = arith.addf %89, %106 : vector<64x128xf32>
    %c4_i32 = arith.constant 4 : i32
    %108 = tpu.dynamic_rotate %81 by %c4_i32 dim 0 : vector<64x128xf32>, i32 -> vector<64x128xf32>
    %c-4_i32 = arith.constant -4 : i32
    %109 = vector.broadcast %c-4_i32 : i32 to vector<64x1xi32>
    %110 = arith.addi %83, %109 : vector<64x1xi32>
    %c0_i32_32 = arith.constant 0 : i32
    %111 = vector.broadcast %c0_i32_32 : i32 to vector<64x1xi32>
    %112 = arith.cmpi sge, %110, %111 : vector<64x1xi32>
    %c-4_i32_33 = arith.constant -4 : i32
    %113 = vector.broadcast %c-4_i32_33 : i32 to vector<64x1xi32>
    %114 = arith.addi %83, %113 : vector<64x1xi32>
    %c64_i32_34 = arith.constant 64 : i32
    %115 = vector.broadcast %c64_i32_34 : i32 to vector<64x1xi32>
    %116 = arith.cmpi slt, %114, %115 : vector<64x1xi32>
    %117 = arith.andi %112, %116 : vector<64x1xi1>
    %cst_35 = arith.constant 0.000000e+00 : f32
    %118 = vector.shape_cast %117 : vector<64x1xi1> to vector<64x1xi1>
    %119 = vector.broadcast %118 : vector<64x1xi1> to vector<64x128xi1>
    %120 = vector.broadcast %cst_35 : f32 to vector<64x128xf32>
    %121 = arith.select %119, %108, %120 : vector<64x128xi1>, vector<64x128xf32>
    %122 = vector.extract_strided_slice %82 {offsets = [1, 0], sizes = [1, 128], strides = [1, 1]} : vector<7x128xf32> to vector<1x128xf32>
    %123 = vector.broadcast %122 : vector<1x128xf32> to vector<64x128xf32>
    %124 = arith.mulf %121, %123 : vector<64x128xf32>
    %125 = arith.addf %107, %124 : vector<64x128xf32>
    %c2_i32 = arith.constant 2 : i32
    %126 = tpu.dynamic_rotate %81 by %c2_i32 dim 0 : vector<64x128xf32>, i32 -> vector<64x128xf32>
    %c-2_i32 = arith.constant -2 : i32
    %127 = vector.broadcast %c-2_i32 : i32 to vector<64x1xi32>
    %128 = arith.addi %83, %127 : vector<64x1xi32>
    %c0_i32_36 = arith.constant 0 : i32
    %129 = vector.broadcast %c0_i32_36 : i32 to vector<64x1xi32>
    %130 = arith.cmpi sge, %128, %129 : vector<64x1xi32>
    %c-2_i32_37 = arith.constant -2 : i32
    %131 = vector.broadcast %c-2_i32_37 : i32 to vector<64x1xi32>
    %132 = arith.addi %83, %131 : vector<64x1xi32>
    %c64_i32_38 = arith.constant 64 : i32
    %133 = vector.broadcast %c64_i32_38 : i32 to vector<64x1xi32>
    %134 = arith.cmpi slt, %132, %133 : vector<64x1xi32>
    %135 = arith.andi %130, %134 : vector<64x1xi1>
    %cst_39 = arith.constant 0.000000e+00 : f32
    %136 = vector.shape_cast %135 : vector<64x1xi1> to vector<64x1xi1>
    %137 = vector.broadcast %136 : vector<64x1xi1> to vector<64x128xi1>
    %138 = vector.broadcast %cst_39 : f32 to vector<64x128xf32>
    %139 = arith.select %137, %126, %138 : vector<64x128xi1>, vector<64x128xf32>
    %140 = vector.extract_strided_slice %82 {offsets = [2, 0], sizes = [1, 128], strides = [1, 1]} : vector<7x128xf32> to vector<1x128xf32>
    %141 = vector.broadcast %140 : vector<1x128xf32> to vector<64x128xf32>
    %142 = arith.mulf %139, %141 : vector<64x128xf32>
    %143 = arith.addf %125, %142 : vector<64x128xf32>
    %c62_i32 = arith.constant 62 : i32
    %144 = tpu.dynamic_rotate %81 by %c62_i32 dim 0 : vector<64x128xf32>, i32 -> vector<64x128xf32>
    %c2_i32_40 = arith.constant 2 : i32
    %145 = vector.broadcast %c2_i32_40 : i32 to vector<64x1xi32>
    %146 = arith.addi %83, %145 : vector<64x1xi32>
    %c0_i32_41 = arith.constant 0 : i32
    %147 = vector.broadcast %c0_i32_41 : i32 to vector<64x1xi32>
    %148 = arith.cmpi sge, %146, %147 : vector<64x1xi32>
    %c2_i32_42 = arith.constant 2 : i32
    %149 = vector.broadcast %c2_i32_42 : i32 to vector<64x1xi32>
    %150 = arith.addi %83, %149 : vector<64x1xi32>
    %c64_i32_43 = arith.constant 64 : i32
    %151 = vector.broadcast %c64_i32_43 : i32 to vector<64x1xi32>
    %152 = arith.cmpi slt, %150, %151 : vector<64x1xi32>
    %153 = arith.andi %148, %152 : vector<64x1xi1>
    %cst_44 = arith.constant 0.000000e+00 : f32
    %154 = vector.shape_cast %153 : vector<64x1xi1> to vector<64x1xi1>
    %155 = vector.broadcast %154 : vector<64x1xi1> to vector<64x128xi1>
    %156 = vector.broadcast %cst_44 : f32 to vector<64x128xf32>
    %157 = arith.select %155, %144, %156 : vector<64x128xi1>, vector<64x128xf32>
    %158 = vector.extract_strided_slice %82 {offsets = [4, 0], sizes = [1, 128], strides = [1, 1]} : vector<7x128xf32> to vector<1x128xf32>
    %159 = vector.broadcast %158 : vector<1x128xf32> to vector<64x128xf32>
    %160 = arith.mulf %157, %159 : vector<64x128xf32>
    %161 = arith.addf %143, %160 : vector<64x128xf32>
    %c60_i32 = arith.constant 60 : i32
    %162 = tpu.dynamic_rotate %81 by %c60_i32 dim 0 : vector<64x128xf32>, i32 -> vector<64x128xf32>
    %c4_i32_45 = arith.constant 4 : i32
    %163 = vector.broadcast %c4_i32_45 : i32 to vector<64x1xi32>
    %164 = arith.addi %83, %163 : vector<64x1xi32>
    %c0_i32_46 = arith.constant 0 : i32
    %165 = vector.broadcast %c0_i32_46 : i32 to vector<64x1xi32>
    %166 = arith.cmpi sge, %164, %165 : vector<64x1xi32>
    %c4_i32_47 = arith.constant 4 : i32
    %167 = vector.broadcast %c4_i32_47 : i32 to vector<64x1xi32>
    %168 = arith.addi %83, %167 : vector<64x1xi32>
    %c64_i32_48 = arith.constant 64 : i32
    %169 = vector.broadcast %c64_i32_48 : i32 to vector<64x1xi32>
    %170 = arith.cmpi slt, %168, %169 : vector<64x1xi32>
    %171 = arith.andi %166, %170 : vector<64x1xi1>
    %cst_49 = arith.constant 0.000000e+00 : f32
    %172 = vector.shape_cast %171 : vector<64x1xi1> to vector<64x1xi1>
    %173 = vector.broadcast %172 : vector<64x1xi1> to vector<64x128xi1>
    %174 = vector.broadcast %cst_49 : f32 to vector<64x128xf32>
    %175 = arith.select %173, %162, %174 : vector<64x128xi1>, vector<64x128xf32>
    %176 = vector.extract_strided_slice %82 {offsets = [5, 0], sizes = [1, 128], strides = [1, 1]} : vector<7x128xf32> to vector<1x128xf32>
    %177 = vector.broadcast %176 : vector<1x128xf32> to vector<64x128xf32>
    %178 = arith.mulf %175, %177 : vector<64x128xf32>
    %179 = arith.addf %161, %178 : vector<64x128xf32>
    %c58_i32 = arith.constant 58 : i32
    %180 = tpu.dynamic_rotate %81 by %c58_i32 dim 0 : vector<64x128xf32>, i32 -> vector<64x128xf32>
    %c6_i32_50 = arith.constant 6 : i32
    %181 = vector.broadcast %c6_i32_50 : i32 to vector<64x1xi32>
    %182 = arith.addi %83, %181 : vector<64x1xi32>
    %c0_i32_51 = arith.constant 0 : i32
    %183 = vector.broadcast %c0_i32_51 : i32 to vector<64x1xi32>
    %184 = arith.cmpi sge, %182, %183 : vector<64x1xi32>
    %c6_i32_52 = arith.constant 6 : i32
    %185 = vector.broadcast %c6_i32_52 : i32 to vector<64x1xi32>
    %186 = arith.addi %83, %185 : vector<64x1xi32>
    %c64_i32_53 = arith.constant 64 : i32
    %187 = vector.broadcast %c64_i32_53 : i32 to vector<64x1xi32>
    %188 = arith.cmpi slt, %186, %187 : vector<64x1xi32>
    %189 = arith.andi %184, %188 : vector<64x1xi1>
    %cst_54 = arith.constant 0.000000e+00 : f32
    %190 = vector.shape_cast %189 : vector<64x1xi1> to vector<64x1xi1>
    %191 = vector.broadcast %190 : vector<64x1xi1> to vector<64x128xi1>
    %192 = vector.broadcast %cst_54 : f32 to vector<64x128xf32>
    %193 = arith.select %191, %180, %192 : vector<64x128xi1>, vector<64x128xf32>
    %194 = vector.extract_strided_slice %82 {offsets = [6, 0], sizes = [1, 128], strides = [1, 1]} : vector<7x128xf32> to vector<1x128xf32>
    %195 = vector.broadcast %194 : vector<1x128xf32> to vector<64x128xf32>
    %196 = arith.mulf %193, %195 : vector<64x128xf32>
    %197 = arith.addf %179, %196 : vector<64x128xf32>
    %198 = vector.extract_strided_slice %1 {offsets = [6, 0], sizes = [1, 128], strides = [1, 1]} : vector<14x128xf32> to vector<1x128xf32>
    %199 = vector.broadcast %198 : vector<1x128xf32> to vector<64x128xf32>
    %200 = arith.mulf %197, %199 : vector<64x128xf32>
    %201 = vector.extract_strided_slice %1 {offsets = [7, 0], sizes = [1, 128], strides = [1, 1]} : vector<14x128xf32> to vector<1x128xf32>
    %202 = vector.broadcast %201 : vector<1x128xf32> to vector<64x128xf32>
    %203 = arith.addf %200, %202 : vector<64x128xf32>
    %204 = arith.negf %203 : vector<64x128xf32>
    %205 = math.exp %204 : vector<64x128xf32>
    %cst_55 = arith.constant 1.000000e+00 : f32
    %206 = vector.broadcast %cst_55 : f32 to vector<64x128xf32>
    %207 = arith.addf %206, %205 : vector<64x128xf32>
    %208 = arith.divf %206, %207 : vector<64x128xf32>
    %209 = arith.mulf %203, %208 : vector<64x128xf32>
    %210 = arith.truncf %209 : vector<64x128xf32> to vector<64x128xbf16>
    %c0_56 = arith.constant 0 : index
    %c0_57 = arith.constant 0 : index
    %211 = vector.load %arg6[%c0_56, %c0_57] : memref<128x128xbf16, #tpu.memory_space<vmem>>, vector<128x128xbf16>
    %cst_58 = arith.constant dense<0.000000e+00> : vector<64x128xf32>
    %212 = tpu.matmul %210, %211, %cst_58 {dimension_numbers = #tpu.dot_dimension_numbers<[1], [0], [0], [1], [0, 0, 1, 1], [], []>} : vector<64x128xbf16>, vector<128x128xbf16>, vector<64x128xf32> -> vector<64x128xf32>
    %213 = arith.addf %46, %212 : vector<64x128xf32>
    %214 = vector.extract_strided_slice %1 {offsets = [8, 0], sizes = [1, 128], strides = [1, 1]} : vector<14x128xf32> to vector<1x128xf32>
    %215 = vector.broadcast %214 : vector<1x128xf32> to vector<64x128xf32>
    %216 = arith.addf %213, %215 : vector<64x128xf32>
    %217 = vector.extract_strided_slice %1 {offsets = [9, 0], sizes = [1, 128], strides = [1, 1]} : vector<14x128xf32> to vector<1x128xf32>
    %218 = vector.extract_strided_slice %1 {offsets = [10, 0], sizes = [1, 128], strides = [1, 1]} : vector<14x128xf32> to vector<1x128xf32>
    %219 = vector.extract_strided_slice %2 {offsets = [1, 0], sizes = [1, 256], strides = [1, 1]} : vector<2x256xf32> to vector<1x256xf32>
    %220 = vector.extract_strided_slice %1 {offsets = [11, 0], sizes = [1, 128], strides = [1, 1]} : vector<14x128xf32> to vector<1x128xf32>
    %cst_59 = arith.constant dense<0.000000e+00> : vector<64xf32>
    %221 = vector.multi_reduction <add>, %216, %cst_59 [1] : vector<64x128xf32> to vector<64xf32>
    %222 = vector.shape_cast %221 : vector<64xf32> to vector<64x1xf32>
    %cst_60 = arith.constant 1.280000e+02 : f32
    %223 = vector.broadcast %cst_60 : f32 to vector<64x1xf32>
    %224 = arith.divf %222, %223 : vector<64x1xf32>
    %225 = vector.broadcast %224 : vector<64x1xf32> to vector<64x128xf32>
    %226 = arith.subf %216, %225 : vector<64x128xf32>
    %227 = arith.mulf %226, %226 : vector<64x128xf32>
    %cst_61 = arith.constant dense<0.000000e+00> : vector<64xf32>
    %228 = vector.multi_reduction <add>, %227, %cst_61 [1] : vector<64x128xf32> to vector<64xf32>
    %229 = vector.shape_cast %228 : vector<64xf32> to vector<64x1xf32>
    %cst_62 = arith.constant 1.280000e+02 : f32
    %230 = vector.broadcast %cst_62 : f32 to vector<64x1xf32>
    %231 = arith.divf %229, %230 : vector<64x1xf32>
    %cst_63 = arith.constant 9.99999974E-6 : f32
    %232 = vector.broadcast %cst_63 : f32 to vector<64x1xf32>
    %233 = arith.addf %231, %232 : vector<64x1xf32>
    %234 = math.rsqrt %233 : vector<64x1xf32>
    %235 = vector.broadcast %234 : vector<64x1xf32> to vector<64x128xf32>
    %236 = arith.mulf %226, %235 : vector<64x128xf32>
    %237 = vector.broadcast %217 : vector<1x128xf32> to vector<64x128xf32>
    %238 = arith.mulf %236, %237 : vector<64x128xf32>
    %239 = vector.broadcast %218 : vector<1x128xf32> to vector<64x128xf32>
    %240 = arith.addf %238, %239 : vector<64x128xf32>
    %241 = arith.truncf %240 : vector<64x128xf32> to vector<64x128xbf16>
    %c0_64 = arith.constant 0 : index
    %c0_65 = arith.constant 0 : index
    %242 = vector.load %arg7[%c0_64, %c0_65] : memref<128x256xbf16, #tpu.memory_space<vmem>>, vector<128x256xbf16>
    %cst_66 = arith.constant dense<0.000000e+00> : vector<64x256xf32>
    %243 = tpu.matmul %241, %242, %cst_66 {dimension_numbers = #tpu.dot_dimension_numbers<[1], [0], [0], [1], [0, 0, 1, 1], [], []>} : vector<64x128xbf16>, vector<128x256xbf16>, vector<64x256xf32> -> vector<64x256xf32>
    %244 = vector.broadcast %219 : vector<1x256xf32> to vector<64x256xf32>
    %245 = arith.addf %243, %244 : vector<64x256xf32>
    %246 = arith.negf %245 : vector<64x256xf32>
    %247 = math.exp %246 : vector<64x256xf32>
    %cst_67 = arith.constant 1.000000e+00 : f32
    %248 = vector.broadcast %cst_67 : f32 to vector<64x256xf32>
    %249 = arith.addf %248, %247 : vector<64x256xf32>
    %250 = arith.divf %248, %249 : vector<64x256xf32>
    %251 = arith.mulf %245, %250 : vector<64x256xf32>
    %252 = arith.truncf %251 : vector<64x256xf32> to vector<64x256xbf16>
    %c0_68 = arith.constant 0 : index
    %c0_69 = arith.constant 0 : index
    %253 = vector.load %arg8[%c0_68, %c0_69] : memref<256x128xbf16, #tpu.memory_space<vmem>>, vector<256x128xbf16>
    %cst_70 = arith.constant dense<0.000000e+00> : vector<64x128xf32>
    %254 = tpu.matmul %252, %253, %cst_70 {dimension_numbers = #tpu.dot_dimension_numbers<[1], [0], [0], [1], [0, 0, 1, 1], [], []>} : vector<64x256xbf16>, vector<256x128xbf16>, vector<64x128xf32> -> vector<64x128xf32>
    %255 = vector.broadcast %220 : vector<1x128xf32> to vector<64x128xf32>
    %256 = arith.addf %254, %255 : vector<64x128xf32>
    %cst_71 = arith.constant 5.000000e-01 : f32
    %257 = vector.broadcast %cst_71 : f32 to vector<64x128xf32>
    %258 = arith.mulf %257, %256 : vector<64x128xf32>
    %259 = arith.addf %258, %216 : vector<64x128xf32>
    %260 = vector.extract_strided_slice %1 {offsets = [12, 0], sizes = [1, 128], strides = [1, 1]} : vector<14x128xf32> to vector<1x128xf32>
    %261 = vector.extract_strided_slice %1 {offsets = [13, 0], sizes = [1, 128], strides = [1, 1]} : vector<14x128xf32> to vector<1x128xf32>
    %cst_72 = arith.constant dense<0.000000e+00> : vector<64xf32>
    %262 = vector.multi_reduction <add>, %259, %cst_72 [1] : vector<64x128xf32> to vector<64xf32>
    %263 = vector.shape_cast %262 : vector<64xf32> to vector<64x1xf32>
    %cst_73 = arith.constant 1.280000e+02 : f32
    %264 = vector.broadcast %cst_73 : f32 to vector<64x1xf32>
    %265 = arith.divf %263, %264 : vector<64x1xf32>
    %266 = vector.broadcast %265 : vector<64x1xf32> to vector<64x128xf32>
    %267 = arith.subf %259, %266 : vector<64x128xf32>
    %268 = arith.mulf %267, %267 : vector<64x128xf32>
    %cst_74 = arith.constant dense<0.000000e+00> : vector<64xf32>
    %269 = vector.multi_reduction <add>, %268, %cst_74 [1] : vector<64x128xf32> to vector<64xf32>
    %270 = vector.shape_cast %269 : vector<64xf32> to vector<64x1xf32>
    %cst_75 = arith.constant 1.280000e+02 : f32
    %271 = vector.broadcast %cst_75 : f32 to vector<64x1xf32>
    %272 = arith.divf %270, %271 : vector<64x1xf32>
    %cst_76 = arith.constant 9.99999974E-6 : f32
    %273 = vector.broadcast %cst_76 : f32 to vector<64x1xf32>
    %274 = arith.addf %272, %273 : vector<64x1xf32>
    %275 = math.rsqrt %274 : vector<64x1xf32>
    %276 = vector.broadcast %275 : vector<64x1xf32> to vector<64x128xf32>
    %277 = arith.mulf %267, %276 : vector<64x128xf32>
    %278 = vector.broadcast %260 : vector<1x128xf32> to vector<64x128xf32>
    %279 = arith.mulf %277, %278 : vector<64x128xf32>
    %280 = vector.broadcast %261 : vector<1x128xf32> to vector<64x128xf32>
    %281 = arith.addf %279, %280 : vector<64x128xf32>
    %c0_77 = arith.constant 0 : index
    %c0_78 = arith.constant 0 : index
    %282 = vector.load %arg12[%c0_77, %c0_78] : memref<64x128xf32, #tpu.memory_space<vmem>>, vector<64x128xf32>
    tpu.vector_store %arg12[%c0_77, %c0_78], %281 {strides = array<i32>} : memref<64x128xf32, #tpu.memory_space<vmem>>, vector<64x128xf32>,
    return
  }
  func.func @transform_0(%arg0: i32) -> (i32, i32) {
    %c0_i32 = arith.constant 0 : i32
    %c0_i32_0 = arith.constant 0 : i32
    %c0_i32_1 = arith.constant 0 : i32
    return %c0_i32, %c0_i32_0 : i32, i32
  }
  func.func @transform_1(%arg0: i32) -> (i32, i32) {
    %c0_i32 = arith.constant 0 : i32
    %c0_i32_0 = arith.constant 0 : i32
    %c0_i32_1 = arith.constant 0 : i32
    return %c0_i32, %c0_i32_0 : i32, i32
  }
  func.func @transform_2(%arg0: i32) -> (i32, i32) {
    %c0_i32 = arith.constant 0 : i32
    %c0_i32_0 = arith.constant 0 : i32
    %c0_i32_1 = arith.constant 0 : i32
    return %c0_i32, %c0_i32_0 : i32, i32
  }
  func.func @transform_3(%arg0: i32) -> (i32, i32) {
    %c0_i32 = arith.constant 0 : i32
    %c0_i32_0 = arith.constant 0 : i32
    %c0_i32_1 = arith.constant 0 : i32
    return %c0_i32, %c0_i32_0 : i32, i32
  }
  func.func @transform_4(%arg0: i32) -> (i32, i32) {
    %c0_i32 = arith.constant 0 : i32
    %c0_i32_0 = arith.constant 0 : i32
    %c0_i32_1 = arith.constant 0 : i32
    return %c0_i32, %c0_i32_0 : i32, i32
  }
  func.func @transform_5(%arg0: i32) -> (i32, i32) {
    %c0_i32 = arith.constant 0 : i32
    %c0_i32_0 = arith.constant 0 : i32
    %c0_i32_1 = arith.constant 0 : i32
    return %c0_i32, %c0_i32_0 : i32, i32
  }
  func.func @transform_6(%arg0: i32) -> (i32, i32) {
    %c0_i32 = arith.constant 0 : i32
    %c0_i32_0 = arith.constant 0 : i32
    %c0_i32_1 = arith.constant 0 : i32
    return %c0_i32, %c0_i32_0 : i32, i32
  }
  func.func @transform_7(%arg0: i32) -> (i32, i32) {
    %c0_i32 = arith.constant 0 : i32
    %c0_i32_0 = arith.constant 0 : i32
    %c0_i32_1 = arith.constant 0 : i32
    return %c0_i32, %c0_i32_0 : i32, i32
  }
  func.func @transform_8(%arg0: i32) -> (i32, i32) {
    %c0_i32 = arith.constant 0 : i32
    %c0_i32_0 = arith.constant 0 : i32
    %c0_i32_1 = arith.constant 0 : i32
    return %c0_i32, %c0_i32_0 : i32, i32
  }
  func.func @transform_9(%arg0: i32) -> (i32, i32) {
    %c0_i32 = arith.constant 0 : i32
    %c0_i32_0 = arith.constant 0 : i32
    %c0_i32_1 = arith.constant 0 : i32
    return %c0_i32, %c0_i32_0 : i32, i32
  }
  func.func @transform_10(%arg0: i32) -> (i32, i32) {
    %c0_i32 = arith.constant 0 : i32
    %c0_i32_0 = arith.constant 0 : i32
    %c0_i32_1 = arith.constant 0 : i32
    return %c0_i32, %c0_i32_0 : i32, i32
  }
  func.func @transform_11(%arg0: i32) -> (i32, i32) {
    %c0_i32 = arith.constant 0 : i32
    %c0_i32_0 = arith.constant 0 : i32
    %c0_i32_1 = arith.constant 0 : i32
    return %c0_i32, %c0_i32_0 : i32, i32
  }
}

</mosaic_0001>

<llo_original>
// kernel: tpu_custom_call.1
$region0: #{tpu_custom_call.1}
  #allocation0 [shape = 'u32[]', space=smem, size = 0x4, offset = 0x4, fixed_abs, tag = 'smem constant byte address 0x4 - core index']
  #allocation1 [shape = 'u32[144,128]{1,0:T(1,128)}', space=vmem, size = 0x12000, scoped, tag = 'internal scratch']
  %s0 = inlined_call_operand.hbm [shape: f32[64,128], index: 0, kind: input, shape index: {}]
  %s1 = inlined_call_operand.hbm [shape: bf16[128,256], index: 1, kind: input, shape index: {}]
  %s2 = inlined_call_operand.hbm [shape: bf16[256,128], index: 2, kind: input, shape index: {}]
  %s3 = inlined_call_operand.hbm [shape: bf16[128,256], index: 3, kind: input, shape index: {}]
  %s4 = inlined_call_operand.vmem [shape: f32[7,128], index: 4, kind: input, shape index: {}]
  %s5 = inlined_call_operand.hbm [shape: bf16[128,128], index: 5, kind: input, shape index: {}]
  %s6 = inlined_call_operand.hbm [shape: bf16[128,256], index: 6, kind: input, shape index: {}]
  %s7 = inlined_call_operand.hbm [shape: bf16[256,128], index: 7, kind: input, shape index: {}]
  %s8 = inlined_call_operand.vmem [shape: f32[14,128], index: 8, kind: input, shape index: {}]
  %s9 = inlined_call_operand.vmem [shape: f32[2,256], index: 9, kind: input, shape index: {}]
  %s10 = inlined_call_operand.vmem [shape: f32[1,256], index: 10, kind: input, shape index: {}]
  %s11 = inlined_call_operand.hbm [shape: f32[64,128], index: 11, kind: output, shape index: {}]
  %s12 = sld [smem:[#allocation0]]
  $region82: #{tpu_custom_call.1} parent=0
    _
  %s14 = ssub.s32 1, %s12
  %s15 = scalar_select 0, %s14, %s12
  $region1: #{tpu_custom_call.1} parent=0
    #allocation2 [shape = 'u8[32768]{0}', space=vmem, size = 0x8000, scoped, tag = 'input window, operand 0, single buffered']
    #allocation3 [shape = 's32[1]{0}', space=sflag, size = 0x4, scoped, tag = 'scoped memory for tpu_custom_call.1']
    #allocation4 [shape = 's32[1]{0}', space=sflag, size = 0x4, scoped, tag = 'scoped memory for tpu_custom_call.1']
    #allocation5 [shape = 'u8[65536]{0}', space=vmem, size = 0x10000, scoped, tag = 'input window, operand 1, single buffered']
    #allocation6 [shape = 's32[1]{0}', space=sflag, size = 0x4, scoped, tag = 'scoped memory for tpu_custom_call.1']
    #allocation7 [shape = 'u8[65536]{0}', space=vmem, size = 0x10000, scoped, tag = 'input window, operand 2, single buffered']
    #allocation8 [shape = 'u8[65536]{0}', space=vmem, size = 0x10000, scoped, tag = 'input window, operand 3, single buffered']
    #allocation9 [shape = 's32[1]{0}', space=sflag, size = 0x4, scoped, tag = 'scoped memory for tpu_custom_call.1']
    #allocation10 [shape = 'u8[32768]{0}', space=vmem, size = 0x8000, scoped, tag = 'input window, operand 5, single buffered']
    #allocation11 [shape = 'u8[65536]{0}', space=vmem, size = 0x10000, scoped, tag = 'input window, operand 6, single buffered']
    #allocation12 [shape = 's32[1]{0}', space=sflag, size = 0x4, scoped, tag = 'scoped memory for tpu_custom_call.1']
    #allocation13 [shape = 'u8[65536]{0}', space=vmem, size = 0x10000, scoped, tag = 'input window, operand 7, single buffered']
    #allocation14 [shape = 'u8[32768]{0}', space=vmem, size = 0x8000, scoped, tag = 'output window, operand 0, single buffered']
    %16 = vsyncpa [#allocation3], 0
    %17 = vsyncpa [#allocation6], 0
    %18 = vsyncpa [#allocation9], 0
    %19 = vsyncpa [#allocation12], 0
    %20 = vsyncpa [#allocation4], 0
    // Predicated region
    $region2: #{tpu_custom_call.1} parent=1 // pred_check
      _
    $region3: #{tpu_custom_call.1} parent=1 // pred_check_branch
      %22 = sbr.rel (0) target = $region5
    $region4: #{tpu_custom_call.1} parent=1 // pred_region
      %s24 = ssub.s32 1024, 1024
      %25 = vsyncadd [#allocation3], %s24
      %s26 = sshll.u32 [#allocation2], 4
      %s27 = int_to_ptr.vmem [resolvable:$true] %s26
      %32 = dma.hbm_to_vmem [thread:$0]  %s0, 1024, %s27, [#allocation3], 128, 128, 8
    $region5: #{tpu_custom_call.1} parent=1 // pred_fallthru
      _
    // Predicated region
    $region6: #{tpu_custom_call.1} parent=1 // pred_check
      _
    $region7: #{tpu_custom_call.1} parent=1 // pred_check_branch
      %34 = sbr.rel (0) target = $region9
    $region8: #{tpu_custom_call.1} parent=1 // pred_region
      %s36 = ssub.s32 2048, 2048
      %37 = vsyncadd [#allocation6], %s36
      %s38 = sshll.u32 [#allocation5], 4
      %s39 = int_to_ptr.vmem [resolvable:$true] %s38
      %44 = dma.hbm_to_vmem [thread:$0]  %s1, 2048, %s39, [#allocation6], 128, 128, 8
    $region9: #{tpu_custom_call.1} parent=1 // pred_fallthru
      _
    // Predicated region
    $region10: #{tpu_custom_call.1} parent=1 // pred_check
      _
    $region11: #{tpu_custom_call.1} parent=1 // pred_check_branch
      %46 = sbr.rel (0) target = $region13
    $region12: #{tpu_custom_call.1} parent=1 // pred_region
      %s48 = ssub.s32 2048, 2048
      %49 = vsyncadd [#allocation6], %s48
      %s50 = sshll.u32 [#allocation7], 4
      %s51 = int_to_ptr.vmem [resolvable:$true] %s50
      %56 = dma.hbm_to_vmem [thread:$0]  %s2, 2048, %s51, [#allocation6], 64, 64, 4
    $region13: #{tpu_custom_call.1} parent=1 // pred_fallthru
      _
    // Predicated region
    $region14: #{tpu_custom_call.1} parent=1 // pred_check
      _
    $region15: #{tpu_custom_call.1} parent=1 // pred_check_branch
      %58 = sbr.rel (0) target = $region17
    $region16: #{tpu_custom_call.1} parent=1 // pred_region
      %s60 = ssub.s32 2048, 2048
      %61 = vsyncadd [#allocation9], %s60
      %s62 = sshll.u32 [#allocation8], 4
      %s63 = int_to_ptr.vmem [resolvable:$true] %s62
      %68 = dma.hbm_to_vmem [thread:$0]  %s3, 2048, %s63, [#allocation9], 128, 128, 8
    $region17: #{tpu_custom_call.1} parent=1 // pred_fallthru
      _
    // Predicated region
    $region18: #{tpu_custom_call.1} parent=1 // pred_check
      _
    $region19: #{tpu_custom_call.1} parent=1 // pred_check_branch
      %70 = sbr.rel (0) target = $region21
    $region20: #{tpu_custom_call.1} parent=1 // pred_region
      _
    $region21: #{tpu_custom_call.1} parent=1 // pred_fallthru
      _
    // Predicated region
    $region22: #{tpu_custom_call.1} parent=1 // pred_check
      _
    $region23: #{tpu_custom_call.1} parent=1 // pred_check_branch
      %72 = sbr.rel (0) target = $region25
    $region24: #{tpu_custom_call.1} parent=1 // pred_region
      %s74 = ssub.s32 1024, 1024
      %75 = vsyncadd [#allocation9], %s74
      %s76 = sshll.u32 [#allocation10], 4
      %s77 = int_to_ptr.vmem [resolvable:$true] %s76
      %82 = dma.hbm_to_vmem [thread:$0]  %s5, 1024, %s77, [#allocation9], 64, 64, 4
    $region25: #{tpu_custom_call.1} parent=1 // pred_fallthru
      _
    // Predicated region
    $region26: #{tpu_custom_call.1} parent=1 // pred_check
      _
    $region27: #{tpu_custom_call.1} parent=1 // pred_check_branch
      %84 = sbr.rel (0) target = $region29
    $region28: #{tpu_custom_call.1} parent=1 // pred_region
      %s86 = ssub.s32 2048, 2048
      %87 = vsyncadd [#allocation12], %s86
      %s88 = sshll.u32 [#allocation11], 4
      %s89 = int_to_ptr.vmem [resolvable:$true] %s88
      %94 = dma.hbm_to_vmem [thread:$0]  %s6, 2048, %s89, [#allocation12], 128, 128, 8
    $region29: #{tpu_custom_call.1} parent=1 // pred_fallthru
      _
    // Predicated region
    $region30: #{tpu_custom_call.1} parent=1 // pred_check
      _
    $region31: #{tpu_custom_call.1} parent=1 // pred_check_branch
      %96 = sbr.rel (0) target = $region33
    $region32: #{tpu_custom_call.1} parent=1 // pred_region
      %s98 = ssub.s32 2048, 2048
      %99 = vsyncadd [#allocation12], %s98
      %s100 = sshll.u32 [#allocation13], 4
      %s101 = int_to_ptr.vmem [resolvable:$true] %s100
      %106 = dma.hbm_to_vmem [thread:$0]  %s7, 2048, %s101, [#allocation12], 64, 64, 4
    $region33: #{tpu_custom_call.1} parent=1 // pred_fallthru
      _
    // Predicated region
    $region34: #{tpu_custom_call.1} parent=1 // pred_check
      _
    $region35: #{tpu_custom_call.1} parent=1 // pred_check_branch
      %108 = sbr.rel (0) target = $region37
    $region36: #{tpu_custom_call.1} parent=1 // pred_region
      _
    $region37: #{tpu_custom_call.1} parent=1 // pred_fallthru
      _
    // Predicated region
    $region38: #{tpu_custom_call.1} parent=1 // pred_check
      _
    $region39: #{tpu_custom_call.1} parent=1 // pred_check_branch
      %110 = sbr.rel (0) target = $region41
    $region40: #{tpu_custom_call.1} parent=1 // pred_region
      _
    $region41: #{tpu_custom_call.1} parent=1 // pred_fallthru
      _
    // Predicated region
    $region42: #{tpu_custom_call.1} parent=1 // pred_check
      _
    $region43: #{tpu_custom_call.1} parent=1 // pred_check_branch
      %112 = sbr.rel (0) target = $region45
    $region44: #{tpu_custom_call.1} parent=1 // pred_region
      _
    $region45: #{tpu_custom_call.1} parent=1 // pred_fallthru
      _
    // Predicated region
    $region46: #{tpu_custom_call.1} parent=1 // pred_check
      _
    $region47: #{tpu_custom_call.1} parent=1 // pred_check_branch
      %114 = sbr.rel (0) target = $region49
    $region48: #{tpu_custom_call.1} parent=1 // pred_region
      %115 = dma.done [#allocation3], 1024
    $region49: #{tpu_custom_call.1} parent=1 // pred_fallthru
      _
    // Predicated region
    $region50: #{tpu_custom_call.1} parent=1 // pred_check
      _
    $region51: #{tpu_custom_call.1} parent=1 // pred_check_branch
      %117 = sbr.rel (0) target = $region53
    $region52: #{tpu_custom_call.1} parent=1 // pred_region
      %118 = dma.done [#allocation6], 2048
    $region53: #{tpu_custom_call.1} parent=1 // pred_fallthru
      _
    // Predicated region
    $region54: #{tpu_custom_call.1} parent=1 // pred_check
      _
    $region55: #{tpu_custom_call.1} parent=1 // pred_check_branch
      %120 = sbr.rel (0) target = $region57
    $region56: #{tpu_custom_call.1} parent=1 // pred_region
      %121 = dma.done [#allocation6], 2048
    $region57: #{tpu_custom_call.1} parent=1 // pred_fallthru
      _
    // Predicated region
    $region58: #{tpu_custom_call.1} parent=1 // pred_check
      _
    $region59: #{tpu_custom_call.1} parent=1 // pred_check_branch
      %123 = sbr.rel (0) target = $region61
    $region60: #{tpu_custom_call.1} parent=1 // pred_region
      %124 = dma.done [#allocation9], 2048
    $region61: #{tpu_custom_call.1} parent=1 // pred_fallthru
      _
    // Predicated region
    $region62: #{tpu_custom_call.1} parent=1 // pred_check
      _
    $region63: #{tpu_custom_call.1} parent=1 // pred_check_branch
      %126 = sbr.rel (0) target = $region65
    $region64: #{tpu_custom_call.1} parent=1 // pred_region
      %127 = dma.done [#allocation9], 1024
    $region65: #{tpu_custom_call.1} parent=1 // pred_fallthru
      _
    // Predicated region
    $region66: #{tpu_custom_call.1} parent=1 // pred_check
      _
    $region67: #{tpu_custom_call.1} parent=1 // pred_check_branch
      %129 = sbr.rel (0) target = $region69
    $region68: #{tpu_custom_call.1} parent=1 // pred_region
      %130 = dma.done [#allocation12], 2048
    $region69: #{tpu_custom_call.1} parent=1 // pred_fallthru
      _
    // Predicated region
    $region70: #{tpu_custom_call.1} parent=1 // pred_check
      _
    $region71: #{tpu_custom_call.1} parent=1 // pred_check_branch
      %132 = sbr.rel (0) target = $region73
    $region72: #{tpu_custom_call.1} parent=1 // pred_region
      %133 = dma.done [#allocation12], 2048
    $region73: #{tpu_custom_call.1} parent=1 // pred_fallthru
      _
    %v135 = vld [vmem:[#allocation2] sm:$0xff]
    %v136 = vld [vmem:[#allocation2 + $0x8] sm:$0xff]
    %v137 = vld [vmem:[#allocation2 + $0x10] sm:$0xff]
    %v138 = vld [vmem:[#allocation2 + $0x18] sm:$0xff]
    %v139 = vld [vmem:[#allocation2 + $0x20] sm:$0xff]
    %v140 = vld [vmem:[#allocation2 + $0x28] sm:$0xff]
    %v141 = vld [vmem:[#allocation2 + $0x30] sm:$0xff]
    %v142 = vld [vmem:[#allocation2 + $0x38] sm:$0xff]
    %v143 = vld [vmem:[%s8] sm:$0xff]
    %v144 = vld [vmem:[%s8 + $0x8] sm:$0x3f]
    %v145 = vld [vmem:[%s9] sm:$0xf]
    %v146 = vld [vmem:[%s10] sm:$0x3]
    %147 = vadd.xlane.f32.xlu0 %v135
    %v148 = vpop.xlane.xlu0 %147
    %149 = vadd.xlane.f32.xlu0 %v136
    %v150 = vpop.xlane.xlu0 %149
    %151 = vadd.xlane.f32.xlu0 %v137
    %v152 = vpop.xlane.xlu0 %151
    %153 = vadd.xlane.f32.xlu0 %v138
    %v154 = vpop.xlane.xlu0 %153
    %155 = vadd.xlane.f32.xlu0 %v139
    %v156 = vpop.xlane.xlu0 %155
    %157 = vadd.xlane.f32.xlu0 %v140
    %v158 = vpop.xlane.xlu0 %157
    %159 = vadd.xlane.f32.xlu0 %v141
    %v160 = vpop.xlane.xlu0 %159
    %161 = vadd.xlane.f32.xlu0 %v142
    %v162 = vpop.xlane.xlu0 %161
    %v163 = vrcp.pop 128.0
    %v164 = vmul.f32 %v148, %v163
    %v165 = vmul.f32 %v150, %v163
    %v166 = vmul.f32 %v152, %v163
    %v167 = vmul.f32 %v154, %v163
    %v168 = vmul.f32 %v156, %v163
    %v169 = vmul.f32 %v158, %v163
    %v170 = vmul.f32 %v160, %v163
    %v171 = vmul.f32 %v162, %v163
    %v172 = vsub.f32 %v135, %v164
    %v173 = vsub.f32 %v136, %v165
    %v174 = vsub.f32 %v137, %v166
    %v175 = vsub.f32 %v138, %v167
    %v176 = vsub.f32 %v139, %v168
    %v177 = vsub.f32 %v140, %v169
    %v178 = vsub.f32 %v141, %v170
    %v179 = vsub.f32 %v142, %v171
    %v180 = vmul.f32 %v172, %v172
    %v181 = vmul.f32 %v173, %v173
    %v182 = vmul.f32 %v174, %v174
    %v183 = vmul.f32 %v175, %v175
    %v184 = vmul.f32 %v176, %v176
    %v185 = vmul.f32 %v177, %v177
    %v186 = vmul.f32 %v178, %v178
    %v187 = vmul.f32 %v179, %v179
    %188 = vadd.xlane.f32.xlu0 %v180
    %v189 = vpop.xlane.xlu0 %188
    %190 = vadd.xlane.f32.xlu0 %v181
    %v191 = vpop.xlane.xlu0 %190
    %192 = vadd.xlane.f32.xlu0 %v182
    %v193 = vpop.xlane.xlu0 %192
    %194 = vadd.xlane.f32.xlu0 %v183
    %v195 = vpop.xlane.xlu0 %194
    %196 = vadd.xlane.f32.xlu0 %v184
    %v197 = vpop.xlane.xlu0 %196
    %198 = vadd.xlane.f32.xlu0 %v185
    %v199 = vpop.xlane.xlu0 %198
    %200 = vadd.xlane.f32.xlu0 %v186
    %v201 = vpop.xlane.xlu0 %200
    %202 = vadd.xlane.f32.xlu0 %v187
    %v203 = vpop.xlane.xlu0 %202
    %v204 = vmul.f32 %v189, %v163
    %v205 = vmul.f32 %v191, %v163
    %v206 = vmul.f32 %v193, %v163
    %v207 = vmul.f32 %v195, %v163
    %v208 = vmul.f32 %v197, %v163
    %v209 = vmul.f32 %v199, %v163
    %v210 = vmul.f32 %v201, %v163
    %v211 = vmul.f32 %v203, %v163
    %v212 = vadd.f32 %v204, 1e-05
    %v213 = vadd.f32 %v205, 1e-05
    %v214 = vadd.f32 %v206, 1e-05
    %v215 = vadd.f32 %v207, 1e-05
    %v216 = vadd.f32 %v208, 1e-05
    %v217 = vadd.f32 %v209, 1e-05
    %v218 = vadd.f32 %v210, 1e-05
    %v219 = vadd.f32 %v211, 1e-05
    %v220 = vrsqrt.pop %v212
    %v221 = vrsqrt.pop %v213
    %v222 = vrsqrt.pop %v214
    %v223 = vrsqrt.pop %v215
    %v224 = vrsqrt.pop %v216
    %v225 = vrsqrt.pop %v217
    %v226 = vrsqrt.pop %v218
    %v227 = vrsqrt.pop %v219
    %v228 = vmul.f32 %v172, %v220
    %v229 = vmul.f32 %v173, %v221
    %v230 = vmul.f32 %v174, %v222
    %v231 = vmul.f32 %v175, %v223
    %v232 = vmul.f32 %v176, %v224
    %v233 = vmul.f32 %v177, %v225
    %v234 = vmul.f32 %v178, %v226
    %v235 = vmul.f32 %v179, %v227
    %v236 = vlaneseq
    %v237 = vshrl.u32 %v236, 7
    %v238 = vsub.s32 0, %v237
    %v239 = vrot.slane %v143, %v238
    %v240 = vmul.f32 %v228, %v239
    %v241 = vmul.f32 %v229, %v239
    %v242 = vmul.f32 %v230, %v239
    %v243 = vmul.f32 %v231, %v239
    %v244 = vmul.f32 %v232, %v239
    %v245 = vmul.f32 %v233, %v239
    %v246 = vmul.f32 %v234, %v239
    %v247 = vmul.f32 %v235, %v239
    %v248 = vlaneseq
    %v249 = vshrl.u32 %v248, 7
    %v250 = vsub.s32 1, %v249
    %v251 = vrot.slane %v143, %v250
    %v252 = vadd.f32 %v240, %v251
    %v253 = vadd.f32 %v241, %v251
    %v254 = vadd.f32 %v242, %v251
    %v255 = vadd.f32 %v243, %v251
    %v256 = vadd.f32 %v244, %v251
    %v257 = vadd.f32 %v245, %v251
    %v258 = vadd.f32 %v246, %v251
    %v259 = vadd.f32 %v247, %v251
    %v260 = vpack.c.bf16 %v253, %v252
    %v261 = vpack.c.bf16 %v255, %v254
    %v262 = vpack.c.bf16 %v257, %v256
    %v263 = vpack.c.bf16 %v259, %v258
    %v264 = vld [vmem:[#allocation5] sm:$0xff]
    %v265 = vld [vmem:[#allocation5 + $0x8] sm:$0xff]
    %v266 = vld [vmem:[#allocation5 + $0x10] sm:$0xff]
    %v267 = vld [vmem:[#allocation5 + $0x18] sm:$0xff]
    %v268 = vld [vmem:[#allocation5 + $0x20] sm:$0xff]
    %v269 = vld [vmem:[#allocation5 + $0x28] sm:$0xff]
    %v270 = vld [vmem:[#allocation5 + $0x30] sm:$0xff]
    %v271 = vld [vmem:[#allocation5 + $0x38] sm:$0xff]
    %v272 = vld [vmem:[#allocation5 + $0x40] sm:$0xff]
    %v273 = vld [vmem:[#allocation5 + $0x48] sm:$0xff]
    %v274 = vld [vmem:[#allocation5 + $0x50] sm:$0xff]
    %v275 = vld [vmem:[#allocation5 + $0x58] sm:$0xff]
    %v276 = vld [vmem:[#allocation5 + $0x60] sm:$0xff]
    %v277 = vld [vmem:[#allocation5 + $0x68] sm:$0xff]
    %v278 = vld [vmem:[#allocation5 + $0x70] sm:$0xff]
    %v279 = vld [vmem:[#allocation5 + $0x78] sm:$0xff]
    %v281 = vlaneseq
    %v282 = vshrl.u32 %v281, 7
    %v283 = vsub.s32 0, %v282
    %v284 = vrot.slane %v145, %v283
    %v285 = vlaneseq
    %v286 = vshrl.u32 %v285, 7
    %v287 = vsub.s32 2, %v286
    %v288 = vrot.slane %v145, %v287
    %v291 = vlaneseq
    %v292 = vshrl.u32 %v291, 7
    %v293 = vsub.s32 0, %v292
    %v294 = vrot.slane %v284, %v293
    %v295 = vlaneseq
    %v296 = vshrl.u32 %v295, 7
    %v297 = vsub.s32 0, %v296
    %v298 = vrot.slane %v288, %v297
    %v315 = vunpack.c.l.b16 %v264
    %v316 = vunpack.c.h.b16 %v264
    %v317 = vunpack.c.l.b16 %v265
    %v318 = vunpack.c.h.b16 %v265
    %v319 = vunpack.c.l.b16 %v266
    %v320 = vunpack.c.h.b16 %v266
    %v321 = vunpack.c.l.b16 %v267
    %v322 = vunpack.c.h.b16 %v267
    %v323 = vunpack.c.l.b16 %v268
    %v324 = vunpack.c.h.b16 %v268
    %v325 = vunpack.c.l.b16 %v269
    %v326 = vunpack.c.h.b16 %v269
    %v327 = vunpack.c.l.b16 %v270
    %v328 = vunpack.c.h.b16 %v270
    %v329 = vunpack.c.l.b16 %v271
    %v330 = vunpack.c.h.b16 %v271
    %v331 = vunpack.c.l.b16 %v272
    %v332 = vunpack.c.h.b16 %v272
    %v333 = vunpack.c.l.b16 %v273
    %v334 = vunpack.c.h.b16 %v273
    %v335 = vunpack.c.l.b16 %v274
    %v336 = vunpack.c.h.b16 %v274
    %v337 = vunpack.c.l.b16 %v275
    %v338 = vunpack.c.h.b16 %v275
    %v339 = vunpack.c.l.b16 %v276
    %v340 = vunpack.c.h.b16 %v276
    %v341 = vunpack.c.l.b16 %v277
    %v342 = vunpack.c.h.b16 %v277
    %v343 = vunpack.c.l.b16 %v278
    %v344 = vunpack.c.h.b16 %v278
    %v345 = vunpack.c.l.b16 %v279
    %v346 = vunpack.c.h.b16 %v279
    %v347 = vpack.c.b16 %v317, %v315
    %v348 = vpack.c.b16 %v318, %v316
    %v349 = vpack.c.b16 %v321, %v319
    %v350 = vpack.c.b16 %v322, %v320
    %v351 = vpack.c.b16 %v325, %v323
    %v352 = vpack.c.b16 %v326, %v324
    %v353 = vpack.c.b16 %v329, %v327
    %v354 = vpack.c.b16 %v330, %v328
    %v355 = vpack.c.b16 %v333, %v331
    %v356 = vpack.c.b16 %v334, %v332
    %v357 = vpack.c.b16 %v337, %v335
    %v358 = vpack.c.b16 %v338, %v336
    %v359 = vpack.c.b16 %v341, %v339
    %v360 = vpack.c.b16 %v342, %v340
    %v361 = vpack.c.b16 %v345, %v343
    %v362 = vpack.c.b16 %v346, %v344
    %379 = vmatprep.subr.bf16.mxu0 %v348
    %380 = vmatpush1.bf16.msra.mxu0 %v347
    %381 = vmatprep.subr.bf16.mxu0 %v350
    %382 = vmatpush1.bf16.msra.mxu0 %v349
    %383 = vmatprep.subr.bf16.mxu0 %v352
    %384 = vmatpush1.bf16.msra.mxu0 %v351
    %385 = vmatprep.subr.bf16.mxu0 %v354
    %386 = vmatpush1.bf16.msra.mxu0 %v353
    %387 = vmatprep.subr.bf16.mxu0 %v356
    %388 = vmatpush1.bf16.msra.mxu0 %v355
    %389 = vmatprep.subr.bf16.mxu0 %v358
    %390 = vmatpush1.bf16.msra.mxu0 %v357
    %391 = vmatprep.subr.bf16.mxu0 %v360
    %392 = vmatpush1.bf16.msra.mxu0 %v359
    %393 = vmatprep.subr.bf16.mxu0 %v362
    %394 = vmatpush1.bf16.msra.mxu0 %v361
    %395 = vmatprep.subr.bf16.mxu0 0
    %396 = vmatpush1.bf16.msra.mxu0 0
    %397 = vmatprep.subr.bf16.mxu0 0
    %398 = vmatpush1.bf16.msra.mxu0 0
    %399 = vmatprep.subr.bf16.mxu0 0
    %400 = vmatpush1.bf16.msra.mxu0 0
    %401 = vmatprep.subr.bf16.mxu0 0
    %402 = vmatpush1.bf16.msra.mxu0 0
    %403 = vmatprep.subr.bf16.mxu0 0
    %404 = vmatpush1.bf16.msra.mxu0 0
    %405 = vmatprep.subr.bf16.mxu0 0
    %406 = vmatpush1.bf16.msra.mxu0 0
    %407 = vmatprep.subr.bf16.mxu0 0
    %408 = vmatpush1.bf16.msra.mxu0 0
    %409 = vmatprep.subr.bf16.mxu0 0
    %410 = vmatpush1.bf16.msra.mxu0 0
    %411 = vmatprep.mubr.bf16.mxu0 0
    %412 = vmatmul.mubr.bf16.gmra.mrb[0].mxu0 %v260
    %v413 = vpop.f32.mrb[0].mxu0
    %v414 = vadd.f32 %v294, %v413
    %v415 = vpop.f32.mrb[0].mxu0
    %v416 = vadd.f32 %v298, %v415
    %v417 = vpop.f32.mrb[0].mxu0
    %v418 = vadd.f32 %v294, %v417
    %v419 = vpop.f32.mrb[0].mxu0
    %v420 = vadd.f32 %v298, %v419
    %421 = vmatprep.mubr.bf16.mxu0 0
    %422 = vmatmul.mubr.bf16.gmra.mrb[0].mxu0 %v261
    %v423 = vpop.f32.mrb[0].mxu0
    %v424 = vadd.f32 %v294, %v423
    %v425 = vpop.f32.mrb[0].mxu0
    %v426 = vadd.f32 %v298, %v425
    %v427 = vpop.f32.mrb[0].mxu0
    %v428 = vadd.f32 %v294, %v427
    %v429 = vpop.f32.mrb[0].mxu0
    %v430 = vadd.f32 %v298, %v429
    %431 = vmatprep.mubr.bf16.mxu0 0
    %432 = vmatmul.mubr.bf16.gmra.mrb[0].mxu0 %v262
    %v433 = vpop.f32.mrb[0].mxu0
    %v434 = vadd.f32 %v294, %v433
    %v435 = vpop.f32.mrb[0].mxu0
    %v436 = vadd.f32 %v298, %v435
    %v437 = vpop.f32.mrb[0].mxu0
    %v438 = vadd.f32 %v294, %v437
    %v439 = vpop.f32.mrb[0].mxu0
    %v440 = vadd.f32 %v298, %v439
    %441 = vmatprep.mubr.bf16.mxu0 0
    %442 = vmatmul.mubr.bf16.gmra.mrb[0].mxu0 %v263
    %v443 = vpop.f32.mrb[0].mxu0
    %v444 = vadd.f32 %v294, %v443
    %v445 = vpop.f32.mrb[0].mxu0
    %v446 = vadd.f32 %v298, %v445
    %v447 = vpop.f32.mrb[0].mxu0
    %v448 = vadd.f32 %v294, %v447
    %v449 = vpop.f32.mrb[0].mxu0
    %v450 = vadd.f32 %v298, %v449
    %451 = vdwg.mxu0
    %v452 = vxor.u32 %v414, 2147483648
    %v453 = vxor.u32 %v416, 2147483648
    %v454 = vxor.u32 %v418, 2147483648
    %v455 = vxor.u32 %v420, 2147483648
    %v456 = vxor.u32 %v424, 2147483648
    %v457 = vxor.u32 %v426, 2147483648
    %v458 = vxor.u32 %v428, 2147483648
    %v459 = vxor.u32 %v430, 2147483648
    %v460 = vxor.u32 %v434, 2147483648
    %v461 = vxor.u32 %v436, 2147483648
    %v462 = vxor.u32 %v438, 2147483648
    %v463 = vxor.u32 %v440, 2147483648
    %v464 = vxor.u32 %v444, 2147483648
    %v465 = vxor.u32 %v446, 2147483648
    %v466 = vxor.u32 %v448, 2147483648
    %v467 = vxor.u32 %v450, 2147483648
    %v468 = vmul.f32 %v452, 1.442695
    %v469 = vpow.pop %v468
    %v470 = vmul.f32 %v453, 1.442695
    %v471 = vpow.pop %v470
    %v472 = vmul.f32 %v454, 1.442695
    %v473 = vpow.pop %v472
    %v474 = vmul.f32 %v455, 1.442695
    %v475 = vpow.pop %v474
    %v476 = vmul.f32 %v456, 1.442695
    %v477 = vpow.pop %v476
    %v478 = vmul.f32 %v457, 1.442695
    %v479 = vpow.pop %v478
    %v480 = vmul.f32 %v458, 1.442695
    %v481 = vpow.pop %v480
    %v482 = vmul.f32 %v459, 1.442695
    %v483 = vpow.pop %v482
    %v484 = vmul.f32 %v460, 1.442695
    %v485 = vpow.pop %v484
    %v486 = vmul.f32 %v461, 1.442695
    %v487 = vpow.pop %v486
    %v488 = vmul.f32 %v462, 1.442695
    %v489 = vpow.pop %v488
    %v490 = vmul.f32 %v463, 1.442695
    %v491 = vpow.pop %v490
    %v492 = vmul.f32 %v464, 1.442695
    %v493 = vpow.pop %v492
    %v494 = vmul.f32 %v465, 1.442695
    %v495 = vpow.pop %v494
    %v496 = vmul.f32 %v466, 1.442695
    %v497 = vpow.pop %v496
    %v498 = vmul.f32 %v467, 1.442695
    %v499 = vpow.pop %v498
    %v500 = vadd.f32 %v469, 1.0
    %v501 = vadd.f32 %v471, 1.0
    %v502 = vadd.f32 %v473, 1.0
    %v503 = vadd.f32 %v475, 1.0
    %v504 = vadd.f32 %v477, 1.0
    %v505 = vadd.f32 %v479, 1.0
    %v506 = vadd.f32 %v481, 1.0
    %v507 = vadd.f32 %v483, 1.0
    %v508 = vadd.f32 %v485, 1.0
    %v509 = vadd.f32 %v487, 1.0
    %v510 = vadd.f32 %v489, 1.0
    %v511 = vadd.f32 %v491, 1.0
    %v512 = vadd.f32 %v493, 1.0
    %v513 = vadd.f32 %v495, 1.0
    %v514 = vadd.f32 %v497, 1.0
    %v515 = vadd.f32 %v499, 1.0
    %v516 = vrcp.pop %v500
    %v517 = vmul.f32 1.0, %v516
    %v518 = vrcp.pop %v501
    %v519 = vmul.f32 1.0, %v518
    %v520 = vrcp.pop %v502
    %v521 = vmul.f32 1.0, %v520
    %v522 = vrcp.pop %v503
    %v523 = vmul.f32 1.0, %v522
    %v524 = vrcp.pop %v504
    %v525 = vmul.f32 1.0, %v524
    %v526 = vrcp.pop %v505
    %v527 = vmul.f32 1.0, %v526
    %v528 = vrcp.pop %v506
    %v529 = vmul.f32 1.0, %v528
    %v530 = vrcp.pop %v507
    %v531 = vmul.f32 1.0, %v530
    %v532 = vrcp.pop %v508
    %v533 = vmul.f32 1.0, %v532
    %v534 = vrcp.pop %v509
    %v535 = vmul.f32 1.0, %v534
    %v536 = vrcp.pop %v510
    %v537 = vmul.f32 1.0, %v536
    %v538 = vrcp.pop %v511
    %v539 = vmul.f32 1.0, %v538
    %v540 = vrcp.pop %v512
    %v541 = vmul.f32 1.0, %v540
    %v542 = vrcp.pop %v513
    %v543 = vmul.f32 1.0, %v542
    %v544 = vrcp.pop %v514
    %v545 = vmul.f32 1.0, %v544
    %v546 = vrcp.pop %v515
    %v547 = vmul.f32 1.0, %v546
    %v548 = vmul.f32 %v414, %v517
    %v549 = vmul.f32 %v416, %v519
    %v550 = vmul.f32 %v418, %v521
    %v551 = vmul.f32 %v420, %v523
    %v552 = vmul.f32 %v424, %v525
    %v553 = vmul.f32 %v426, %v527
    %v554 = vmul.f32 %v428, %v529
    %v555 = vmul.f32 %v430, %v531
    %v556 = vmul.f32 %v434, %v533
    %v557 = vmul.f32 %v436, %v535
    %v558 = vmul.f32 %v438, %v537
    %v559 = vmul.f32 %v440, %v539
    %v560 = vmul.f32 %v444, %v541
    %v561 = vmul.f32 %v446, %v543
    %v562 = vmul.f32 %v448, %v545
    %v563 = vmul.f32 %v450, %v547
    %v564 = vpack.c.bf16 %v550, %v548
    %v565 = vpack.c.bf16 %v551, %v549
    %v566 = vpack.c.bf16 %v554, %v552
    %v567 = vpack.c.bf16 %v555, %v553
    %v568 = vpack.c.bf16 %v558, %v556
    %v569 = vpack.c.bf16 %v559, %v557
    %v570 = vpack.c.bf16 %v562, %v560
    %v571 = vpack.c.bf16 %v563, %v561
    %v572 = vld [vmem:[#allocation7] sm:$0xf]
    %v573 = vld [vmem:[#allocation7 + $0x4] sm:$0xf]
    %v574 = vld [vmem:[#allocation7 + $0x8] sm:$0xf]
    %v575 = vld [vmem:[#allocation7 + $0xc] sm:$0xf]
    %v576 = vld [vmem:[#allocation7 + $0x10] sm:$0xf]
    %v577 = vld [vmem:[#allocation7 + $0x14] sm:$0xf]
    %v578 = vld [vmem:[#allocation7 + $0x18] sm:$0xf]
    %v579 = vld [vmem:[#allocation7 + $0x1c] sm:$0xf]
    %v580 = vld [vmem:[#allocation7 + $0x20] sm:$0xf]
    %v581 = vld [vmem:[#allocation7 + $0x24] sm:$0xf]
    %v582 = vld [vmem:[#allocation7 + $0x28] sm:$0xf]
    %v583 = vld [vmem:[#allocation7 + $0x2c] sm:$0xf]
    %v584 = vld [vmem:[#allocation7 + $0x30] sm:$0xf]
    %v585 = vld [vmem:[#allocation7 + $0x34] sm:$0xf]
    %v586 = vld [vmem:[#allocation7 + $0x38] sm:$0xf]
    %v587 = vld [vmem:[#allocation7 + $0x3c] sm:$0xf]
    %v588 = vld [vmem:[#allocation7 + $0x40] sm:$0xf]
    %v589 = vld [vmem:[#allocation7 + $0x44] sm:$0xf]
    %v590 = vld [vmem:[#allocation7 + $0x48] sm:$0xf]
    %v591 = vld [vmem:[#allocation7 + $0x4c] sm:$0xf]
    %v592 = vld [vmem:[#allocation7 + $0x50] sm:$0xf]
    %v593 = vld [vmem:[#allocation7 + $0x54] sm:$0xf]
    %v594 = vld [vmem:[#allocation7 + $0x58] sm:$0xf]
    %v595 = vld [vmem:[#allocation7 + $0x5c] sm:$0xf]
    %v596 = vld [vmem:[#allocation7 + $0x60] sm:$0xf]
    %v597 = vld [vmem:[#allocation7 + $0x64] sm:$0xf]
    %v598 = vld [vmem:[#allocation7 + $0x68] sm:$0xf]
    %v599 = vld [vmem:[#allocation7 + $0x6c] sm:$0xf]
    %v600 = vld [vmem:[#allocation7 + $0x70] sm:$0xf]
    %v601 = vld [vmem:[#allocation7 + $0x74] sm:$0xf]
    %v602 = vld [vmem:[#allocation7 + $0x78] sm:$0xf]
    %v603 = vld [vmem:[#allocation7 + $0x7c] sm:$0xf]
    %v604 = vlaneseq
    %v605 = vshrl.u32 %v604, 7
    %v606 = vsub.s32 2, %v605
    %v607 = vrot.slane %v143, %v606
    %v640 = vunpack.c.l.b16 %v572
    %v641 = vunpack.c.l.b16 %v573
    %v642 = vunpack.c.l.b16 %v574
    %v643 = vunpack.c.l.b16 %v575
    %v644 = vunpack.c.l.b16 %v576
    %v645 = vunpack.c.l.b16 %v577
    %v646 = vunpack.c.l.b16 %v578
    %v647 = vunpack.c.l.b16 %v579
    %v648 = vunpack.c.l.b16 %v580
    %v649 = vunpack.c.l.b16 %v581
    %v650 = vunpack.c.l.b16 %v582
    %v651 = vunpack.c.l.b16 %v583
    %v652 = vunpack.c.l.b16 %v584
    %v653 = vunpack.c.l.b16 %v585
    %v654 = vunpack.c.l.b16 %v586
    %v655 = vunpack.c.l.b16 %v587
    %v656 = vunpack.c.l.b16 %v588
    %v657 = vunpack.c.l.b16 %v589
    %v658 = vunpack.c.l.b16 %v590
    %v659 = vunpack.c.l.b16 %v591
    %v660 = vunpack.c.l.b16 %v592
    %v661 = vunpack.c.l.b16 %v593
    %v662 = vunpack.c.l.b16 %v594
    %v663 = vunpack.c.l.b16 %v595
    %v664 = vunpack.c.l.b16 %v596
    %v665 = vunpack.c.l.b16 %v597
    %v666 = vunpack.c.l.b16 %v598
    %v667 = vunpack.c.l.b16 %v599
    %v668 = vunpack.c.l.b16 %v600
    %v669 = vunpack.c.l.b16 %v601
    %v670 = vunpack.c.l.b16 %v602
    %v671 = vunpack.c.l.b16 %v603
    %v672 = vpack.c.b16 %v641, %v640
    %v673 = vpack.c.b16 %v643, %v642
    %v674 = vpack.c.b16 %v645, %v644
    %v675 = vpack.c.b16 %v647, %v646
    %v676 = vpack.c.b16 %v649, %v648
    %v677 = vpack.c.b16 %v651, %v650
    %v678 = vpack.c.b16 %v653, %v652
    %v679 = vpack.c.b16 %v655, %v654
    %v680 = vpack.c.b16 %v657, %v656
    %v681 = vpack.c.b16 %v659, %v658
    %v682 = vpack.c.b16 %v661, %v660
    %v683 = vpack.c.b16 %v663, %v662
    %v684 = vpack.c.b16 %v665, %v664
    %v685 = vpack.c.b16 %v667, %v666
    %v686 = vpack.c.b16 %v669, %v668
    %v687 = vpack.c.b16 %v671, %v670
    %704 = vmatprep.subr.bf16.mxu0 0
    %705 = vmatpush1.bf16.msra.mxu0 %v672
    %706 = vmatprep.subr.bf16.mxu0 0
    %707 = vmatpush1.bf16.msra.mxu0 %v673
    %708 = vmatprep.subr.bf16.mxu0 0
    %709 = vmatpush1.bf16.msra.mxu0 %v674
    %710 = vmatprep.subr.bf16.mxu0 0
    %711 = vmatpush1.bf16.msra.mxu0 %v675
    %712 = vmatprep.subr.bf16.mxu0 0
    %713 = vmatpush1.bf16.msra.mxu0 %v676
    %714 = vmatprep.subr.bf16.mxu0 0
    %715 = vmatpush1.bf16.msra.mxu0 %v677
    %716 = vmatprep.subr.bf16.mxu0 0
    %717 = vmatpush1.bf16.msra.mxu0 %v678
    %718 = vmatprep.subr.bf16.mxu0 0
    %719 = vmatpush1.bf16.msra.mxu0 %v679
    %720 = vmatprep.subr.bf16.mxu0 0
    %721 = vmatpush1.bf16.msra.mxu0 %v680
    %722 = vmatprep.subr.bf16.mxu0 0
    %723 = vmatpush1.bf16.msra.mxu0 %v681
    %724 = vmatprep.subr.bf16.mxu0 0
    %725 = vmatpush1.bf16.msra.mxu0 %v682
    %726 = vmatprep.subr.bf16.mxu0 0
    %727 = vmatpush1.bf16.msra.mxu0 %v683
    %728 = vmatprep.subr.bf16.mxu0 0
    %729 = vmatpush1.bf16.msra.mxu0 %v684
    %730 = vmatprep.subr.bf16.mxu0 0
    %731 = vmatpush1.bf16.msra.mxu0 %v685
    %732 = vmatprep.subr.bf16.mxu0 0
    %733 = vmatpush1.bf16.msra.mxu0 %v686
    %734 = vmatprep.subr.bf16.mxu0 0
    %735 = vmatpush1.bf16.msra.mxu0 %v687
    %736 = vmatprep.mubr.bf16.mxu0 %v565
    %737 = vmatmul.mubr.bf16.gmra.mrb[0].mxu0 %v564
    %v738 = vpop.f32.mrb[0].mxu0
    %v739 = vadd.f32 %v607, %v738
    %v740 = vpop.f32.mrb[0].mxu0
    %v741 = vpop.f32.mrb[0].mxu0
    %v742 = vadd.f32 %v607, %v741
    %v743 = vpop.f32.mrb[0].mxu0
    %744 = vmatprep.mubr.bf16.mxu0 %v567
    %745 = vmatmul.mubr.bf16.gmra.mrb[0].mxu0 %v566
    %v746 = vpop.f32.mrb[0].mxu0
    %v747 = vadd.f32 %v607, %v746
    %v748 = vpop.f32.mrb[0].mxu0
    %v749 = vpop.f32.mrb[0].mxu0
    %v750 = vadd.f32 %v607, %v749
    %v751 = vpop.f32.mrb[0].mxu0
    %752 = vmatprep.mubr.bf16.mxu0 %v569
    %753 = vmatmul.mubr.bf16.gmra.mrb[0].mxu0 %v568
    %v754 = vpop.f32.mrb[0].mxu0
    %v755 = vadd.f32 %v607, %v754
    %v756 = vpop.f32.mrb[0].mxu0
    %v757 = vpop.f32.mrb[0].mxu0
    %v758 = vadd.f32 %v607, %v757
    %v759 = vpop.f32.mrb[0].mxu0
    %760 = vmatprep.mubr.bf16.mxu0 %v571
    %761 = vmatmul.mubr.bf16.gmra.mrb[0].mxu0 %v570
    %v762 = vpop.f32.mrb[0].mxu0
    %v763 = vadd.f32 %v607, %v762
    %v764 = vpop.f32.mrb[0].mxu0
    %v765 = vpop.f32.mrb[0].mxu0
    %v766 = vadd.f32 %v607, %v765
    %v767 = vpop.f32.mrb[0].mxu0
    %768 = vdwg.mxu0
    %v769 = vmul.f32 %v739, 0.5
    %v770 = vmul.f32 %v742, 0.5
    %v771 = vmul.f32 %v747, 0.5
    %v772 = vmul.f32 %v750, 0.5
    %v773 = vmul.f32 %v755, 0.5
    %v774 = vmul.f32 %v758, 0.5
    %v775 = vmul.f32 %v763, 0.5
    %v776 = vmul.f32 %v766, 0.5
    %v777 = vadd.f32 %v769, %v135
    %v778 = vadd.f32 %v770, %v136
    %v779 = vadd.f32 %v771, %v137
    %v780 = vadd.f32 %v772, %v138
    %v781 = vadd.f32 %v773, %v139
    %v782 = vadd.f32 %v774, %v140
    %v783 = vadd.f32 %v775, %v141
    %v784 = vadd.f32 %v776, %v142
    %785 = vadd.xlane.f32.xlu0 %v777
    %v786 = vpop.xlane.xlu0 %785
    %787 = vadd.xlane.f32.xlu0 %v778
    %v788 = vpop.xlane.xlu0 %787
    %789 = vadd.xlane.f32.xlu0 %v779
    %v790 = vpop.xlane.xlu0 %789
    %791 = vadd.xlane.f32.xlu0 %v780
    %v792 = vpop.xlane.xlu0 %791
    %793 = vadd.xlane.f32.xlu0 %v781
    %v794 = vpop.xlane.xlu0 %793
    %795 = vadd.xlane.f32.xlu0 %v782
    %v796 = vpop.xlane.xlu0 %795
    %797 = vadd.xlane.f32.xlu0 %v783
    %v798 = vpop.xlane.xlu0 %797
    %799 = vadd.xlane.f32.xlu0 %v784
    %v800 = vpop.xlane.xlu0 %799
    %v801 = vmul.f32 %v786, %v163
    %v802 = vmul.f32 %v788, %v163
    %v803 = vmul.f32 %v790, %v163
    %v804 = vmul.f32 %v792, %v163
    %v805 = vmul.f32 %v794, %v163
    %v806 = vmul.f32 %v796, %v163
    %v807 = vmul.f32 %v798, %v163
    %v808 = vmul.f32 %v800, %v163
    %v809 = vsub.f32 %v777, %v801
    %v810 = vsub.f32 %v778, %v802
    %v811 = vsub.f32 %v779, %v803
    %v812 = vsub.f32 %v780, %v804
    %v813 = vsub.f32 %v781, %v805
    %v814 = vsub.f32 %v782, %v806
    %v815 = vsub.f32 %v783, %v807
    %v816 = vsub.f32 %v784, %v808
    %v817 = vmul.f32 %v809, %v809
    %v818 = vmul.f32 %v810, %v810
    %v819 = vmul.f32 %v811, %v811
    %v820 = vmul.f32 %v812, %v812
    %v821 = vmul.f32 %v813, %v813
    %v822 = vmul.f32 %v814, %v814
    %v823 = vmul.f32 %v815, %v815
    %v824 = vmul.f32 %v816, %v816
    %825 = vadd.xlane.f32.xlu0 %v817
    %v826 = vpop.xlane.xlu0 %825
    %827 = vadd.xlane.f32.xlu0 %v818
    %v828 = vpop.xlane.xlu0 %827
    %829 = vadd.xlane.f32.xlu0 %v819
    %v830 = vpop.xlane.xlu0 %829
    %831 = vadd.xlane.f32.xlu0 %v820
    %v832 = vpop.xlane.xlu0 %831
    %833 = vadd.xlane.f32.xlu0 %v821
    %v834 = vpop.xlane.xlu0 %833
    %835 = vadd.xlane.f32.xlu0 %v822
    %v836 = vpop.xlane.xlu0 %835
    %837 = vadd.xlane.f32.xlu0 %v823
    %v838 = vpop.xlane.xlu0 %837
    %839 = vadd.xlane.f32.xlu0 %v824
    %v840 = vpop.xlane.xlu0 %839
    %v841 = vmul.f32 %v826, %v163
    %v842 = vmul.f32 %v828, %v163
    %v843 = vmul.f32 %v830, %v163
    %v844 = vmul.f32 %v832, %v163
    %v845 = vmul.f32 %v834, %v163
    %v846 = vmul.f32 %v836, %v163
    %v847 = vmul.f32 %v838, %v163
    %v848 = vmul.f32 %v840, %v163
    %v849 = vadd.f32 %v841, 1e-05
    %v850 = vadd.f32 %v842, 1e-05
    %v851 = vadd.f32 %v843, 1e-05
    %v852 = vadd.f32 %v844, 1e-05
    %v853 = vadd.f32 %v845, 1e-05
    %v854 = vadd.f32 %v846, 1e-05
    %v855 = vadd.f32 %v847, 1e-05
    %v856 = vadd.f32 %v848, 1e-05
    %v857 = vrsqrt.pop %v849
    %v858 = vrsqrt.pop %v850
    %v859 = vrsqrt.pop %v851
    %v860 = vrsqrt.pop %v852
    %v861 = vrsqrt.pop %v853
    %v862 = vrsqrt.pop %v854
    %v863 = vrsqrt.pop %v855
    %v864 = vrsqrt.pop %v856
    %v865 = vmul.f32 %v809, %v857
    %v866 = vmul.f32 %v810, %v858
    %v867 = vmul.f32 %v811, %v859
    %v868 = vmul.f32 %v812, %v860
    %v869 = vmul.f32 %v813, %v861
    %v870 = vmul.f32 %v814, %v862
    %v871 = vmul.f32 %v815, %v863
    %v872 = vmul.f32 %v816, %v864
    %v873 = vlaneseq
    %v874 = vshrl.u32 %v873, 7
    %v875 = vsub.s32 3, %v874
    %v876 = vrot.slane %v143, %v875
    %v877 = vmul.f32 %v865, %v876
    %v878 = vmul.f32 %v866, %v876
    %v879 = vmul.f32 %v867, %v876
    %v880 = vmul.f32 %v868, %v876
    %v881 = vmul.f32 %v869, %v876
    %v882 = vmul.f32 %v870, %v876
    %v883 = vmul.f32 %v871, %v876
    %v884 = vmul.f32 %v872, %v876
    %v885 = vlaneseq
    %v886 = vshrl.u32 %v885, 7
    %v887 = vsub.s32 4, %v886
    %v888 = vrot.slane %v143, %v887
    %v889 = vadd.f32 %v877, %v888
    %v890 = vadd.f32 %v878, %v888
    %v891 = vadd.f32 %v879, %v888
    %v892 = vadd.f32 %v880, %v888
    %v893 = vadd.f32 %v881, %v888
    %v894 = vadd.f32 %v882, %v888
    %v895 = vadd.f32 %v883, %v888
    %v896 = vadd.f32 %v884, %v888
    %v897 = vpack.c.bf16 %v890, %v889
    %v898 = vpack.c.bf16 %v892, %v891
    %v899 = vpack.c.bf16 %v894, %v893
    %v900 = vpack.c.bf16 %v896, %v895
    %v901 = vld [vmem:[#allocation8] sm:$0xff]
    %v902 = vld [vmem:[#allocation8 + $0x8] sm:$0xff]
    %v903 = vld [vmem:[#allocation8 + $0x10] sm:$0xff]
    %v904 = vld [vmem:[#allocation8 + $0x18] sm:$0xff]
    %v905 = vld [vmem:[#allocation8 + $0x20] sm:$0xff]
    %v906 = vld [vmem:[#allocation8 + $0x28] sm:$0xff]
    %v907 = vld [vmem:[#allocation8 + $0x30] sm:$0xff]
    %v908 = vld [vmem:[#allocation8 + $0x38] sm:$0xff]
    %v909 = vld [vmem:[#allocation8 + $0x40] sm:$0xff]
    %v910 = vld [vmem:[#allocation8 + $0x48] sm:$0xff]
    %v911 = vld [vmem:[#allocation8 + $0x50] sm:$0xff]
    %v912 = vld [vmem:[#allocation8 + $0x58] sm:$0xff]
    %v913 = vld [vmem:[#allocation8 + $0x60] sm:$0xff]
    %v914 = vld [vmem:[#allocation8 + $0x68] sm:$0xff]
    %v915 = vld [vmem:[#allocation8 + $0x70] sm:$0xff]
    %v916 = vld [vmem:[#allocation8 + $0x78] sm:$0xff]
    %v918 = vlaneseq
    %v919 = vshrl.u32 %v918, 7
    %v920 = vsub.s32 0, %v919
    %v921 = vrot.slane %v146, %v920
    %v922 = vlaneseq
    %v923 = vshrl.u32 %v922, 7
    %v924 = vsub.s32 1, %v923
    %v925 = vrot.slane %v146, %v924
    %v944 = vunpack.c.l.b16 %v901
    %v945 = vunpack.c.h.b16 %v901
    %v946 = vunpack.c.l.b16 %v902
    %v947 = vunpack.c.h.b16 %v902
    %v948 = vunpack.c.l.b16 %v903
    %v949 = vunpack.c.h.b16 %v903
    %v950 = vunpack.c.l.b16 %v904
    %v951 = vunpack.c.h.b16 %v904
    %v952 = vunpack.c.l.b16 %v905
    %v953 = vunpack.c.h.b16 %v905
    %v954 = vunpack.c.l.b16 %v906
    %v955 = vunpack.c.h.b16 %v906
    %v956 = vunpack.c.l.b16 %v907
    %v957 = vunpack.c.h.b16 %v907
    %v958 = vunpack.c.l.b16 %v908
    %v959 = vunpack.c.h.b16 %v908
    %v960 = vunpack.c.l.b16 %v909
    %v961 = vunpack.c.h.b16 %v909
    %v962 = vunpack.c.l.b16 %v910
    %v963 = vunpack.c.h.b16 %v910
    %v964 = vunpack.c.l.b16 %v911
    %v965 = vunpack.c.h.b16 %v911
    %v966 = vunpack.c.l.b16 %v912
    %v967 = vunpack.c.h.b16 %v912
    %v968 = vunpack.c.l.b16 %v913
    %v969 = vunpack.c.h.b16 %v913
    %v970 = vunpack.c.l.b16 %v914
    %v971 = vunpack.c.h.b16 %v914
    %v972 = vunpack.c.l.b16 %v915
    %v973 = vunpack.c.h.b16 %v915
    %v974 = vunpack.c.l.b16 %v916
    %v975 = vunpack.c.h.b16 %v916
    %v976 = vpack.c.b16 %v946, %v944
    %v977 = vpack.c.b16 %v947, %v945
    %v978 = vpack.c.b16 %v950, %v948
    %v979 = vpack.c.b16 %v951, %v949
    %v980 = vpack.c.b16 %v954, %v952
    %v981 = vpack.c.b16 %v955, %v953
    %v982 = vpack.c.b16 %v958, %v956
    %v983 = vpack.c.b16 %v959, %v957
    %v984 = vpack.c.b16 %v962, %v960
    %v985 = vpack.c.b16 %v963, %v961
    %v986 = vpack.c.b16 %v966, %v964
    %v987 = vpack.c.b16 %v967, %v965
    %v988 = vpack.c.b16 %v970, %v968
    %v989 = vpack.c.b16 %v971, %v969
    %v990 = vpack.c.b16 %v974, %v972
    %v991 = vpack.c.b16 %v975, %v973
    %1008 = vmatprep.subr.bf16.mxu0 %v977
    %1009 = vmatpush1.bf16.msra.mxu0 %v976
    %1010 = vmatprep.subr.bf16.mxu0 %v979
    %1011 = vmatpush1.bf16.msra.mxu0 %v978
    %1012 = vmatprep.subr.bf16.mxu0 %v981
    %1013 = vmatpush1.bf16.msra.mxu0 %v980
    %1014 = vmatprep.subr.bf16.mxu0 %v983
    %1015 = vmatpush1.bf16.msra.mxu0 %v982
    %1016 = vmatprep.subr.bf16.mxu0 %v985
    %1017 = vmatpush1.bf16.msra.mxu0 %v984
    %1018 = vmatprep.subr.bf16.mxu0 %v987
    %1019 = vmatpush1.bf16.msra.mxu0 %v986
    %1020 = vmatprep.subr.bf16.mxu0 %v989
    %1021 = vmatpush1.bf16.msra.mxu0 %v988
    %1022 = vmatprep.subr.bf16.mxu0 %v991
    %1023 = vmatpush1.bf16.msra.mxu0 %v990
    %1024 = vmatprep.subr.bf16.mxu0 0
    %1025 = vmatpush1.bf16.msra.mxu0 0
    %1026 = vmatprep.subr.bf16.mxu0 0
    %1027 = vmatpush1.bf16.msra.mxu0 0
    %1028 = vmatprep.subr.bf16.mxu0 0
    %1029 = vmatpush1.bf16.msra.mxu0 0
    %1030 = vmatprep.subr.bf16.mxu0 0
    %1031 = vmatpush1.bf16.msra.mxu0 0
    %1032 = vmatprep.subr.bf16.mxu0 0
    %1033 = vmatpush1.bf16.msra.mxu0 0
    %1034 = vmatprep.subr.bf16.mxu0 0
    %1035 = vmatpush1.bf16.msra.mxu0 0
    %1036 = vmatprep.subr.bf16.mxu0 0
    %1037 = vmatpush1.bf16.msra.mxu0 0
    %1038 = vmatprep.subr.bf16.mxu0 0
    %1039 = vmatpush1.bf16.msra.mxu0 0
    %1040 = vmatprep.mubr.bf16.mxu0 0
    %1041 = vmatmul.mubr.bf16.gmra.mrb[0].mxu0 %v897
    %v1042 = vpop.f32.mrb[0].mxu0
    %v1043 = vadd.f32 %v921, %v1042
    %v1044 = vpop.f32.mrb[0].mxu0
    %v1045 = vadd.f32 %v925, %v1044
    %v1046 = vpop.f32.mrb[0].mxu0
    %v1047 = vadd.f32 %v921, %v1046
    %v1048 = vpop.f32.mrb[0].mxu0
    %v1049 = vadd.f32 %v925, %v1048
    %1050 = vmatprep.mubr.bf16.mxu0 0
    %1051 = vmatmul.mubr.bf16.gmra.mrb[0].mxu0 %v898
    %v1052 = vpop.f32.mrb[0].mxu0
    %v1053 = vadd.f32 %v921, %v1052
    %v1054 = vpop.f32.mrb[0].mxu0
    %v1055 = vadd.f32 %v925, %v1054
    %v1056 = vpop.f32.mrb[0].mxu0
    %v1057 = vadd.f32 %v921, %v1056
    %v1058 = vpop.f32.mrb[0].mxu0
    %v1059 = vadd.f32 %v925, %v1058
    %1060 = vmatprep.mubr.bf16.mxu0 0
    %1061 = vmatmul.mubr.bf16.gmra.mrb[0].mxu0 %v899
    %v1062 = vpop.f32.mrb[0].mxu0
    %v1063 = vadd.f32 %v921, %v1062
    %v1064 = vpop.f32.mrb[0].mxu0
    %v1065 = vadd.f32 %v925, %v1064
    %v1066 = vpop.f32.mrb[0].mxu0
    %v1067 = vadd.f32 %v921, %v1066
    %v1068 = vpop.f32.mrb[0].mxu0
    %v1069 = vadd.f32 %v925, %v1068
    %1070 = vmatprep.mubr.bf16.mxu0 0
    %1071 = vmatmul.mubr.bf16.gmra.mrb[0].mxu0 %v900
    %v1072 = vpop.f32.mrb[0].mxu0
    %v1073 = vadd.f32 %v921, %v1072
    %v1074 = vpop.f32.mrb[0].mxu0
    %v1075 = vadd.f32 %v925, %v1074
    %v1076 = vpop.f32.mrb[0].mxu0
    %v1077 = vadd.f32 %v921, %v1076
    %v1078 = vpop.f32.mrb[0].mxu0
    %v1079 = vadd.f32 %v925, %v1078
    %1080 = vdwg.mxu0
    %v1081 = vxor.u32 %v1045, 2147483648
    %v1082 = vxor.u32 %v1049, 2147483648
    %v1083 = vxor.u32 %v1055, 2147483648
    %v1084 = vxor.u32 %v1059, 2147483648
    %v1085 = vxor.u32 %v1065, 2147483648
    %v1086 = vxor.u32 %v1069, 2147483648
    %v1087 = vxor.u32 %v1075, 2147483648
    %v1088 = vxor.u32 %v1079, 2147483648
    %v1089 = vmul.f32 %v1081, 1.442695
    %v1090 = vpow.pop %v1089
    %v1091 = vmul.f32 %v1082, 1.442695
    %v1092 = vpow.pop %v1091
    %v1093 = vmul.f32 %v1083, 1.442695
    %v1094 = vpow.pop %v1093
    %v1095 = vmul.f32 %v1084, 1.442695
    %v1096 = vpow.pop %v1095
    %v1097 = vmul.f32 %v1085, 1.442695
    %v1098 = vpow.pop %v1097
    %v1099 = vmul.f32 %v1086, 1.442695
    %v1100 = vpow.pop %v1099
    %v1101 = vmul.f32 %v1087, 1.442695
    %v1102 = vpow.pop %v1101
    %v1103 = vmul.f32 %v1088, 1.442695
    %v1104 = vpow.pop %v1103
    %v1105 = vadd.f32 %v1090, 1.0
    %v1106 = vadd.f32 %v1092, 1.0
    %v1107 = vadd.f32 %v1094, 1.0
    %v1108 = vadd.f32 %v1096, 1.0
    %v1109 = vadd.f32 %v1098, 1.0
    %v1110 = vadd.f32 %v1100, 1.0
    %v1111 = vadd.f32 %v1102, 1.0
    %v1112 = vadd.f32 %v1104, 1.0
    %v1113 = vrcp.pop %v1105
    %v1114 = vmul.f32 1.0, %v1113
    %v1115 = vrcp.pop %v1106
    %v1116 = vmul.f32 1.0, %v1115
    %v1117 = vrcp.pop %v1107
    %v1118 = vmul.f32 1.0, %v1117
    %v1119 = vrcp.pop %v1108
    %v1120 = vmul.f32 1.0, %v1119
    %v1121 = vrcp.pop %v1109
    %v1122 = vmul.f32 1.0, %v1121
    %v1123 = vrcp.pop %v1110
    %v1124 = vmul.f32 1.0, %v1123
    %v1125 = vrcp.pop %v1111
    %v1126 = vmul.f32 1.0, %v1125
    %v1127 = vrcp.pop %v1112
    %v1128 = vmul.f32 1.0, %v1127
    %v1129 = vmul.f32 %v1043, %v1114
    %v1130 = vmul.f32 %v1047, %v1116
    %v1131 = vmul.f32 %v1053, %v1118
    %v1132 = vmul.f32 %v1057, %v1120
    %v1133 = vmul.f32 %v1063, %v1122
    %v1134 = vmul.f32 %v1067, %v1124
    %v1135 = vmul.f32 %v1073, %v1126
    %v1136 = vmul.f32 %v1077, %v1128
    %v1137 = vld [vmem:[%s4] sm:$0x7f]
    %v1138 = vlaneseq
    %v1139 = vshrl.u32 %v1138, 7
    %v1140 = vadd.s32 %v1139, 8
    %v1141 = vadd.s32 %v1139, 16
    %v1142 = vadd.s32 %v1139, 24
    %v1143 = vadd.s32 %v1139, 32
    %v1144 = vadd.s32 %v1139, 40
    %v1145 = vadd.s32 %v1139, 48
    %v1146 = vadd.s32 %v1139, 56
    %v1147 = vlaneseq
    %v1148 = vshrl.u32 %v1147, 7
    %v1149 = vsub.s32 3, %v1148
    %v1150 = vrot.slane %v1137, %v1149
    %v1151 = vmul.f32 %v1129, %v1150
    %v1152 = vmul.f32 %v1130, %v1150
    %v1153 = vmul.f32 %v1131, %v1150
    %v1154 = vmul.f32 %v1132, %v1150
    %v1155 = vmul.f32 %v1133, %v1150
    %v1156 = vmul.f32 %v1134, %v1150
    %v1157 = vmul.f32 %v1135, %v1150
    %v1158 = vmul.f32 %v1136, %v1150
    %v1159 = vlaneseq
    %v1160 = vshrl.u32 %v1159, 7
    %v1161 = vsub.s32 5, %v1160
    %v1162 = vrot.slane %v143, %v1161
    %v1163 = vadd.f32 %v1151, %v1162
    %v1164 = vadd.f32 %v1152, %v1162
    %v1165 = vadd.f32 %v1153, %v1162
    %v1166 = vadd.f32 %v1154, %v1162
    %v1167 = vadd.f32 %v1155, %v1162
    %v1168 = vadd.f32 %v1156, %v1162
    %v1169 = vadd.f32 %v1157, %v1162
    %v1170 = vadd.f32 %v1158, %v1162
    %v1171 = vrot.slane %v1129, 2
    %v1172 = vrot.slane %v1130, 2
    %v1173 = vrot.slane %v1131, 2
    %v1174 = vrot.slane %v1132, 2
    %v1175 = vrot.slane %v1133, 2
    %v1176 = vrot.slane %v1134, 2
    %v1177 = vrot.slane %v1135, 2
    %v1178 = vrot.slane %v1136, 2
    %vm1179 = vcmp.lt.s32.totalorder %v1139, 6
    %v1180 = vsel %vm1179, %v1177, %v1178
    %v1181 = vsel %vm1179, %v1176, %v1177
    %v1182 = vsel %vm1179, %v1175, %v1176
    %v1183 = vsel %vm1179, %v1174, %v1175
    %v1184 = vsel %vm1179, %v1173, %v1174
    %v1185 = vsel %vm1179, %v1172, %v1173
    %v1186 = vsel %vm1179, %v1171, %v1172
    %v1187 = vsel %vm1179, %v1178, %v1171
    %v1188 = vadd.s32 %v1139, 4294967290
    %v1189 = vadd.s32 %v1140, 4294967290
    %v1190 = vadd.s32 %v1141, 4294967290
    %v1191 = vadd.s32 %v1142, 4294967290
    %v1192 = vadd.s32 %v1143, 4294967290
    %v1193 = vadd.s32 %v1144, 4294967290
    %v1194 = vadd.s32 %v1145, 4294967290
    %v1195 = vadd.s32 %v1146, 4294967290
    %vm1196 = vcmp.ge.s32.totalorder %v1188, 0
    %vm1197 = vcmp.ge.s32.totalorder %v1189, 0
    %vm1198 = vcmp.ge.s32.totalorder %v1190, 0
    %vm1199 = vcmp.ge.s32.totalorder %v1191, 0
    %vm1200 = vcmp.ge.s32.totalorder %v1192, 0
    %vm1201 = vcmp.ge.s32.totalorder %v1193, 0
    %vm1202 = vcmp.ge.s32.totalorder %v1194, 0
    %vm1203 = vcmp.ge.s32.totalorder %v1195, 0
    %vm1204 = vcmp.lt.s32.totalorder %v1188, 64
    %vm1205 = vcmp.lt.s32.totalorder %v1189, 64
    %vm1206 = vcmp.lt.s32.totalorder %v1190, 64
    %vm1207 = vcmp.lt.s32.totalorder %v1191, 64
    %vm1208 = vcmp.lt.s32.totalorder %v1192, 64
    %vm1209 = vcmp.lt.s32.totalorder %v1193, 64
    %vm1210 = vcmp.lt.s32.totalorder %v1194, 64
    %vm1211 = vcmp.lt.s32.totalorder %v1195, 64
    %vm1212 = vmand %vm1196, %vm1204
    %vm1213 = vmand %vm1197, %vm1205
    %vm1214 = vmand %vm1198, %vm1206
    %vm1215 = vmand %vm1199, %vm1207
    %vm1216 = vmand %vm1200, %vm1208
    %vm1217 = vmand %vm1201, %vm1209
    %vm1218 = vmand %vm1202, %vm1210
    %vm1219 = vmand %vm1203, %vm1211
    %v1220 = vsel %vm1212, 1, 0
    %v1221 = vsel %vm1213, 1, 0
    %v1222 = vsel %vm1214, 1, 0
    %v1223 = vsel %vm1215, 1, 0
    %v1224 = vsel %vm1216, 1, 0
    %v1225 = vsel %vm1217, 1, 0
    %v1226 = vsel %vm1218, 1, 0
    %v1227 = vsel %vm1219, 1, 0
    %vm1228 = vcmp.eq.s32.totalorder %v1220, 1
    %vm1229 = vcmp.eq.s32.totalorder %v1221, 1
    %vm1230 = vcmp.eq.s32.totalorder %v1222, 1
    %vm1231 = vcmp.eq.s32.totalorder %v1223, 1
    %vm1232 = vcmp.eq.s32.totalorder %v1224, 1
    %vm1233 = vcmp.eq.s32.totalorder %v1225, 1
    %vm1234 = vcmp.eq.s32.totalorder %v1226, 1
    %vm1235 = vcmp.eq.s32.totalorder %v1227, 1
    %v1236 = vsel %vm1228, %v1187, 0.0
    %v1237 = vsel %vm1229, %v1186, 0.0
    %v1238 = vsel %vm1230, %v1185, 0.0
    %v1239 = vsel %vm1231, %v1184, 0.0
    %v1240 = vsel %vm1232, %v1183, 0.0
    %v1241 = vsel %vm1233, %v1182, 0.0
    %v1242 = vsel %vm1234, %v1181, 0.0
    %v1243 = vsel %vm1235, %v1180, 0.0
    %v1244 = vlaneseq
    %v1245 = vshrl.u32 %v1244, 7
    %v1246 = vsub.s32 0, %v1245
    %v1247 = vrot.slane %v1137, %v1246
    %v1248 = vmul.f32 %v1236, %v1247
    %v1249 = vmul.f32 %v1237, %v1247
    %v1250 = vmul.f32 %v1238, %v1247
    %v1251 = vmul.f32 %v1239, %v1247
    %v1252 = vmul.f32 %v1240, %v1247
    %v1253 = vmul.f32 %v1241, %v1247
    %v1254 = vmul.f32 %v1242, %v1247
    %v1255 = vmul.f32 %v1243, %v1247
    %v1256 = vadd.f32 %v1163, %v1248
    %v1257 = vadd.f32 %v1164, %v1249
    %v1258 = vadd.f32 %v1165, %v1250
    %v1259 = vadd.f32 %v1166, %v1251
    %v1260 = vadd.f32 %v1167, %v1252
    %v1261 = vadd.f32 %v1168, %v1253
    %v1262 = vadd.f32 %v1169, %v1254
    %v1263 = vadd.f32 %v1170, %v1255
    %v1264 = vrot.slane %v1129, 4
    %v1265 = vrot.slane %v1130, 4
    %v1266 = vrot.slane %v1131, 4
    %v1267 = vrot.slane %v1132, 4
    %v1268 = vrot.slane %v1133, 4
    %v1269 = vrot.slane %v1134, 4
    %v1270 = vrot.slane %v1135, 4
    %v1271 = vrot.slane %v1136, 4
    %vm1272 = vcmp.lt.s32.totalorder %v1139, 4
    %v1273 = vsel %vm1272, %v1270, %v1271
    %v1274 = vsel %vm1272, %v1269, %v1270
    %v1275 = vsel %vm1272, %v1268, %v1269
    %v1276 = vsel %vm1272, %v1267, %v1268
    %v1277 = vsel %vm1272, %v1266, %v1267
    %v1278 = vsel %vm1272, %v1265, %v1266
    %v1279 = vsel %vm1272, %v1264, %v1265
    %v1280 = vsel %vm1272, %v1271, %v1264
    %v1281 = vadd.s32 %v1139, 4294967292
    %v1282 = vadd.s32 %v1140, 4294967292
    %v1283 = vadd.s32 %v1141, 4294967292
    %v1284 = vadd.s32 %v1142, 4294967292
    %v1285 = vadd.s32 %v1143, 4294967292
    %v1286 = vadd.s32 %v1144, 4294967292
    %v1287 = vadd.s32 %v1145, 4294967292
    %v1288 = vadd.s32 %v1146, 4294967292
    %vm1289 = vcmp.ge.s32.totalorder %v1281, 0
    %vm1290 = vcmp.ge.s32.totalorder %v1282, 0
    %vm1291 = vcmp.ge.s32.totalorder %v1283, 0
    %vm1292 = vcmp.ge.s32.totalorder %v1284, 0
    %vm1293 = vcmp.ge.s32.totalorder %v1285, 0
    %vm1294 = vcmp.ge.s32.totalorder %v1286, 0
    %vm1295 = vcmp.ge.s32.totalorder %v1287, 0
    %vm1296 = vcmp.ge.s32.totalorder %v1288, 0
    %vm1297 = vcmp.lt.s32.totalorder %v1281, 64
    %vm1298 = vcmp.lt.s32.totalorder %v1282, 64
    %vm1299 = vcmp.lt.s32.totalorder %v1283, 64
    %vm1300 = vcmp.lt.s32.totalorder %v1284, 64
    %vm1301 = vcmp.lt.s32.totalorder %v1285, 64
    %vm1302 = vcmp.lt.s32.totalorder %v1286, 64
    %vm1303 = vcmp.lt.s32.totalorder %v1287, 64
    %vm1304 = vcmp.lt.s32.totalorder %v1288, 64
    %vm1305 = vmand %vm1289, %vm1297
    %vm1306 = vmand %vm1290, %vm1298
    %vm1307 = vmand %vm1291, %vm1299
    %vm1308 = vmand %vm1292, %vm1300
    %vm1309 = vmand %vm1293, %vm1301
    %vm1310 = vmand %vm1294, %vm1302
    %vm1311 = vmand %vm1295, %vm1303
    %vm1312 = vmand %vm1296, %vm1304
    %v1313 = vsel %vm1305, 1, 0
    %v1314 = vsel %vm1306, 1, 0
    %v1315 = vsel %vm1307, 1, 0
    %v1316 = vsel %vm1308, 1, 0
    %v1317 = vsel %vm1309, 1, 0
    %v1318 = vsel %vm1310, 1, 0
    %v1319 = vsel %vm1311, 1, 0
    %v1320 = vsel %vm1312, 1, 0
    %vm1321 = vcmp.eq.s32.totalorder %v1313, 1
    %vm1322 = vcmp.eq.s32.totalorder %v1314, 1
    %vm1323 = vcmp.eq.s32.totalorder %v1315, 1
    %vm1324 = vcmp.eq.s32.totalorder %v1316, 1
    %vm1325 = vcmp.eq.s32.totalorder %v1317, 1
    %vm1326 = vcmp.eq.s32.totalorder %v1318, 1
    %vm1327 = vcmp.eq.s32.totalorder %v1319, 1
    %vm1328 = vcmp.eq.s32.totalorder %v1320, 1
    %v1329 = vsel %vm1321, %v1280, 0.0
    %v1330 = vsel %vm1322, %v1279, 0.0
    %v1331 = vsel %vm1323, %v1278, 0.0
    %v1332 = vsel %vm1324, %v1277, 0.0
    %v1333 = vsel %vm1325, %v1276, 0.0
    %v1334 = vsel %vm1326, %v1275, 0.0
    %v1335 = vsel %vm1327, %v1274, 0.0
    %v1336 = vsel %vm1328, %v1273, 0.0
    %v1337 = vlaneseq
    %v1338 = vshrl.u32 %v1337, 7
    %v1339 = vsub.s32 1, %v1338
    %v1340 = vrot.slane %v1137, %v1339
    %v1341 = vmul.f32 %v1329, %v1340
    %v1342 = vmul.f32 %v1330, %v1340
    %v1343 = vmul.f32 %v1331, %v1340
    %v1344 = vmul.f32 %v1332, %v1340
    %v1345 = vmul.f32 %v1333, %v1340
    %v1346 = vmul.f32 %v1334, %v1340
    %v1347 = vmul.f32 %v1335, %v1340
    %v1348 = vmul.f32 %v1336, %v1340
    %v1349 = vadd.f32 %v1256, %v1341
    %v1350 = vadd.f32 %v1257, %v1342
    %v1351 = vadd.f32 %v1258, %v1343
    %v1352 = vadd.f32 %v1259, %v1344
    %v1353 = vadd.f32 %v1260, %v1345
    %v1354 = vadd.f32 %v1261, %v1346
    %v1355 = vadd.f32 %v1262, %v1347
    %v1356 = vadd.f32 %v1263, %v1348
    %v1357 = vrot.slane %v1129, 6
    %v1358 = vrot.slane %v1130, 6
    %v1359 = vrot.slane %v1131, 6
    %v1360 = vrot.slane %v1132, 6
    %v1361 = vrot.slane %v1133, 6
    %v1362 = vrot.slane %v1134, 6
    %v1363 = vrot.slane %v1135, 6
    %v1364 = vrot.slane %v1136, 6
    %vm1365 = vcmp.lt.s32.totalorder %v1139, 2
    %v1366 = vsel %vm1365, %v1363, %v1364
    %v1367 = vsel %vm1365, %v1362, %v1363
    %v1368 = vsel %vm1365, %v1361, %v1362
    %v1369 = vsel %vm1365, %v1360, %v1361
    %v1370 = vsel %vm1365, %v1359, %v1360
    %v1371 = vsel %vm1365, %v1358, %v1359
    %v1372 = vsel %vm1365, %v1357, %v1358
    %v1373 = vsel %vm1365, %v1364, %v1357
    %v1374 = vadd.s32 %v1139, 4294967294
    %v1375 = vadd.s32 %v1140, 4294967294
    %v1376 = vadd.s32 %v1141, 4294967294
    %v1377 = vadd.s32 %v1142, 4294967294
    %v1378 = vadd.s32 %v1143, 4294967294
    %v1379 = vadd.s32 %v1144, 4294967294
    %v1380 = vadd.s32 %v1145, 4294967294
    %v1381 = vadd.s32 %v1146, 4294967294
    %vm1382 = vcmp.ge.s32.totalorder %v1374, 0
    %vm1383 = vcmp.ge.s32.totalorder %v1375, 0
    %vm1384 = vcmp.ge.s32.totalorder %v1376, 0
    %vm1385 = vcmp.ge.s32.totalorder %v1377, 0
    %vm1386 = vcmp.ge.s32.totalorder %v1378, 0
    %vm1387 = vcmp.ge.s32.totalorder %v1379, 0
    %vm1388 = vcmp.ge.s32.totalorder %v1380, 0
    %vm1389 = vcmp.ge.s32.totalorder %v1381, 0
    %vm1390 = vcmp.lt.s32.totalorder %v1374, 64
    %vm1391 = vcmp.lt.s32.totalorder %v1375, 64
    %vm1392 = vcmp.lt.s32.totalorder %v1376, 64
    %vm1393 = vcmp.lt.s32.totalorder %v1377, 64
    %vm1394 = vcmp.lt.s32.totalorder %v1378, 64
    %vm1395 = vcmp.lt.s32.totalorder %v1379, 64
    %vm1396 = vcmp.lt.s32.totalorder %v1380, 64
    %vm1397 = vcmp.lt.s32.totalorder %v1381, 64
    %vm1398 = vmand %vm1382, %vm1390
    %vm1399 = vmand %vm1383, %vm1391
    %vm1400 = vmand %vm1384, %vm1392
    %vm1401 = vmand %vm1385, %vm1393
    %vm1402 = vmand %vm1386, %vm1394
    %vm1403 = vmand %vm1387, %vm1395
    %vm1404 = vmand %vm1388, %vm1396
    %vm1405 = vmand %vm1389, %vm1397
    %v1406 = vsel %vm1398, 1, 0
    %v1407 = vsel %vm1399, 1, 0
    %v1408 = vsel %vm1400, 1, 0
    %v1409 = vsel %vm1401, 1, 0
    %v1410 = vsel %vm1402, 1, 0
    %v1411 = vsel %vm1403, 1, 0
    %v1412 = vsel %vm1404, 1, 0
    %v1413 = vsel %vm1405, 1, 0
    %vm1414 = vcmp.eq.s32.totalorder %v1406, 1
    %vm1415 = vcmp.eq.s32.totalorder %v1407, 1
    %vm1416 = vcmp.eq.s32.totalorder %v1408, 1
    %vm1417 = vcmp.eq.s32.totalorder %v1409, 1
    %vm1418 = vcmp.eq.s32.totalorder %v1410, 1
    %vm1419 = vcmp.eq.s32.totalorder %v1411, 1
    %vm1420 = vcmp.eq.s32.totalorder %v1412, 1
    %vm1421 = vcmp.eq.s32.totalorder %v1413, 1
    %v1422 = vsel %vm1414, %v1373, 0.0
    %v1423 = vsel %vm1415, %v1372, 0.0
    %v1424 = vsel %vm1416, %v1371, 0.0
    %v1425 = vsel %vm1417, %v1370, 0.0
    %v1426 = vsel %vm1418, %v1369, 0.0
    %v1427 = vsel %vm1419, %v1368, 0.0
    %v1428 = vsel %vm1420, %v1367, 0.0
    %v1429 = vsel %vm1421, %v1366, 0.0
    %v1430 = vlaneseq
    %v1431 = vshrl.u32 %v1430, 7
    %v1432 = vsub.s32 2, %v1431
    %v1433 = vrot.slane %v1137, %v1432
    %v1434 = vmul.f32 %v1422, %v1433
    %v1435 = vmul.f32 %v1423, %v1433
    %v1436 = vmul.f32 %v1424, %v1433
    %v1437 = vmul.f32 %v1425, %v1433
    %v1438 = vmul.f32 %v1426, %v1433
    %v1439 = vmul.f32 %v1427, %v1433
    %v1440 = vmul.f32 %v1428, %v1433
    %v1441 = vmul.f32 %v1429, %v1433
    %v1442 = vadd.f32 %v1349, %v1434
    %v1443 = vadd.f32 %v1350, %v1435
    %v1444 = vadd.f32 %v1351, %v1436
    %v1445 = vadd.f32 %v1352, %v1437
    %v1446 = vadd.f32 %v1353, %v1438
    %v1447 = vadd.f32 %v1354, %v1439
    %v1448 = vadd.f32 %v1355, %v1440
    %v1449 = vadd.f32 %v1356, %v1441
    %v1450 = vadd.s32 %v1139, 2
    %v1451 = vadd.s32 %v1140, 2
    %v1452 = vadd.s32 %v1141, 2
    %v1453 = vadd.s32 %v1142, 2
    %v1454 = vadd.s32 %v1143, 2
    %v1455 = vadd.s32 %v1144, 2
    %v1456 = vadd.s32 %v1145, 2
    %v1457 = vadd.s32 %v1146, 2
    %vm1458 = vcmp.ge.s32.totalorder %v1450, 0
    %vm1459 = vcmp.ge.s32.totalorder %v1451, 0
    %vm1460 = vcmp.ge.s32.totalorder %v1452, 0
    %vm1461 = vcmp.ge.s32.totalorder %v1453, 0
    %vm1462 = vcmp.ge.s32.totalorder %v1454, 0
    %vm1463 = vcmp.ge.s32.totalorder %v1455, 0
    %vm1464 = vcmp.ge.s32.totalorder %v1456, 0
    %vm1465 = vcmp.ge.s32.totalorder %v1457, 0
    %vm1466 = vcmp.lt.s32.totalorder %v1450, 64
    %vm1467 = vcmp.lt.s32.totalorder %v1451, 64
    %vm1468 = vcmp.lt.s32.totalorder %v1452, 64
    %vm1469 = vcmp.lt.s32.totalorder %v1453, 64
    %vm1470 = vcmp.lt.s32.totalorder %v1454, 64
    %vm1471 = vcmp.lt.s32.totalorder %v1455, 64
    %vm1472 = vcmp.lt.s32.totalorder %v1456, 64
    %vm1473 = vcmp.lt.s32.totalorder %v1457, 64
    %vm1474 = vmand %vm1458, %vm1466
    %vm1475 = vmand %vm1459, %vm1467
    %vm1476 = vmand %vm1460, %vm1468
    %vm1477 = vmand %vm1461, %vm1469
    %vm1478 = vmand %vm1462, %vm1470
    %vm1479 = vmand %vm1463, %vm1471
    %vm1480 = vmand %vm1464, %vm1472
    %vm1481 = vmand %vm1465, %vm1473
    %v1482 = vsel %vm1474, 1, 0
    %v1483 = vsel %vm1475, 1, 0
    %v1484 = vsel %vm1476, 1, 0
    %v1485 = vsel %vm1477, 1, 0
    %v1486 = vsel %vm1478, 1, 0
    %v1487 = vsel %vm1479, 1, 0
    %v1488 = vsel %vm1480, 1, 0
    %v1489 = vsel %vm1481, 1, 0
    %vm1490 = vcmp.eq.s32.totalorder %v1482, 1
    %vm1491 = vcmp.eq.s32.totalorder %v1483, 1
    %vm1492 = vcmp.eq.s32.totalorder %v1484, 1
    %vm1493 = vcmp.eq.s32.totalorder %v1485, 1
    %vm1494 = vcmp.eq.s32.totalorder %v1486, 1
    %vm1495 = vcmp.eq.s32.totalorder %v1487, 1
    %vm1496 = vcmp.eq.s32.totalorder %v1488, 1
    %vm1497 = vcmp.eq.s32.totalorder %v1489, 1
    %v1498 = vsel %vm1490, %v1186, 0.0
    %v1499 = vsel %vm1491, %v1185, 0.0
    %v1500 = vsel %vm1492, %v1184, 0.0
    %v1501 = vsel %vm1493, %v1183, 0.0
    %v1502 = vsel %vm1494, %v1182, 0.0
    %v1503 = vsel %vm1495, %v1181, 0.0
    %v1504 = vsel %vm1496, %v1180, 0.0
    %v1505 = vsel %vm1497, %v1187, 0.0
    %v1506 = vlaneseq
    %v1507 = vshrl.u32 %v1506, 7
    %v1508 = vsub.s32 4, %v1507
    %v1509 = vrot.slane %v1137, %v1508
    %v1510 = vmul.f32 %v1498, %v1509
    %v1511 = vmul.f32 %v1499, %v1509
    %v1512 = vmul.f32 %v1500, %v1509
    %v1513 = vmul.f32 %v1501, %v1509
    %v1514 = vmul.f32 %v1502, %v1509
    %v1515 = vmul.f32 %v1503, %v1509
    %v1516 = vmul.f32 %v1504, %v1509
    %v1517 = vmul.f32 %v1505, %v1509
    %v1518 = vadd.f32 %v1442, %v1510
    %v1519 = vadd.f32 %v1443, %v1511
    %v1520 = vadd.f32 %v1444, %v1512
    %v1521 = vadd.f32 %v1445, %v1513
    %v1522 = vadd.f32 %v1446, %v1514
    %v1523 = vadd.f32 %v1447, %v1515
    %v1524 = vadd.f32 %v1448, %v1516
    %v1525 = vadd.f32 %v1449, %v1517
    %v1526 = vadd.s32 %v1139, 4
    %v1527 = vadd.s32 %v1140, 4
    %v1528 = vadd.s32 %v1141, 4
    %v1529 = vadd.s32 %v1142, 4
    %v1530 = vadd.s32 %v1143, 4
    %v1531 = vadd.s32 %v1144, 4
    %v1532 = vadd.s32 %v1145, 4
    %v1533 = vadd.s32 %v1146, 4
    %vm1534 = vcmp.ge.s32.totalorder %v1526, 0
    %vm1535 = vcmp.ge.s32.totalorder %v1527, 0
    %vm1536 = vcmp.ge.s32.totalorder %v1528, 0
    %vm1537 = vcmp.ge.s32.totalorder %v1529, 0
    %vm1538 = vcmp.ge.s32.totalorder %v1530, 0
    %vm1539 = vcmp.ge.s32.totalorder %v1531, 0
    %vm1540 = vcmp.ge.s32.totalorder %v1532, 0
    %vm1541 = vcmp.ge.s32.totalorder %v1533, 0
    %vm1542 = vcmp.lt.s32.totalorder %v1526, 64
    %vm1543 = vcmp.lt.s32.totalorder %v1527, 64
    %vm1544 = vcmp.lt.s32.totalorder %v1528, 64
    %vm1545 = vcmp.lt.s32.totalorder %v1529, 64
    %vm1546 = vcmp.lt.s32.totalorder %v1530, 64
    %vm1547 = vcmp.lt.s32.totalorder %v1531, 64
    %vm1548 = vcmp.lt.s32.totalorder %v1532, 64
    %vm1549 = vcmp.lt.s32.totalorder %v1533, 64
    %vm1550 = vmand %vm1534, %vm1542
    %vm1551 = vmand %vm1535, %vm1543
    %vm1552 = vmand %vm1536, %vm1544
    %vm1553 = vmand %vm1537, %vm1545
    %vm1554 = vmand %vm1538, %vm1546
    %vm1555 = vmand %vm1539, %vm1547
    %vm1556 = vmand %vm1540, %vm1548
    %vm1557 = vmand %vm1541, %vm1549
    %v1558 = vsel %vm1550, 1, 0
    %v1559 = vsel %vm1551, 1, 0
    %v1560 = vsel %vm1552, 1, 0
    %v1561 = vsel %vm1553, 1, 0
    %v1562 = vsel %vm1554, 1, 0
    %v1563 = vsel %vm1555, 1, 0
    %v1564 = vsel %vm1556, 1, 0
    %v1565 = vsel %vm1557, 1, 0
    %vm1566 = vcmp.eq.s32.totalorder %v1558, 1
    %vm1567 = vcmp.eq.s32.totalorder %v1559, 1
    %vm1568 = vcmp.eq.s32.totalorder %v1560, 1
    %vm1569 = vcmp.eq.s32.totalorder %v1561, 1
    %vm1570 = vcmp.eq.s32.totalorder %v1562, 1
    %vm1571 = vcmp.eq.s32.totalorder %v1563, 1
    %vm1572 = vcmp.eq.s32.totalorder %v1564, 1
    %vm1573 = vcmp.eq.s32.totalorder %v1565, 1
    %v1574 = vsel %vm1566, %v1279, 0.0
    %v1575 = vsel %vm1567, %v1278, 0.0
    %v1576 = vsel %vm1568, %v1277, 0.0
    %v1577 = vsel %vm1569, %v1276, 0.0
    %v1578 = vsel %vm1570, %v1275, 0.0
    %v1579 = vsel %vm1571, %v1274, 0.0
    %v1580 = vsel %vm1572, %v1273, 0.0
    %v1581 = vsel %vm1573, %v1280, 0.0
    %v1582 = vlaneseq
    %v1583 = vshrl.u32 %v1582, 7
    %v1584 = vsub.s32 5, %v1583
    %v1585 = vrot.slane %v1137, %v1584
    %v1586 = vmul.f32 %v1574, %v1585
    %v1587 = vmul.f32 %v1575, %v1585
    %v1588 = vmul.f32 %v1576, %v1585
    %v1589 = vmul.f32 %v1577, %v1585
    %v1590 = vmul.f32 %v1578, %v1585
    %v1591 = vmul.f32 %v1579, %v1585
    %v1592 = vmul.f32 %v1580, %v1585
    %v1593 = vmul.f32 %v1581, %v1585
    %v1594 = vadd.f32 %v1518, %v1586
    %v1595 = vadd.f32 %v1519, %v1587
    %v1596 = vadd.f32 %v1520, %v1588
    %v1597 = vadd.f32 %v1521, %v1589
    %v1598 = vadd.f32 %v1522, %v1590
    %v1599 = vadd.f32 %v1523, %v1591
    %v1600 = vadd.f32 %v1524, %v1592
    %v1601 = vadd.f32 %v1525, %v1593
    %v1602 = vadd.s32 %v1139, 6
    %v1603 = vadd.s32 %v1140, 6
    %v1604 = vadd.s32 %v1141, 6
    %v1605 = vadd.s32 %v1142, 6
    %v1606 = vadd.s32 %v1143, 6
    %v1607 = vadd.s32 %v1144, 6
    %v1608 = vadd.s32 %v1145, 6
    %v1609 = vadd.s32 %v1146, 6
    %vm1610 = vcmp.ge.s32.totalorder %v1602, 0
    %vm1611 = vcmp.ge.s32.totalorder %v1603, 0
    %vm1612 = vcmp.ge.s32.totalorder %v1604, 0
    %vm1613 = vcmp.ge.s32.totalorder %v1605, 0
    %vm1614 = vcmp.ge.s32.totalorder %v1606, 0
    %vm1615 = vcmp.ge.s32.totalorder %v1607, 0
    %vm1616 = vcmp.ge.s32.totalorder %v1608, 0
    %vm1617 = vcmp.ge.s32.totalorder %v1609, 0
    %vm1618 = vcmp.lt.s32.totalorder %v1602, 64
    %vm1619 = vcmp.lt.s32.totalorder %v1603, 64
    %vm1620 = vcmp.lt.s32.totalorder %v1604, 64
    %vm1621 = vcmp.lt.s32.totalorder %v1605, 64
    %vm1622 = vcmp.lt.s32.totalorder %v1606, 64
    %vm1623 = vcmp.lt.s32.totalorder %v1607, 64
    %vm1624 = vcmp.lt.s32.totalorder %v1608, 64
    %vm1625 = vcmp.lt.s32.totalorder %v1609, 64
    %vm1626 = vmand %vm1610, %vm1618
    %vm1627 = vmand %vm1611, %vm1619
    %vm1628 = vmand %vm1612, %vm1620
    %vm1629 = vmand %vm1613, %vm1621
    %vm1630 = vmand %vm1614, %vm1622
    %vm1631 = vmand %vm1615, %vm1623
    %vm1632 = vmand %vm1616, %vm1624
    %vm1633 = vmand %vm1617, %vm1625
    %v1634 = vsel %vm1626, 1, 0
    %v1635 = vsel %vm1627, 1, 0
    %v1636 = vsel %vm1628, 1, 0
    %v1637 = vsel %vm1629, 1, 0
    %v1638 = vsel %vm1630, 1, 0
    %v1639 = vsel %vm1631, 1, 0
    %v1640 = vsel %vm1632, 1, 0
    %v1641 = vsel %vm1633, 1, 0
    %vm1642 = vcmp.eq.s32.totalorder %v1634, 1
    %vm1643 = vcmp.eq.s32.totalorder %v1635, 1
    %vm1644 = vcmp.eq.s32.totalorder %v1636, 1
    %vm1645 = vcmp.eq.s32.totalorder %v1637, 1
    %vm1646 = vcmp.eq.s32.totalorder %v1638, 1
    %vm1647 = vcmp.eq.s32.totalorder %v1639, 1
    %vm1648 = vcmp.eq.s32.totalorder %v1640, 1
    %vm1649 = vcmp.eq.s32.totalorder %v1641, 1
    %v1650 = vsel %vm1642, %v1372, 0.0
    %v1651 = vsel %vm1643, %v1371, 0.0
    %v1652 = vsel %vm1644, %v1370, 0.0
    %v1653 = vsel %vm1645, %v1369, 0.0
    %v1654 = vsel %vm1646, %v1368, 0.0
    %v1655 = vsel %vm1647, %v1367, 0.0
    %v1656 = vsel %vm1648, %v1366, 0.0
    %v1657 = vsel %vm1649, %v1373, 0.0
    %v1658 = vlaneseq
    %v1659 = vshrl.u32 %v1658, 7
    %v1660 = vsub.s32 6, %v1659
    %v1661 = vrot.slane %v1137, %v1660
    %v1662 = vmul.f32 %v1650, %v1661
    %v1663 = vmul.f32 %v1651, %v1661
    %v1664 = vmul.f32 %v1652, %v1661
    %v1665 = vmul.f32 %v1653, %v1661
    %v1666 = vmul.f32 %v1654, %v1661
    %v1667 = vmul.f32 %v1655, %v1661
    %v1668 = vmul.f32 %v1656, %v1661
    %v1669 = vmul.f32 %v1657, %v1661
    %v1670 = vadd.f32 %v1594, %v1662
    %v1671 = vadd.f32 %v1595, %v1663
    %v1672 = vadd.f32 %v1596, %v1664
    %v1673 = vadd.f32 %v1597, %v1665
    %v1674 = vadd.f32 %v1598, %v1666
    %v1675 = vadd.f32 %v1599, %v1667
    %v1676 = vadd.f32 %v1600, %v1668
    %v1677 = vadd.f32 %v1601, %v1669
    %v1678 = vlaneseq
    %v1679 = vshrl.u32 %v1678, 7
    %v1680 = vsub.s32 6, %v1679
    %v1681 = vrot.slane %v143, %v1680
    %v1682 = vmul.f32 %v1670, %v1681
    %v1683 = vmul.f32 %v1671, %v1681
    %v1684 = vmul.f32 %v1672, %v1681
    %v1685 = vmul.f32 %v1673, %v1681
    %v1686 = vmul.f32 %v1674, %v1681
    %v1687 = vmul.f32 %v1675, %v1681
    %v1688 = vmul.f32 %v1676, %v1681
    %v1689 = vmul.f32 %v1677, %v1681
    %v1690 = vlaneseq
    %v1691 = vshrl.u32 %v1690, 7
    %v1692 = vsub.s32 7, %v1691
    %v1693 = vrot.slane %v143, %v1692
    %v1694 = vadd.f32 %v1682, %v1693
    %v1695 = vadd.f32 %v1683, %v1693
    %v1696 = vadd.f32 %v1684, %v1693
    %v1697 = vadd.f32 %v1685, %v1693
    %v1698 = vadd.f32 %v1686, %v1693
    %v1699 = vadd.f32 %v1687, %v1693
    %v1700 = vadd.f32 %v1688, %v1693
    %v1701 = vadd.f32 %v1689, %v1693
    %v1702 = vxor.u32 %v1694, 2147483648
    %v1703 = vxor.u32 %v1695, 2147483648
    %v1704 = vxor.u32 %v1696, 2147483648
    %v1705 = vxor.u32 %v1697, 2147483648
    %v1706 = vxor.u32 %v1698, 2147483648
    %v1707 = vxor.u32 %v1699, 2147483648
    %v1708 = vxor.u32 %v1700, 2147483648
    %v1709 = vxor.u32 %v1701, 2147483648
    %v1710 = vmul.f32 %v1702, 1.442695
    %v1711 = vpow.pop %v1710
    %v1712 = vmul.f32 %v1703, 1.442695
    %v1713 = vpow.pop %v1712
    %v1714 = vmul.f32 %v1704, 1.442695
    %v1715 = vpow.pop %v1714
    %v1716 = vmul.f32 %v1705, 1.442695
    %v1717 = vpow.pop %v1716
    %v1718 = vmul.f32 %v1706, 1.442695
    %v1719 = vpow.pop %v1718
    %v1720 = vmul.f32 %v1707, 1.442695
    %v1721 = vpow.pop %v1720
    %v1722 = vmul.f32 %v1708, 1.442695
    %v1723 = vpow.pop %v1722
    %v1724 = vmul.f32 %v1709, 1.442695
    %v1725 = vpow.pop %v1724
    %v1726 = vadd.f32 %v1711, 1.0
    %v1727 = vadd.f32 %v1713, 1.0
    %v1728 = vadd.f32 %v1715, 1.0
    %v1729 = vadd.f32 %v1717, 1.0
    %v1730 = vadd.f32 %v1719, 1.0
    %v1731 = vadd.f32 %v1721, 1.0
    %v1732 = vadd.f32 %v1723, 1.0
    %v1733 = vadd.f32 %v1725, 1.0
    %v1734 = vrcp.pop %v1726
    %v1735 = vmul.f32 1.0, %v1734
    %v1736 = vrcp.pop %v1727
    %v1737 = vmul.f32 1.0, %v1736
    %v1738 = vrcp.pop %v1728
    %v1739 = vmul.f32 1.0, %v1738
    %v1740 = vrcp.pop %v1729
    %v1741 = vmul.f32 1.0, %v1740
    %v1742 = vrcp.pop %v1730
    %v1743 = vmul.f32 1.0, %v1742
    %v1744 = vrcp.pop %v1731
    %v1745 = vmul.f32 1.0, %v1744
    %v1746 = vrcp.pop %v1732
    %v1747 = vmul.f32 1.0, %v1746
    %v1748 = vrcp.pop %v1733
    %v1749 = vmul.f32 1.0, %v1748
    %v1750 = vmul.f32 %v1694, %v1735
    %v1751 = vmul.f32 %v1695, %v1737
    %v1752 = vmul.f32 %v1696, %v1739
    %v1753 = vmul.f32 %v1697, %v1741
    %v1754 = vmul.f32 %v1698, %v1743
    %v1755 = vmul.f32 %v1699, %v1745
    %v1756 = vmul.f32 %v1700, %v1747
    %v1757 = vmul.f32 %v1701, %v1749
    %v1758 = vpack.c.bf16 %v1751, %v1750
    %v1759 = vpack.c.bf16 %v1753, %v1752
    %v1760 = vpack.c.bf16 %v1755, %v1754
    %v1761 = vpack.c.bf16 %v1757, %v1756
    %v1762 = vld [vmem:[#allocation10] sm:$0xf]
    %v1763 = vld [vmem:[#allocation10 + $0x4] sm:$0xf]
    %v1764 = vld [vmem:[#allocation10 + $0x8] sm:$0xf]
    %v1765 = vld [vmem:[#allocation10 + $0xc] sm:$0xf]
    %v1766 = vld [vmem:[#allocation10 + $0x10] sm:$0xf]
    %v1767 = vld [vmem:[#allocation10 + $0x14] sm:$0xf]
    %v1768 = vld [vmem:[#allocation10 + $0x18] sm:$0xf]
    %v1769 = vld [vmem:[#allocation10 + $0x1c] sm:$0xf]
    %v1770 = vld [vmem:[#allocation10 + $0x20] sm:$0xf]
    %v1771 = vld [vmem:[#allocation10 + $0x24] sm:$0xf]
    %v1772 = vld [vmem:[#allocation10 + $0x28] sm:$0xf]
    %v1773 = vld [vmem:[#allocation10 + $0x2c] sm:$0xf]
    %v1774 = vld [vmem:[#allocation10 + $0x30] sm:$0xf]
    %v1775 = vld [vmem:[#allocation10 + $0x34] sm:$0xf]
    %v1776 = vld [vmem:[#allocation10 + $0x38] sm:$0xf]
    %v1777 = vld [vmem:[#allocation10 + $0x3c] sm:$0xf]
    %v1794 = vunpack.c.l.b16 %v1762
    %v1795 = vunpack.c.l.b16 %v1763
    %v1796 = vunpack.c.l.b16 %v1764
    %v1797 = vunpack.c.l.b16 %v1765
    %v1798 = vunpack.c.l.b16 %v1766
    %v1799 = vunpack.c.l.b16 %v1767
    %v1800 = vunpack.c.l.b16 %v1768
    %v1801 = vunpack.c.l.b16 %v1769
    %v1802 = vunpack.c.l.b16 %v1770
    %v1803 = vunpack.c.l.b16 %v1771
    %v1804 = vunpack.c.l.b16 %v1772
    %v1805 = vunpack.c.l.b16 %v1773
    %v1806 = vunpack.c.l.b16 %v1774
    %v1807 = vunpack.c.l.b16 %v1775
    %v1808 = vunpack.c.l.b16 %v1776
    %v1809 = vunpack.c.l.b16 %v1777
    %v1810 = vpack.c.b16 %v1795, %v1794
    %v1811 = vpack.c.b16 %v1797, %v1796
    %v1812 = vpack.c.b16 %v1799, %v1798
    %v1813 = vpack.c.b16 %v1801, %v1800
    %v1814 = vpack.c.b16 %v1803, %v1802
    %v1815 = vpack.c.b16 %v1805, %v1804
    %v1816 = vpack.c.b16 %v1807, %v1806
    %v1817 = vpack.c.b16 %v1809, %v1808
    %1826 = vmatprep.subr.bf16.mxu0 0
    %1827 = vmatpush1.bf16.msra.mxu0 %v1810
    %1828 = vmatprep.subr.bf16.mxu0 0
    %1829 = vmatpush1.bf16.msra.mxu0 %v1811
    %1830 = vmatprep.subr.bf16.mxu0 0
    %1831 = vmatpush1.bf16.msra.mxu0 %v1812
    %1832 = vmatprep.subr.bf16.mxu0 0
    %1833 = vmatpush1.bf16.msra.mxu0 %v1813
    %1834 = vmatprep.subr.bf16.mxu0 0
    %1835 = vmatpush1.bf16.msra.mxu0 %v1814
    %1836 = vmatprep.subr.bf16.mxu0 0
    %1837 = vmatpush1.bf16.msra.mxu0 %v1815
    %1838 = vmatprep.subr.bf16.mxu0 0
    %1839 = vmatpush1.bf16.msra.mxu0 %v1816
    %1840 = vmatprep.subr.bf16.mxu0 0
    %1841 = vmatpush1.bf16.msra.mxu0 %v1817
    %1842 = vmatprep.subr.bf16.mxu0 0
    %1843 = vmatpush1.bf16.msra.mxu0 0
    %1844 = vmatprep.subr.bf16.mxu0 0
    %1845 = vmatpush1.bf16.msra.mxu0 0
    %1846 = vmatprep.subr.bf16.mxu0 0
    %1847 = vmatpush1.bf16.msra.mxu0 0
    %1848 = vmatprep.subr.bf16.mxu0 0
    %1849 = vmatpush1.bf16.msra.mxu0 0
    %1850 = vmatprep.subr.bf16.mxu0 0
    %1851 = vmatpush1.bf16.msra.mxu0 0
    %1852 = vmatprep.subr.bf16.mxu0 0
    %1853 = vmatpush1.bf16.msra.mxu0 0
    %1854 = vmatprep.subr.bf16.mxu0 0
    %1855 = vmatpush1.bf16.msra.mxu0 0
    %1856 = vmatprep.subr.bf16.mxu0 0
    %1857 = vmatpush1.bf16.msra.mxu0 0
    %1858 = vmatprep.mubr.bf16.mxu0 0
    %1859 = vmatmul.mubr.bf16.gmra.mrb[0].mxu0 %v1758
    %v1860 = vpop.f32.mrb[0].mxu0
    %v1861 = vadd.f32 0.0, %v1860
    %v1862 = vpop.f32.mrb[0].mxu0
    %v1863 = vpop.f32.mrb[0].mxu0
    %v1864 = vadd.f32 0.0, %v1863
    %v1865 = vpop.f32.mrb[0].mxu0
    %1866 = vmatprep.mubr.bf16.mxu0 0
    %1867 = vmatmul.mubr.bf16.gmra.mrb[0].mxu0 %v1759
    %v1868 = vpop.f32.mrb[0].mxu0
    %v1869 = vadd.f32 0.0, %v1868
    %v1870 = vpop.f32.mrb[0].mxu0
    %v1871 = vpop.f32.mrb[0].mxu0
    %v1872 = vadd.f32 0.0, %v1871
    %v1873 = vpop.f32.mrb[0].mxu0
    %1874 = vmatprep.mubr.bf16.mxu0 0
    %1875 = vmatmul.mubr.bf16.gmra.mrb[0].mxu0 %v1760
    %v1876 = vpop.f32.mrb[0].mxu0
    %v1877 = vadd.f32 0.0, %v1876
    %v1878 = vpop.f32.mrb[0].mxu0
    %v1879 = vpop.f32.mrb[0].mxu0
    %v1880 = vadd.f32 0.0, %v1879
    %v1881 = vpop.f32.mrb[0].mxu0
    %1882 = vmatprep.mubr.bf16.mxu0 0
    %1883 = vmatmul.mubr.bf16.gmra.mrb[0].mxu0 %v1761
    %v1884 = vpop.f32.mrb[0].mxu0
    %v1885 = vadd.f32 0.0, %v1884
    %v1886 = vpop.f32.mrb[0].mxu0
    %v1887 = vpop.f32.mrb[0].mxu0
    %v1888 = vadd.f32 0.0, %v1887
    %v1889 = vpop.f32.mrb[0].mxu0
    %1890 = vdwg.mxu0
    %v1891 = vadd.f32 %v777, %v1861
    %v1892 = vadd.f32 %v778, %v1864
    %v1893 = vadd.f32 %v779, %v1869
    %v1894 = vadd.f32 %v780, %v1872
    %v1895 = vadd.f32 %v781, %v1877
    %v1896 = vadd.f32 %v782, %v1880
    %v1897 = vadd.f32 %v783, %v1885
    %v1898 = vadd.f32 %v784, %v1888
    %v1899 = vlaneseq
    %v1900 = vshrl.u32 %v1899, 7
    %v1901 = vsub.s32 0, %v1900
    %v1902 = vrot.slane %v144, %v1901
    %v1903 = vadd.f32 %v1891, %v1902
    %v1904 = vadd.f32 %v1892, %v1902
    %v1905 = vadd.f32 %v1893, %v1902
    %v1906 = vadd.f32 %v1894, %v1902
    %v1907 = vadd.f32 %v1895, %v1902
    %v1908 = vadd.f32 %v1896, %v1902
    %v1909 = vadd.f32 %v1897, %v1902
    %v1910 = vadd.f32 %v1898, %v1902
    %1911 = vadd.xlane.f32.xlu0 %v1903
    %v1912 = vpop.xlane.xlu0 %1911
    %1913 = vadd.xlane.f32.xlu0 %v1904
    %v1914 = vpop.xlane.xlu0 %1913
    %1915 = vadd.xlane.f32.xlu0 %v1905
    %v1916 = vpop.xlane.xlu0 %1915
    %1917 = vadd.xlane.f32.xlu0 %v1906
    %v1918 = vpop.xlane.xlu0 %1917
    %1919 = vadd.xlane.f32.xlu0 %v1907
    %v1920 = vpop.xlane.xlu0 %1919
    %1921 = vadd.xlane.f32.xlu0 %v1908
    %v1922 = vpop.xlane.xlu0 %1921
    %1923 = vadd.xlane.f32.xlu0 %v1909
    %v1924 = vpop.xlane.xlu0 %1923
    %1925 = vadd.xlane.f32.xlu0 %v1910
    %v1926 = vpop.xlane.xlu0 %1925
    %v1927 = vmul.f32 %v1912, %v163
    %v1928 = vmul.f32 %v1914, %v163
    %v1929 = vmul.f32 %v1916, %v163
    %v1930 = vmul.f32 %v1918, %v163
    %v1931 = vmul.f32 %v1920, %v163
    %v1932 = vmul.f32 %v1922, %v163
    %v1933 = vmul.f32 %v1924, %v163
    %v1934 = vmul.f32 %v1926, %v163
    %v1935 = vsub.f32 %v1903, %v1927
    %v1936 = vsub.f32 %v1904, %v1928
    %v1937 = vsub.f32 %v1905, %v1929
    %v1938 = vsub.f32 %v1906, %v1930
    %v1939 = vsub.f32 %v1907, %v1931
    %v1940 = vsub.f32 %v1908, %v1932
    %v1941 = vsub.f32 %v1909, %v1933
    %v1942 = vsub.f32 %v1910, %v1934
    %v1943 = vmul.f32 %v1935, %v1935
    %v1944 = vmul.f32 %v1936, %v1936
    %v1945 = vmul.f32 %v1937, %v1937
    %v1946 = vmul.f32 %v1938, %v1938
    %v1947 = vmul.f32 %v1939, %v1939
    %v1948 = vmul.f32 %v1940, %v1940
    %v1949 = vmul.f32 %v1941, %v1941
    %v1950 = vmul.f32 %v1942, %v1942
    %1951 = vadd.xlane.f32.xlu0 %v1943
    %v1952 = vpop.xlane.xlu0 %1951
    %1953 = vadd.xlane.f32.xlu0 %v1944
    %v1954 = vpop.xlane.xlu0 %1953
    %1955 = vadd.xlane.f32.xlu0 %v1945
    %v1956 = vpop.xlane.xlu0 %1955
    %1957 = vadd.xlane.f32.xlu0 %v1946
    %v1958 = vpop.xlane.xlu0 %1957
    %1959 = vadd.xlane.f32.xlu0 %v1947
    %v1960 = vpop.xlane.xlu0 %1959
    %1961 = vadd.xlane.f32.xlu0 %v1948
    %v1962 = vpop.xlane.xlu0 %1961
    %1963 = vadd.xlane.f32.xlu0 %v1949
    %v1964 = vpop.xlane.xlu0 %1963
    %1965 = vadd.xlane.f32.xlu0 %v1950
    %v1966 = vpop.xlane.xlu0 %1965
    %v1967 = vmul.f32 %v1952, %v163
    %v1968 = vmul.f32 %v1954, %v163
    %v1969 = vmul.f32 %v1956, %v163
    %v1970 = vmul.f32 %v1958, %v163
    %v1971 = vmul.f32 %v1960, %v163
    %v1972 = vmul.f32 %v1962, %v163
    %v1973 = vmul.f32 %v1964, %v163
    %v1974 = vmul.f32 %v1966, %v163
    %v1975 = vadd.f32 %v1967, 1e-05
    %v1976 = vadd.f32 %v1968, 1e-05
    %v1977 = vadd.f32 %v1969, 1e-05
    %v1978 = vadd.f32 %v1970, 1e-05
    %v1979 = vadd.f32 %v1971, 1e-05
    %v1980 = vadd.f32 %v1972, 1e-05
    %v1981 = vadd.f32 %v1973, 1e-05
    %v1982 = vadd.f32 %v1974, 1e-05
    %v1983 = vrsqrt.pop %v1975
    %v1984 = vrsqrt.pop %v1976
    %v1985 = vrsqrt.pop %v1977
    %v1986 = vrsqrt.pop %v1978
    %v1987 = vrsqrt.pop %v1979
    %v1988 = vrsqrt.pop %v1980
    %v1989 = vrsqrt.pop %v1981
    %v1990 = vrsqrt.pop %v1982
    %v1991 = vmul.f32 %v1935, %v1983
    %v1992 = vmul.f32 %v1936, %v1984
    %v1993 = vmul.f32 %v1937, %v1985
    %v1994 = vmul.f32 %v1938, %v1986
    %v1995 = vmul.f32 %v1939, %v1987
    %v1996 = vmul.f32 %v1940, %v1988
    %v1997 = vmul.f32 %v1941, %v1989
    %v1998 = vmul.f32 %v1942, %v1990
    %v1999 = vlaneseq
    %v2000 = vshrl.u32 %v1999, 7
    %v2001 = vsub.s32 1, %v2000
    %v2002 = vrot.slane %v144, %v2001
    %v2003 = vmul.f32 %v1991, %v2002
    %v2004 = vmul.f32 %v1992, %v2002
    %v2005 = vmul.f32 %v1993, %v2002
    %v2006 = vmul.f32 %v1994, %v2002
    %v2007 = vmul.f32 %v1995, %v2002
    %v2008 = vmul.f32 %v1996, %v2002
    %v2009 = vmul.f32 %v1997, %v2002
    %v2010 = vmul.f32 %v1998, %v2002
    %v2011 = vlaneseq
    %v2012 = vshrl.u32 %v2011, 7
    %v2013 = vsub.s32 2, %v2012
    %v2014 = vrot.slane %v144, %v2013
    %v2015 = vadd.f32 %v2003, %v2014
    %v2016 = vadd.f32 %v2004, %v2014
    %v2017 = vadd.f32 %v2005, %v2014
    %v2018 = vadd.f32 %v2006, %v2014
    %v2019 = vadd.f32 %v2007, %v2014
    %v2020 = vadd.f32 %v2008, %v2014
    %v2021 = vadd.f32 %v2009, %v2014
    %v2022 = vadd.f32 %v2010, %v2014
    %v2023 = vpack.c.bf16 %v2016, %v2015
    %v2024 = vpack.c.bf16 %v2018, %v2017
    %v2025 = vpack.c.bf16 %v2020, %v2019
    %v2026 = vpack.c.bf16 %v2022, %v2021
    %v2027 = vld [vmem:[#allocation11] sm:$0xff]
    %v2028 = vld [vmem:[#allocation11 + $0x8] sm:$0xff]
    %v2029 = vld [vmem:[#allocation11 + $0x10] sm:$0xff]
    %v2030 = vld [vmem:[#allocation11 + $0x18] sm:$0xff]
    %v2031 = vld [vmem:[#allocation11 + $0x20] sm:$0xff]
    %v2032 = vld [vmem:[#allocation11 + $0x28] sm:$0xff]
    %v2033 = vld [vmem:[#allocation11 + $0x30] sm:$0xff]
    %v2034 = vld [vmem:[#allocation11 + $0x38] sm:$0xff]
    %v2035 = vld [vmem:[#allocation11 + $0x40] sm:$0xff]
    %v2036 = vld [vmem:[#allocation11 + $0x48] sm:$0xff]
    %v2037 = vld [vmem:[#allocation11 + $0x50] sm:$0xff]
    %v2038 = vld [vmem:[#allocation11 + $0x58] sm:$0xff]
    %v2039 = vld [vmem:[#allocation11 + $0x60] sm:$0xff]
    %v2040 = vld [vmem:[#allocation11 + $0x68] sm:$0xff]
    %v2041 = vld [vmem:[#allocation11 + $0x70] sm:$0xff]
    %v2042 = vld [vmem:[#allocation11 + $0x78] sm:$0xff]
    %v2043 = vlaneseq
    %v2044 = vshrl.u32 %v2043, 7
    %v2045 = vsub.s32 1, %v2044
    %v2046 = vrot.slane %v145, %v2045
    %v2047 = vlaneseq
    %v2048 = vshrl.u32 %v2047, 7
    %v2049 = vsub.s32 3, %v2048
    %v2050 = vrot.slane %v145, %v2049
    %v2053 = vlaneseq
    %v2054 = vshrl.u32 %v2053, 7
    %v2055 = vsub.s32 1, %v2054
    %v2056 = vrot.slane %v2046, %v2055
    %v2057 = vlaneseq
    %v2058 = vshrl.u32 %v2057, 7
    %v2059 = vsub.s32 1, %v2058
    %v2060 = vrot.slane %v2050, %v2059
    %v2077 = vunpack.c.l.b16 %v2027
    %v2078 = vunpack.c.h.b16 %v2027
    %v2079 = vunpack.c.l.b16 %v2028
    %v2080 = vunpack.c.h.b16 %v2028
    %v2081 = vunpack.c.l.b16 %v2029
    %v2082 = vunpack.c.h.b16 %v2029
    %v2083 = vunpack.c.l.b16 %v2030
    %v2084 = vunpack.c.h.b16 %v2030
    %v2085 = vunpack.c.l.b16 %v2031
    %v2086 = vunpack.c.h.b16 %v2031
    %v2087 = vunpack.c.l.b16 %v2032
    %v2088 = vunpack.c.h.b16 %v2032
    %v2089 = vunpack.c.l.b16 %v2033
    %v2090 = vunpack.c.h.b16 %v2033
    %v2091 = vunpack.c.l.b16 %v2034
    %v2092 = vunpack.c.h.b16 %v2034
    %v2093 = vunpack.c.l.b16 %v2035
    %v2094 = vunpack.c.h.b16 %v2035
    %v2095 = vunpack.c.l.b16 %v2036
    %v2096 = vunpack.c.h.b16 %v2036
    %v2097 = vunpack.c.l.b16 %v2037
    %v2098 = vunpack.c.h.b16 %v2037
    %v2099 = vunpack.c.l.b16 %v2038
    %v2100 = vunpack.c.h.b16 %v2038
    %v2101 = vunpack.c.l.b16 %v2039
    %v2102 = vunpack.c.h.b16 %v2039
    %v2103 = vunpack.c.l.b16 %v2040
    %v2104 = vunpack.c.h.b16 %v2040
    %v2105 = vunpack.c.l.b16 %v2041
    %v2106 = vunpack.c.h.b16 %v2041
    %v2107 = vunpack.c.l.b16 %v2042
    %v2108 = vunpack.c.h.b16 %v2042
    %v2109 = vpack.c.b16 %v2079, %v2077
    %v2110 = vpack.c.b16 %v2080, %v2078
    %v2111 = vpack.c.b16 %v2083, %v2081
    %v2112 = vpack.c.b16 %v2084, %v2082
    %v2113 = vpack.c.b16 %v2087, %v2085
    %v2114 = vpack.c.b16 %v2088, %v2086
    %v2115 = vpack.c.b16 %v2091, %v2089
    %v2116 = vpack.c.b16 %v2092, %v2090
    %v2117 = vpack.c.b16 %v2095, %v2093
    %v2118 = vpack.c.b16 %v2096, %v2094
    %v2119 = vpack.c.b16 %v2099, %v2097
    %v2120 = vpack.c.b16 %v2100, %v2098
    %v2121 = vpack.c.b16 %v2103, %v2101
    %v2122 = vpack.c.b16 %v2104, %v2102
    %v2123 = vpack.c.b16 %v2107, %v2105
    %v2124 = vpack.c.b16 %v2108, %v2106
    %2141 = vmatprep.subr.bf16.mxu0 %v2110
    %2142 = vmatpush1.bf16.msra.mxu0 %v2109
    %2143 = vmatprep.subr.bf16.mxu0 %v2112
    %2144 = vmatpush1.bf16.msra.mxu0 %v2111
    %2145 = vmatprep.subr.bf16.mxu0 %v2114
    %2146 = vmatpush1.bf16.msra.mxu0 %v2113
    %2147 = vmatprep.subr.bf16.mxu0 %v2116
    %2148 = vmatpush1.bf16.msra.mxu0 %v2115
    %2149 = vmatprep.subr.bf16.mxu0 %v2118
    %2150 = vmatpush1.bf16.msra.mxu0 %v2117
    %2151 = vmatprep.subr.bf16.mxu0 %v2120
    %2152 = vmatpush1.bf16.msra.mxu0 %v2119
    %2153 = vmatprep.subr.bf16.mxu0 %v2122
    %2154 = vmatpush1.bf16.msra.mxu0 %v2121
    %2155 = vmatprep.subr.bf16.mxu0 %v2124
    %2156 = vmatpush1.bf16.msra.mxu0 %v2123
    %2157 = vmatprep.subr.bf16.mxu0 0
    %2158 = vmatpush1.bf16.msra.mxu0 0
    %2159 = vmatprep.subr.bf16.mxu0 0
    %2160 = vmatpush1.bf16.msra.mxu0 0
    %2161 = vmatprep.subr.bf16.mxu0 0
    %2162 = vmatpush1.bf16.msra.mxu0 0
    %2163 = vmatprep.subr.bf16.mxu0 0
    %2164 = vmatpush1.bf16.msra.mxu0 0
    %2165 = vmatprep.subr.bf16.mxu0 0
    %2166 = vmatpush1.bf16.msra.mxu0 0
    %2167 = vmatprep.subr.bf16.mxu0 0
    %2168 = vmatpush1.bf16.msra.mxu0 0
    %2169 = vmatprep.subr.bf16.mxu0 0
    %2170 = vmatpush1.bf16.msra.mxu0 0
    %2171 = vmatprep.subr.bf16.mxu0 0
    %2172 = vmatpush1.bf16.msra.mxu0 0
    %2173 = vmatprep.mubr.bf16.mxu0 0
    %2174 = vmatmul.mubr.bf16.gmra.mrb[0].mxu0 %v2023
    %v2175 = vpop.f32.mrb[0].mxu0
    %v2176 = vadd.f32 %v2056, %v2175
    %v2177 = vpop.f32.mrb[0].mxu0
    %v2178 = vadd.f32 %v2060, %v2177
    %v2179 = vpop.f32.mrb[0].mxu0
    %v2180 = vadd.f32 %v2056, %v2179
    %v2181 = vpop.f32.mrb[0].mxu0
    %v2182 = vadd.f32 %v2060, %v2181
    %2183 = vmatprep.mubr.bf16.mxu0 0
    %2184 = vmatmul.mubr.bf16.gmra.mrb[0].mxu0 %v2024
    %v2185 = vpop.f32.mrb[0].mxu0
    %v2186 = vadd.f32 %v2056, %v2185
    %v2187 = vpop.f32.mrb[0].mxu0
    %v2188 = vadd.f32 %v2060, %v2187
    %v2189 = vpop.f32.mrb[0].mxu0
    %v2190 = vadd.f32 %v2056, %v2189
    %v2191 = vpop.f32.mrb[0].mxu0
    %v2192 = vadd.f32 %v2060, %v2191
    %2193 = vmatprep.mubr.bf16.mxu0 0
    %2194 = vmatmul.mubr.bf16.gmra.mrb[0].mxu0 %v2025
    %v2195 = vpop.f32.mrb[0].mxu0
    %v2196 = vadd.f32 %v2056, %v2195
    %v2197 = vpop.f32.mrb[0].mxu0
    %v2198 = vadd.f32 %v2060, %v2197
    %v2199 = vpop.f32.mrb[0].mxu0
    %v2200 = vadd.f32 %v2056, %v2199
    %v2201 = vpop.f32.mrb[0].mxu0
    %v2202 = vadd.f32 %v2060, %v2201
    %2203 = vmatprep.mubr.bf16.mxu0 0
    %2204 = vmatmul.mubr.bf16.gmra.mrb[0].mxu0 %v2026
    %v2205 = vpop.f32.mrb[0].mxu0
    %v2206 = vadd.f32 %v2056, %v2205
    %v2207 = vpop.f32.mrb[0].mxu0
    %v2208 = vadd.f32 %v2060, %v2207
    %v2209 = vpop.f32.mrb[0].mxu0
    %v2210 = vadd.f32 %v2056, %v2209
    %v2211 = vpop.f32.mrb[0].mxu0
    %v2212 = vadd.f32 %v2060, %v2211
    %2213 = vdwg.mxu0
    %v2214 = vxor.u32 %v2176, 2147483648
    %v2215 = vxor.u32 %v2178, 2147483648
    %v2216 = vxor.u32 %v2180, 2147483648
    %v2217 = vxor.u32 %v2182, 2147483648
    %v2218 = vxor.u32 %v2186, 2147483648
    %v2219 = vxor.u32 %v2188, 2147483648
    %v2220 = vxor.u32 %v2190, 2147483648
    %v2221 = vxor.u32 %v2192, 2147483648
    %v2222 = vxor.u32 %v2196, 2147483648
    %v2223 = vxor.u32 %v2198, 2147483648
    %v2224 = vxor.u32 %v2200, 2147483648
    %v2225 = vxor.u32 %v2202, 2147483648
    %v2226 = vxor.u32 %v2206, 2147483648
    %v2227 = vxor.u32 %v2208, 2147483648
    %v2228 = vxor.u32 %v2210, 2147483648
    %v2229 = vxor.u32 %v2212, 2147483648
    %v2230 = vmul.f32 %v2214, 1.442695
    %v2231 = vpow.pop %v2230
    %v2232 = vmul.f32 %v2215, 1.442695
    %v2233 = vpow.pop %v2232
    %v2234 = vmul.f32 %v2216, 1.442695
    %v2235 = vpow.pop %v2234
    %v2236 = vmul.f32 %v2217, 1.442695
    %v2237 = vpow.pop %v2236
    %v2238 = vmul.f32 %v2218, 1.442695
    %v2239 = vpow.pop %v2238
    %v2240 = vmul.f32 %v2219, 1.442695
    %v2241 = vpow.pop %v2240
    %v2242 = vmul.f32 %v2220, 1.442695
    %v2243 = vpow.pop %v2242
    %v2244 = vmul.f32 %v2221, 1.442695
    %v2245 = vpow.pop %v2244
    %v2246 = vmul.f32 %v2222, 1.442695
    %v2247 = vpow.pop %v2246
    %v2248 = vmul.f32 %v2223, 1.442695
    %v2249 = vpow.pop %v2248
    %v2250 = vmul.f32 %v2224, 1.442695
    %v2251 = vpow.pop %v2250
    %v2252 = vmul.f32 %v2225, 1.442695
    %v2253 = vpow.pop %v2252
    %v2254 = vmul.f32 %v2226, 1.442695
    %v2255 = vpow.pop %v2254
    %v2256 = vmul.f32 %v2227, 1.442695
    %v2257 = vpow.pop %v2256
    %v2258 = vmul.f32 %v2228, 1.442695
    %v2259 = vpow.pop %v2258
    %v2260 = vmul.f32 %v2229, 1.442695
    %v2261 = vpow.pop %v2260
    %v2262 = vadd.f32 %v2231, 1.0
    %v2263 = vadd.f32 %v2233, 1.0
    %v2264 = vadd.f32 %v2235, 1.0
    %v2265 = vadd.f32 %v2237, 1.0
    %v2266 = vadd.f32 %v2239, 1.0
    %v2267 = vadd.f32 %v2241, 1.0
    %v2268 = vadd.f32 %v2243, 1.0
    %v2269 = vadd.f32 %v2245, 1.0
    %v2270 = vadd.f32 %v2247, 1.0
    %v2271 = vadd.f32 %v2249, 1.0
    %v2272 = vadd.f32 %v2251, 1.0
    %v2273 = vadd.f32 %v2253, 1.0
    %v2274 = vadd.f32 %v2255, 1.0
    %v2275 = vadd.f32 %v2257, 1.0
    %v2276 = vadd.f32 %v2259, 1.0
    %v2277 = vadd.f32 %v2261, 1.0
    %v2278 = vrcp.pop %v2262
    %v2279 = vmul.f32 1.0, %v2278
    %v2280 = vrcp.pop %v2263
    %v2281 = vmul.f32 1.0, %v2280
    %v2282 = vrcp.pop %v2264
    %v2283 = vmul.f32 1.0, %v2282
    %v2284 = vrcp.pop %v2265
    %v2285 = vmul.f32 1.0, %v2284
    %v2286 = vrcp.pop %v2266
    %v2287 = vmul.f32 1.0, %v2286
    %v2288 = vrcp.pop %v2267
    %v2289 = vmul.f32 1.0, %v2288
    %v2290 = vrcp.pop %v2268
    %v2291 = vmul.f32 1.0, %v2290
    %v2292 = vrcp.pop %v2269
    %v2293 = vmul.f32 1.0, %v2292
    %v2294 = vrcp.pop %v2270
    %v2295 = vmul.f32 1.0, %v2294
    %v2296 = vrcp.pop %v2271
    %v2297 = vmul.f32 1.0, %v2296
    %v2298 = vrcp.pop %v2272
    %v2299 = vmul.f32 1.0, %v2298
    %v2300 = vrcp.pop %v2273
    %v2301 = vmul.f32 1.0, %v2300
    %v2302 = vrcp.pop %v2274
    %v2303 = vmul.f32 1.0, %v2302
    %v2304 = vrcp.pop %v2275
    %v2305 = vmul.f32 1.0, %v2304
    %v2306 = vrcp.pop %v2276
    %v2307 = vmul.f32 1.0, %v2306
    %v2308 = vrcp.pop %v2277
    %v2309 = vmul.f32 1.0, %v2308
    %v2310 = vmul.f32 %v2176, %v2279
    %v2311 = vmul.f32 %v2178, %v2281
    %v2312 = vmul.f32 %v2180, %v2283
    %v2313 = vmul.f32 %v2182, %v2285
    %v2314 = vmul.f32 %v2186, %v2287
    %v2315 = vmul.f32 %v2188, %v2289
    %v2316 = vmul.f32 %v2190, %v2291
    %v2317 = vmul.f32 %v2192, %v2293
    %v2318 = vmul.f32 %v2196, %v2295
    %v2319 = vmul.f32 %v2198, %v2297
    %v2320 = vmul.f32 %v2200, %v2299
    %v2321 = vmul.f32 %v2202, %v2301
    %v2322 = vmul.f32 %v2206, %v2303
    %v2323 = vmul.f32 %v2208, %v2305
    %v2324 = vmul.f32 %v2210, %v2307
    %v2325 = vmul.f32 %v2212, %v2309
    %v2326 = vpack.c.bf16 %v2312, %v2310
    %v2327 = vpack.c.bf16 %v2313, %v2311
    %v2328 = vpack.c.bf16 %v2316, %v2314
    %v2329 = vpack.c.bf16 %v2317, %v2315
    %v2330 = vpack.c.bf16 %v2320, %v2318
    %v2331 = vpack.c.bf16 %v2321, %v2319
    %v2332 = vpack.c.bf16 %v2324, %v2322
    %v2333 = vpack.c.bf16 %v2325, %v2323
    %v2334 = vld [vmem:[#allocation13] sm:$0xf]
    %v2335 = vld [vmem:[#allocation13 + $0x4] sm:$0xf]
    %v2336 = vld [vmem:[#allocation13 + $0x8] sm:$0xf]
    %v2337 = vld [vmem:[#allocation13 + $0xc] sm:$0xf]
    %v2338 = vld [vmem:[#allocation13 + $0x10] sm:$0xf]
    %v2339 = vld [vmem:[#allocation13 + $0x14] sm:$0xf]
    %v2340 = vld [vmem:[#allocation13 + $0x18] sm:$0xf]
    %v2341 = vld [vmem:[#allocation13 + $0x1c] sm:$0xf]
    %v2342 = vld [vmem:[#allocation13 + $0x20] sm:$0xf]
    %v2343 = vld [vmem:[#allocation13 + $0x24] sm:$0xf]
    %v2344 = vld [vmem:[#allocation13 + $0x28] sm:$0xf]
    %v2345 = vld [vmem:[#allocation13 + $0x2c] sm:$0xf]
    %v2346 = vld [vmem:[#allocation13 + $0x30] sm:$0xf]
    %v2347 = vld [vmem:[#allocation13 + $0x34] sm:$0xf]
    %v2348 = vld [vmem:[#allocation13 + $0x38] sm:$0xf]
    %v2349 = vld [vmem:[#allocation13 + $0x3c] sm:$0xf]
    %v2350 = vld [vmem:[#allocation13 + $0x40] sm:$0xf]
    %v2351 = vld [vmem:[#allocation13 + $0x44] sm:$0xf]
    %v2352 = vld [vmem:[#allocation13 + $0x48] sm:$0xf]
    %v2353 = vld [vmem:[#allocation13 + $0x4c] sm:$0xf]
    %v2354 = vld [vmem:[#allocation13 + $0x50] sm:$0xf]
    %v2355 = vld [vmem:[#allocation13 + $0x54] sm:$0xf]
    %v2356 = vld [vmem:[#allocation13 + $0x58] sm:$0xf]
    %v2357 = vld [vmem:[#allocation13 + $0x5c] sm:$0xf]
    %v2358 = vld [vmem:[#allocation13 + $0x60] sm:$0xf]
    %v2359 = vld [vmem:[#allocation13 + $0x64] sm:$0xf]
    %v2360 = vld [vmem:[#allocation13 + $0x68] sm:$0xf]
    %v2361 = vld [vmem:[#allocation13 + $0x6c] sm:$0xf]
    %v2362 = vld [vmem:[#allocation13 + $0x70] sm:$0xf]
    %v2363 = vld [vmem:[#allocation13 + $0x74] sm:$0xf]
    %v2364 = vld [vmem:[#allocation13 + $0x78] sm:$0xf]
    %v2365 = vld [vmem:[#allocation13 + $0x7c] sm:$0xf]
    %v2366 = vlaneseq
    %v2367 = vshrl.u32 %v2366, 7
    %v2368 = vsub.s32 3, %v2367
    %v2369 = vrot.slane %v144, %v2368
    %v2402 = vunpack.c.l.b16 %v2334
    %v2403 = vunpack.c.l.b16 %v2335
    %v2404 = vunpack.c.l.b16 %v2336
    %v2405 = vunpack.c.l.b16 %v2337
    %v2406 = vunpack.c.l.b16 %v2338
    %v2407 = vunpack.c.l.b16 %v2339
    %v2408 = vunpack.c.l.b16 %v2340
    %v2409 = vunpack.c.l.b16 %v2341
    %v2410 = vunpack.c.l.b16 %v2342
    %v2411 = vunpack.c.l.b16 %v2343
    %v2412 = vunpack.c.l.b16 %v2344
    %v2413 = vunpack.c.l.b16 %v2345
    %v2414 = vunpack.c.l.b16 %v2346
    %v2415 = vunpack.c.l.b16 %v2347
    %v2416 = vunpack.c.l.b16 %v2348
    %v2417 = vunpack.c.l.b16 %v2349
    %v2418 = vunpack.c.l.b16 %v2350
    %v2419 = vunpack.c.l.b16 %v2351
    %v2420 = vunpack.c.l.b16 %v2352
    %v2421 = vunpack.c.l.b16 %v2353
    %v2422 = vunpack.c.l.b16 %v2354
    %v2423 = vunpack.c.l.b16 %v2355
    %v2424 = vunpack.c.l.b16 %v2356
    %v2425 = vunpack.c.l.b16 %v2357
    %v2426 = vunpack.c.l.b16 %v2358
    %v2427 = vunpack.c.l.b16 %v2359
    %v2428 = vunpack.c.l.b16 %v2360
    %v2429 = vunpack.c.l.b16 %v2361
    %v2430 = vunpack.c.l.b16 %v2362
    %v2431 = vunpack.c.l.b16 %v2363
    %v2432 = vunpack.c.l.b16 %v2364
    %v2433 = vunpack.c.l.b16 %v2365
    %v2434 = vpack.c.b16 %v2403, %v2402
    %v2435 = vpack.c.b16 %v2405, %v2404
    %v2436 = vpack.c.b16 %v2407, %v2406
    %v2437 = vpack.c.b16 %v2409, %v2408
    %v2438 = vpack.c.b16 %v2411, %v2410
    %v2439 = vpack.c.b16 %v2413, %v2412
    %v2440 = vpack.c.b16 %v2415, %v2414
    %v2441 = vpack.c.b16 %v2417, %v2416
    %v2442 = vpack.c.b16 %v2419, %v2418
    %v2443 = vpack.c.b16 %v2421, %v2420
    %v2444 = vpack.c.b16 %v2423, %v2422
    %v2445 = vpack.c.b16 %v2425, %v2424
    %v2446 = vpack.c.b16 %v2427, %v2426
    %v2447 = vpack.c.b16 %v2429, %v2428
    %v2448 = vpack.c.b16 %v2431, %v2430
    %v2449 = vpack.c.b16 %v2433, %v2432
    %2466 = vmatprep.subr.bf16.mxu0 0
    %2467 = vmatpush1.bf16.msra.mxu0 %v2434
    %2468 = vmatprep.subr.bf16.mxu0 0
    %2469 = vmatpush1.bf16.msra.mxu0 %v2435
    %2470 = vmatprep.subr.bf16.mxu0 0
    %2471 = vmatpush1.bf16.msra.mxu0 %v2436
    %2472 = vmatprep.subr.bf16.mxu0 0
    %2473 = vmatpush1.bf16.msra.mxu0 %v2437
    %2474 = vmatprep.subr.bf16.mxu0 0
    %2475 = vmatpush1.bf16.msra.mxu0 %v2438
    %2476 = vmatprep.subr.bf16.mxu0 0
    %2477 = vmatpush1.bf16.msra.mxu0 %v2439
    %2478 = vmatprep.subr.bf16.mxu0 0
    %2479 = vmatpush1.bf16.msra.mxu0 %v2440
    %2480 = vmatprep.subr.bf16.mxu0 0
    %2481 = vmatpush1.bf16.msra.mxu0 %v2441
    %2482 = vmatprep.subr.bf16.mxu0 0
    %2483 = vmatpush1.bf16.msra.mxu0 %v2442
    %2484 = vmatprep.subr.bf16.mxu0 0
    %2485 = vmatpush1.bf16.msra.mxu0 %v2443
    %2486 = vmatprep.subr.bf16.mxu0 0
    %2487 = vmatpush1.bf16.msra.mxu0 %v2444
    %2488 = vmatprep.subr.bf16.mxu0 0
    %2489 = vmatpush1.bf16.msra.mxu0 %v2445
    %2490 = vmatprep.subr.bf16.mxu0 0
    %2491 = vmatpush1.bf16.msra.mxu0 %v2446
    %2492 = vmatprep.subr.bf16.mxu0 0
    %2493 = vmatpush1.bf16.msra.mxu0 %v2447
    %2494 = vmatprep.subr.bf16.mxu0 0
    %2495 = vmatpush1.bf16.msra.mxu0 %v2448
    %2496 = vmatprep.subr.bf16.mxu0 0
    %2497 = vmatpush1.bf16.msra.mxu0 %v2449
    %2498 = vmatprep.mubr.bf16.mxu0 %v2327
    %2499 = vmatmul.mubr.bf16.gmra.mrb[0].mxu0 %v2326
    %v2500 = vpop.f32.mrb[0].mxu0
    %v2501 = vadd.f32 %v2369, %v2500
    %v2502 = vpop.f32.mrb[0].mxu0
    %v2503 = vpop.f32.mrb[0].mxu0
    %v2504 = vadd.f32 %v2369, %v2503
    %v2505 = vpop.f32.mrb[0].mxu0
    %2506 = vmatprep.mubr.bf16.mxu0 %v2329
    %2507 = vmatmul.mubr.bf16.gmra.mrb[0].mxu0 %v2328
    %v2508 = vpop.f32.mrb[0].mxu0
    %v2509 = vadd.f32 %v2369, %v2508
    %v2510 = vpop.f32.mrb[0].mxu0
    %v2511 = vpop.f32.mrb[0].mxu0
    %v2512 = vadd.f32 %v2369, %v2511
    %v2513 = vpop.f32.mrb[0].mxu0
    %2514 = vmatprep.mubr.bf16.mxu0 %v2331
    %2515 = vmatmul.mubr.bf16.gmra.mrb[0].mxu0 %v2330
    %v2516 = vpop.f32.mrb[0].mxu0
    %v2517 = vadd.f32 %v2369, %v2516
    %v2518 = vpop.f32.mrb[0].mxu0
    %v2519 = vpop.f32.mrb[0].mxu0
    %v2520 = vadd.f32 %v2369, %v2519
    %v2521 = vpop.f32.mrb[0].mxu0
    %2522 = vmatprep.mubr.bf16.mxu0 %v2333
    %2523 = vmatmul.mubr.bf16.gmra.mrb[0].mxu0 %v2332
    %v2524 = vpop.f32.mrb[0].mxu0
    %v2525 = vadd.f32 %v2369, %v2524
    %v2526 = vpop.f32.mrb[0].mxu0
    %v2527 = vpop.f32.mrb[0].mxu0
    %v2528 = vadd.f32 %v2369, %v2527
    %v2529 = vpop.f32.mrb[0].mxu0
    %2530 = vdwg.mxu0
    %v2531 = vmul.f32 %v2501, 0.5
    %v2532 = vmul.f32 %v2504, 0.5
    %v2533 = vmul.f32 %v2509, 0.5
    %v2534 = vmul.f32 %v2512, 0.5
    %v2535 = vmul.f32 %v2517, 0.5
    %v2536 = vmul.f32 %v2520, 0.5
    %v2537 = vmul.f32 %v2525, 0.5
    %v2538 = vmul.f32 %v2528, 0.5
    %v2539 = vadd.f32 %v2531, %v1903
    %v2540 = vadd.f32 %v2532, %v1904
    %v2541 = vadd.f32 %v2533, %v1905
    %v2542 = vadd.f32 %v2534, %v1906
    %v2543 = vadd.f32 %v2535, %v1907
    %v2544 = vadd.f32 %v2536, %v1908
    %v2545 = vadd.f32 %v2537, %v1909
    %v2546 = vadd.f32 %v2538, %v1910
    %2547 = vadd.xlane.f32.xlu0 %v2539
    %v2548 = vpop.xlane.xlu0 %2547
    %2549 = vadd.xlane.f32.xlu0 %v2540
    %v2550 = vpop.xlane.xlu0 %2549
    %2551 = vadd.xlane.f32.xlu0 %v2541
    %v2552 = vpop.xlane.xlu0 %2551
    %2553 = vadd.xlane.f32.xlu0 %v2542
    %v2554 = vpop.xlane.xlu0 %2553
    %2555 = vadd.xlane.f32.xlu0 %v2543
    %v2556 = vpop.xlane.xlu0 %2555
    %2557 = vadd.xlane.f32.xlu0 %v2544
    %v2558 = vpop.xlane.xlu0 %2557
    %2559 = vadd.xlane.f32.xlu0 %v2545
    %v2560 = vpop.xlane.xlu0 %2559
    %2561 = vadd.xlane.f32.xlu0 %v2546
    %v2562 = vpop.xlane.xlu0 %2561
    %v2563 = vmul.f32 %v2548, %v163
    %v2564 = vmul.f32 %v2550, %v163
    %v2565 = vmul.f32 %v2552, %v163
    %v2566 = vmul.f32 %v2554, %v163
    %v2567 = vmul.f32 %v2556, %v163
    %v2568 = vmul.f32 %v2558, %v163
    %v2569 = vmul.f32 %v2560, %v163
    %v2570 = vmul.f32 %v2562, %v163
    %v2571 = vsub.f32 %v2539, %v2563
    %v2572 = vsub.f32 %v2540, %v2564
    %v2573 = vsub.f32 %v2541, %v2565
    %v2574 = vsub.f32 %v2542, %v2566
    %v2575 = vsub.f32 %v2543, %v2567
    %v2576 = vsub.f32 %v2544, %v2568
    %v2577 = vsub.f32 %v2545, %v2569
    %v2578 = vsub.f32 %v2546, %v2570
    %v2579 = vmul.f32 %v2571, %v2571
    %v2580 = vmul.f32 %v2572, %v2572
    %v2581 = vmul.f32 %v2573, %v2573
    %v2582 = vmul.f32 %v2574, %v2574
    %v2583 = vmul.f32 %v2575, %v2575
    %v2584 = vmul.f32 %v2576, %v2576
    %v2585 = vmul.f32 %v2577, %v2577
    %v2586 = vmul.f32 %v2578, %v2578
    %2587 = vadd.xlane.f32.xlu0 %v2579
    %v2588 = vpop.xlane.xlu0 %2587
    %2589 = vadd.xlane.f32.xlu0 %v2580
    %v2590 = vpop.xlane.xlu0 %2589
    %2591 = vadd.xlane.f32.xlu0 %v2581
    %v2592 = vpop.xlane.xlu0 %2591
    %2593 = vadd.xlane.f32.xlu0 %v2582
    %v2594 = vpop.xlane.xlu0 %2593
    %2595 = vadd.xlane.f32.xlu0 %v2583
    %v2596 = vpop.xlane.xlu0 %2595
    %2597 = vadd.xlane.f32.xlu0 %v2584
    %v2598 = vpop.xlane.xlu0 %2597
    %2599 = vadd.xlane.f32.xlu0 %v2585
    %v2600 = vpop.xlane.xlu0 %2599
    %2601 = vadd.xlane.f32.xlu0 %v2586
    %v2602 = vpop.xlane.xlu0 %2601
    %v2603 = vmul.f32 %v2588, %v163
    %v2604 = vmul.f32 %v2590, %v163
    %v2605 = vmul.f32 %v2592, %v163
    %v2606 = vmul.f32 %v2594, %v163
    %v2607 = vmul.f32 %v2596, %v163
    %v2608 = vmul.f32 %v2598, %v163
    %v2609 = vmul.f32 %v2600, %v163
    %v2610 = vmul.f32 %v2602, %v163
    %v2611 = vadd.f32 %v2603, 1e-05
    %v2612 = vadd.f32 %v2604, 1e-05
    %v2613 = vadd.f32 %v2605, 1e-05
    %v2614 = vadd.f32 %v2606, 1e-05
    %v2615 = vadd.f32 %v2607, 1e-05
    %v2616 = vadd.f32 %v2608, 1e-05
    %v2617 = vadd.f32 %v2609, 1e-05
    %v2618 = vadd.f32 %v2610, 1e-05
    %v2619 = vrsqrt.pop %v2611
    %v2620 = vrsqrt.pop %v2612
    %v2621 = vrsqrt.pop %v2613
    %v2622 = vrsqrt.pop %v2614
    %v2623 = vrsqrt.pop %v2615
    %v2624 = vrsqrt.pop %v2616
    %v2625 = vrsqrt.pop %v2617
    %v2626 = vrsqrt.pop %v2618
    %v2627 = vmul.f32 %v2571, %v2619
    %v2628 = vmul.f32 %v2572, %v2620
    %v2629 = vmul.f32 %v2573, %v2621
    %v2630 = vmul.f32 %v2574, %v2622
    %v2631 = vmul.f32 %v2575, %v2623
    %v2632 = vmul.f32 %v2576, %v2624
    %v2633 = vmul.f32 %v2577, %v2625
    %v2634 = vmul.f32 %v2578, %v2626
    %v2635 = vlaneseq
    %v2636 = vshrl.u32 %v2635, 7
    %v2637 = vsub.s32 4, %v2636
    %v2638 = vrot.slane %v144, %v2637
    %v2639 = vmul.f32 %v2627, %v2638
    %v2640 = vmul.f32 %v2628, %v2638
    %v2641 = vmul.f32 %v2629, %v2638
    %v2642 = vmul.f32 %v2630, %v2638
    %v2643 = vmul.f32 %v2631, %v2638
    %v2644 = vmul.f32 %v2632, %v2638
    %v2645 = vmul.f32 %v2633, %v2638
    %v2646 = vmul.f32 %v2634, %v2638
    %v2647 = vlaneseq
    %v2648 = vshrl.u32 %v2647, 7
    %v2649 = vsub.s32 5, %v2648
    %v2650 = vrot.slane %v144, %v2649
    %v2651 = vadd.f32 %v2639, %v2650
    %v2652 = vadd.f32 %v2640, %v2650
    %v2653 = vadd.f32 %v2641, %v2650
    %v2654 = vadd.f32 %v2642, %v2650
    %v2655 = vadd.f32 %v2643, %v2650
    %v2656 = vadd.f32 %v2644, %v2650
    %v2657 = vadd.f32 %v2645, %v2650
    %v2658 = vadd.f32 %v2646, %v2650
    %2659 = vst [vmem:[#allocation14] sm:$0xff] %v2651
    %2660 = vst [vmem:[#allocation14 + $0x8] sm:$0xff] %v2652
    %2661 = vst [vmem:[#allocation14 + $0x10] sm:$0xff] %v2653
    %2662 = vst [vmem:[#allocation14 + $0x18] sm:$0xff] %v2654
    %2663 = vst [vmem:[#allocation14 + $0x20] sm:$0xff] %v2655
    %2664 = vst [vmem:[#allocation14 + $0x28] sm:$0xff] %v2656
    %2665 = vst [vmem:[#allocation14 + $0x30] sm:$0xff] %v2657
    %2666 = vst [vmem:[#allocation14 + $0x38] sm:$0xff] %v2658
    // Predicated region
    $region74: #{tpu_custom_call.1} parent=1 // pred_check
      _
    $region75: #{tpu_custom_call.1} parent=1 // pred_check_branch
      %2668 = sbr.rel (0) target = $region77
    $region76: #{tpu_custom_call.1} parent=1 // pred_region
      %s2670 = ssub.s32 1024, 1024
      %2671 = vsyncadd [#allocation4], %s2670
      %s2672 = sshll.u32 [#allocation14], 4
      %s2673 = int_to_ptr.vmem [resolvable:$true] %s2672
      %2678 = dma.vmem_to_hbm [thread:$0]  %s2673, 1024, %s11, [#allocation4], 128, 128, 8
    $region77: #{tpu_custom_call.1} parent=1 // pred_fallthru
      _
    // Predicated region
    $region78: #{tpu_custom_call.1} parent=1 // pred_check
      _
    $region79: #{tpu_custom_call.1} parent=1 // pred_check_branch
      %2680 = sbr.rel (0) target = $region81
    $region80: #{tpu_custom_call.1} parent=1 // pred_region
      %2681 = dma.done [#allocation4], 1024
    $region81: #{tpu_custom_call.1} parent=1 // pred_fallthru
      _
    %2682 = vsyncpa [#allocation3], 1
    %2683 = vsyncpa [#allocation6], 1
    %2684 = vsyncpa [#allocation9], 1
    %2685 = vsyncpa [#allocation12], 1
    %2686 = vsyncpa [#allocation4], 1

</llo_original>
